<compile_context>
chip_gen: v5e
topology: v5e:2x2
jax: 0.10.0
libtpu: 0.0.40
codegen_flags: <defaults>
</compile_context>

<pallas_src>
import functools

import jax
import jax.numpy as jnp
from jax.experimental import pallas as pl
from jax.experimental.pallas import tpu as pltpu

# ----------------------------- small config -----------------------------
VOCAB = 256
NUM_LAYERS = 2
D_INPUT = 128
D_MODEL = 128
D_STATE = 16
D_DISCR = D_MODEL // 16        # matches the module default (d_model // 16)
KER = 4
BATCH = 2
SEQLEN = 8

# per-layer refs passed to the kernel, in order:
_LAYER_KEYS = ('g', 'w_in_a', 'w_in_z', 'conv_w', 'conv_b',
               'w_B', 'w_C', 'w_D1', 'w_D2', 'A_t', 'D', 'w_out')
_PER_LAYER = len(_LAYER_KEYS)


def _silu(x):
    return x * jax.nn.sigmoid(x)


def _softplus(x):
    # numerically stable softplus, pure elementwise
    return jnp.maximum(x, 0.0) + jnp.log1p(jnp.exp(-jnp.abs(x)))


# -------------------- one fused (RMSNorm -> MambaBlock -> residual) layer --------------------
def _mamba_layer(x, g_ref, w_in_a_ref, w_in_z_ref, conv_w_ref, conv_b_ref,
                 w_B_ref, w_C_ref, w_D1_ref, w_D2_ref, A_t_ref, D_ref, w_out_ref,
                 *, batch, seqlen):
    """x: (B*L, D_IN) f32 value (rows are batch-major: row = b*L + t). Returns same shape."""
    bl, d_in = x.shape
    dm = w_in_a_ref.shape[1]
    s = A_t_ref.shape[0]

    # time index of every flattened row (for the causal conv mask + output placement)
    l_ids = jax.lax.broadcasted_iota(jnp.int32, (batch, seqlen, dm), 1)     # (B, L, DM)
    t_ids = l_ids.reshape(bl, dm)                                           # (B*L, DM)

    # ---- RMSNorm: g * (x / (||x||_2 + 1e-5)) * sqrt(d)  (matches torch reference) ----
    nrm = jnp.sqrt(jnp.sum(x * x, axis=-1, keepdims=True))                  # (BL, 1)
    xn = (x * (float(d_in) ** 0.5 / (nrm + 1e-5))) * g_ref[...]             # (BL, D_IN)

    # ---- in_proj (weights pre-split -> no lane slicing of the matmul output) ----
    a_pre = jnp.dot(xn, w_in_a_ref[...], preferred_element_type=jnp.float32)  # (BL, DM)
    z = jnp.dot(xn, w_in_z_ref[...], preferred_element_type=jnp.float32)      # (BL, DM)

    # ---- causal depthwise conv1d: out[t] = b + sum_j w[K-1-j] * a_pre[t-j] ----
    conv = conv_b_ref[...] + a_pre * conv_w_ref[KER - 1:KER, :]               # j = 0 tap
    for j in range(1, KER):
        shifted = pltpu.roll(a_pre, shift=j, axis=0)                          # row <- row-j
        shifted = jnp.where(t_ids >= j, shifted, 0.0)                         # causal + batch edge
        conv = conv + shifted * conv_w_ref[KER - 1 - j:KER - j, :]
    u = _silu(conv)                                                           # (BL, DM)

    # ---- input-dependent SSM parameters ----
    Bm = jnp.dot(u, w_B_ref[...], preferred_element_type=jnp.float32)         # (BL, S)
    Cm = jnp.dot(u, w_C_ref[...], preferred_element_type=jnp.float32)         # (BL, S)
    d1 = jnp.dot(u, w_D1_ref[...], preferred_element_type=jnp.float32)        # (BL, DD)
    d2 = jnp.dot(d1, w_D2_ref[...], preferred_element_type=jnp.float32)       # (BL, DM)
    delta = _softplus(D_ref[...] + d2)                                        # (BL, DM)
    a_exp = jnp.exp(-A_t_ref[...])                                            # (S, DM) = exp(-A)

    # ---- sequential recurrence: h_t = A_bar_t * h_{t-1} + X_bar_t, streamed & unrolled ----
    delta3 = delta.reshape(batch, seqlen, dm)
    u3 = u.reshape(batch, seqlen, dm)
    Bm3 = Bm.reshape(batch, seqlen, s)
    Cm3 = Cm.reshape(batch, seqlen, s)

    h = jnp.zeros((batch, s, dm), jnp.float32)                                # running state only
    y3 = jnp.zeros((batch, seqlen, dm), jnp.float32)
    for t in range(seqlen):                                                   # fully unrolled
        dt = delta3[:, t, :]                                                  # (B, DM)
        ut = u3[:, t, :]                                                      # (B, DM)
        bt = Bm3[:, t, :]                                                     # (B, S)
        ct = Cm3[:, t, :]                                                     # (B, S)
        abar = a_exp[None, :, :] * dt[:, None, :]                             # (B, S, DM)
        xbar = bt[:, :, None] * (dt * ut)[:, None, :]                         # (B, S, DM)
        h = abar * h + xbar
        y_t = jnp.sum(h * ct[:, :, None], axis=1)                             # (B, DM)
        y3 = y3 + jnp.where(l_ids == t, y_t[:, None, :], 0.0)                 # place at time t

    y = y3.reshape(bl, dm) + D_ref[...] * u                                   # (BL, DM)

    # ---- gate, out_proj, residual with the raw (pre-norm) input ----
    out = y * _silu(z)
    out = jnp.dot(out, w_out_ref[...], preferred_element_type=jnp.float32)    # (BL, D_IN)
    return out + x


# ----------------------------- fused whole-model kernel -----------------------------
def fused_forward_kernel(*refs, batch, seqlen, num_layers):
    seq_ref = refs[0]
    w_head_ref = refs[1 + num_layers * _PER_LAYER]
    o_ref = refs[2 + num_layers * _PER_LAYER]

    x = seq_ref[...].astype(jnp.float32)                                      # (B*L, D_IN)
    for i in range(num_layers):
        lrefs = refs[1 + i * _PER_LAYER: 1 + (i + 1) * _PER_LAYER]
        x = _mamba_layer(x, *lrefs, batch=batch, seqlen=seqlen)
    # LM head
    o_ref[...] = jnp.dot(x, w_head_ref[...],
                         preferred_element_type=jnp.float32).astype(o_ref.dtype)


def mamba_forward(seq, params):
    """seq: (B, L, D_INPUT) embeddings -> (B, L, VOCAB) logits via one pallas_call."""
    b, l, d_in = seq.shape
    vocab = params['w_head'].shape[1]

    flat_args = [seq.reshape(b * l, d_in)]
    for layer in params['layers']:
        flat_args.extend(layer[k] for k in _LAYER_KEYS)
    flat_args.append(params['w_head'])

    out = pl.pallas_call(
        functools.partial(fused_forward_kernel, batch=b, seqlen=l,
                          num_layers=len(params['layers'])),
        out_shape=jax.ShapeDtypeStruct((b * l, vocab), jnp.float32),
    )(*flat_args)
    return out.reshape(b, l, vocab)


# ----------------------------- params / model glue -----------------------------
def init_params(key):
    keys = jax.random.split(key, 2 + NUM_LAYERS)
    emb = 0.02 * jax.random.normal(keys[0], (VOCAB, D_INPUT), jnp.float32)
    w_head = 0.02 * jax.random.normal(keys[1], (D_INPUT, VOCAB), jnp.float32)
    layers = []
    for i in range(NUM_LAYERS):
        lk = jax.random.split(keys[2 + i], 9)
        layers.append(dict(
            g=jnp.ones((1, D_INPUT), jnp.float32),
            # in_proj stored pre-transposed and pre-split into the two chunk halves
            w_in_a=0.02 * jax.random.normal(lk[0], (D_INPUT, D_MODEL), jnp.float32),
            w_in_z=0.02 * jax.random.normal(lk[1], (D_INPUT, D_MODEL), jnp.float32),
            conv_w=0.1 * jax.random.normal(lk[2], (KER, D_MODEL), jnp.float32),
            conv_b=0.1 * jax.random.normal(lk[3], (1, D_MODEL), jnp.float32),
            w_B=0.02 * jax.random.normal(lk[4], (D_MODEL, D_STATE), jnp.float32),
            w_C=0.02 * jax.random.normal(lk[5], (D_MODEL, D_STATE), jnp.float32),
            w_D1=0.02 * jax.random.normal(lk[6], (D_MODEL, D_DISCR), jnp.float32),
            w_D2=0.02 * jax.random.normal(lk[7], (D_DISCR, D_MODEL), jnp.float32),
            w_out=0.02 * jax.random.normal(lk[8], (D_MODEL, D_INPUT), jnp.float32),
            # A parameter: each channel's row is [1, ..., d_state]; stored transposed (S, DM)
            A_t=jnp.broadcast_to(
                jnp.arange(1, D_STATE + 1, dtype=jnp.float32)[:, None],
                (D_STATE, D_MODEL)),
            D=jnp.ones((1, D_MODEL), jnp.float32),
        ))
    return dict(emb=emb, w_head=w_head, layers=layers)


@jax.jit
def model_forward(tok, params):
    # embedding lookup stays in plain JAX (gather); everything else is one fused kernel
    seq = params['emb'][tok]                      # (B, L, D_INPUT)
    return mamba_forward(seq, params)


if __name__ == "__main__":
    key = jax.random.PRNGKey(0)
    pkey, tkey = jax.random.split(key)
    params = init_params(pkey)
    tok = jax.random.randint(tkey, (BATCH, SEQLEN), 0, VOCAB, dtype=jnp.int32)

    logits = model_forward(tok, params)
    jax.block_until_ready(logits)
    assert logits.shape == (BATCH, SEQLEN, VOCAB)
    assert logits.dtype == jnp.float32
    print("KERNEL_OK")
</pallas_src>

<mosaic_0001>
module attributes {stable_mosaic.version = 11 : i64} {
  func.func @fused_forward_kernel(%arg0: memref<16x128xf32, #tpu.memory_space<vmem>>, %arg1: memref<1x128xf32, #tpu.memory_space<vmem>>, %arg2: memref<128x128xf32, #tpu.memory_space<vmem>>, %arg3: memref<128x128xf32, #tpu.memory_space<vmem>>, %arg4: memref<4x128xf32, #tpu.memory_space<vmem>>, %arg5: memref<1x128xf32, #tpu.memory_space<vmem>>, %arg6: memref<128x16xf32, #tpu.memory_space<vmem>>, %arg7: memref<128x16xf32, #tpu.memory_space<vmem>>, %arg8: memref<128x8xf32, #tpu.memory_space<vmem>>, %arg9: memref<8x128xf32, #tpu.memory_space<vmem>>, %arg10: memref<16x128xf32, #tpu.memory_space<vmem>>, %arg11: memref<1x128xf32, #tpu.memory_space<vmem>>, %arg12: memref<128x128xf32, #tpu.memory_space<vmem>>, %arg13: memref<1x128xf32, #tpu.memory_space<vmem>>, %arg14: memref<128x128xf32, #tpu.memory_space<vmem>>, %arg15: memref<128x128xf32, #tpu.memory_space<vmem>>, %arg16: memref<4x128xf32, #tpu.memory_space<vmem>>, %arg17: memref<1x128xf32, #tpu.memory_space<vmem>>, %arg18: memref<128x16xf32, #tpu.memory_space<vmem>>, %arg19: memref<128x16xf32, #tpu.memory_space<vmem>>, %arg20: memref<128x8xf32, #tpu.memory_space<vmem>>, %arg21: memref<8x128xf32, #tpu.memory_space<vmem>>, %arg22: memref<16x128xf32, #tpu.memory_space<vmem>>, %arg23: memref<1x128xf32, #tpu.memory_space<vmem>>, %arg24: memref<128x128xf32, #tpu.memory_space<vmem>>, %arg25: memref<128x256xf32, #tpu.memory_space<vmem>>, %arg26: memref<16x256xf32, #tpu.memory_space<vmem>>) attributes {dimension_semantics = [], scalar_prefetch = 0 : i64, scratch_operands = 0 : i64, tpu.core_type = #tpu.core_type<tc>} {
    %c0 = arith.constant 0 : index
    %c0_0 = arith.constant 0 : index
    %0 = vector.load %arg0[%c0, %c0_0] : memref<16x128xf32, #tpu.memory_space<vmem>>, vector<16x128xf32>
    %1 = tpu.iota {dimensions = array<i32: 1>} : vector<2x8x128xi32>
    %2 = vector.shape_cast %1 : vector<2x8x128xi32> to vector<16x128xi32>
    %3 = arith.mulf %0, %0 : vector<16x128xf32>
    %cst = arith.constant dense<0.000000e+00> : vector<16xf32>
    %4 = vector.multi_reduction <add>, %3, %cst [1] : vector<16x128xf32> to vector<16xf32>
    %5 = vector.shape_cast %4 : vector<16xf32> to vector<16x1xf32>
    %6 = math.sqrt %5 : vector<16x1xf32>
    %cst_1 = arith.constant 9.99999974E-6 : f32
    %7 = vector.broadcast %cst_1 : f32 to vector<16x1xf32>
    %8 = arith.addf %6, %7 : vector<16x1xf32>
    %cst_2 = arith.constant 11.3137083 : f32
    %9 = vector.broadcast %cst_2 : f32 to vector<16x1xf32>
    %10 = arith.divf %9, %8 : vector<16x1xf32>
    %11 = vector.broadcast %10 : vector<16x1xf32> to vector<16x128xf32>
    %12 = arith.mulf %0, %11 : vector<16x128xf32>
    %c0_3 = arith.constant 0 : index
    %c0_4 = arith.constant 0 : index
    %13 = vector.load %arg1[%c0_3, %c0_4] : memref<1x128xf32, #tpu.memory_space<vmem>>, vector<1x128xf32>
    %14 = vector.broadcast %13 : vector<1x128xf32> to vector<16x128xf32>
    %15 = arith.mulf %12, %14 : vector<16x128xf32>
    %c0_5 = arith.constant 0 : index
    %c0_6 = arith.constant 0 : index
    %16 = vector.load %arg2[%c0_5, %c0_6] : memref<128x128xf32, #tpu.memory_space<vmem>>, vector<128x128xf32>
    %cst_7 = arith.constant dense<0.000000e+00> : vector<16x128xf32>
    %17 = tpu.matmul %15, %16, %cst_7 {dimension_numbers = #tpu.dot_dimension_numbers<[1], [0], [0], [1], [0, 0, 1, 1], [], []>} : vector<16x128xf32>, vector<128x128xf32>, vector<16x128xf32> -> vector<16x128xf32>
    %c0_8 = arith.constant 0 : index
    %c0_9 = arith.constant 0 : index
    %18 = vector.load %arg3[%c0_8, %c0_9] : memref<128x128xf32, #tpu.memory_space<vmem>>, vector<128x128xf32>
    %cst_10 = arith.constant dense<0.000000e+00> : vector<16x128xf32>
    %19 = tpu.matmul %15, %18, %cst_10 {dimension_numbers = #tpu.dot_dimension_numbers<[1], [0], [0], [1], [0, 0, 1, 1], [], []>} : vector<16x128xf32>, vector<128x128xf32>, vector<16x128xf32> -> vector<16x128xf32>
    %c0_11 = arith.constant 0 : index
    %c0_12 = arith.constant 0 : index
    %20 = vector.load %arg5[%c0_11, %c0_12] : memref<1x128xf32, #tpu.memory_space<vmem>>, vector<1x128xf32>
    %c3 = arith.constant 3 : index
    %c0_13 = arith.constant 0 : index
    %21 = vector.load %arg4[%c3, %c0_13] : memref<4x128xf32, #tpu.memory_space<vmem>>, vector<1x128xf32>
    %22 = vector.broadcast %21 : vector<1x128xf32> to vector<16x128xf32>
    %23 = arith.mulf %17, %22 : vector<16x128xf32>
    %24 = vector.broadcast %20 : vector<1x128xf32> to vector<16x128xf32>
    %25 = arith.addf %24, %23 : vector<16x128xf32>
    %c1_i32 = arith.constant 1 : i32
    %26 = tpu.dynamic_rotate %17 by %c1_i32 dim 0 : vector<16x128xf32>, i32 -> vector<16x128xf32>
    %c1_i32_14 = arith.constant 1 : i32
    %27 = vector.broadcast %c1_i32_14 : i32 to vector<16x128xi32>
    %28 = arith.cmpi sge, %2, %27 : vector<16x128xi32>
    %cst_15 = arith.constant 0.000000e+00 : f32
    %29 = vector.broadcast %cst_15 : f32 to vector<16x128xf32>
    %30 = arith.select %28, %26, %29 : vector<16x128xi1>, vector<16x128xf32>
    %c2 = arith.constant 2 : index
    %c0_16 = arith.constant 0 : index
    %31 = vector.load %arg4[%c2, %c0_16] : memref<4x128xf32, #tpu.memory_space<vmem>>, vector<1x128xf32>
    %32 = vector.broadcast %31 : vector<1x128xf32> to vector<16x128xf32>
    %33 = arith.mulf %30, %32 : vector<16x128xf32>
    %34 = arith.addf %25, %33 : vector<16x128xf32>
    %c2_i32 = arith.constant 2 : i32
    %35 = tpu.dynamic_rotate %17 by %c2_i32 dim 0 : vector<16x128xf32>, i32 -> vector<16x128xf32>
    %c2_i32_17 = arith.constant 2 : i32
    %36 = vector.broadcast %c2_i32_17 : i32 to vector<16x128xi32>
    %37 = arith.cmpi sge, %2, %36 : vector<16x128xi32>
    %cst_18 = arith.constant 0.000000e+00 : f32
    %38 = vector.broadcast %cst_18 : f32 to vector<16x128xf32>
    %39 = arith.select %37, %35, %38 : vector<16x128xi1>, vector<16x128xf32>
    %c1 = arith.constant 1 : index
    %c0_19 = arith.constant 0 : index
    %40 = vector.load %arg4[%c1, %c0_19] : memref<4x128xf32, #tpu.memory_space<vmem>>, vector<1x128xf32>
    %41 = vector.broadcast %40 : vector<1x128xf32> to vector<16x128xf32>
    %42 = arith.mulf %39, %41 : vector<16x128xf32>
    %43 = arith.addf %34, %42 : vector<16x128xf32>
    %c3_i32 = arith.constant 3 : i32
    %44 = tpu.dynamic_rotate %17 by %c3_i32 dim 0 : vector<16x128xf32>, i32 -> vector<16x128xf32>
    %c3_i32_20 = arith.constant 3 : i32
    %45 = vector.broadcast %c3_i32_20 : i32 to vector<16x128xi32>
    %46 = arith.cmpi sge, %2, %45 : vector<16x128xi32>
    %cst_21 = arith.constant 0.000000e+00 : f32
    %47 = vector.broadcast %cst_21 : f32 to vector<16x128xf32>
    %48 = arith.select %46, %44, %47 : vector<16x128xi1>, vector<16x128xf32>
    %c0_22 = arith.constant 0 : index
    %c0_23 = arith.constant 0 : index
    %49 = vector.load %arg4[%c0_22, %c0_23] : memref<4x128xf32, #tpu.memory_space<vmem>>, vector<1x128xf32>
    %50 = vector.broadcast %49 : vector<1x128xf32> to vector<16x128xf32>
    %51 = arith.mulf %48, %50 : vector<16x128xf32>
    %52 = arith.addf %43, %51 : vector<16x128xf32>
    %53 = arith.negf %52 : vector<16x128xf32>
    %54 = math.exp %53 : vector<16x128xf32>
    %cst_24 = arith.constant 1.000000e+00 : f32
    %55 = vector.broadcast %cst_24 : f32 to vector<16x128xf32>
    %56 = arith.addf %55, %54 : vector<16x128xf32>
    %57 = arith.divf %55, %56 : vector<16x128xf32>
    %58 = arith.mulf %52, %57 : vector<16x128xf32>
    %c0_25 = arith.constant 0 : index
    %c0_26 = arith.constant 0 : index
    %59 = vector.load %arg6[%c0_25, %c0_26] : memref<128x16xf32, #tpu.memory_space<vmem>>, vector<128x16xf32>
    %cst_27 = arith.constant dense<0.000000e+00> : vector<16x16xf32>
    %60 = tpu.matmul %58, %59, %cst_27 {dimension_numbers = #tpu.dot_dimension_numbers<[1], [0], [0], [1], [0, 0, 1, 1], [], []>} : vector<16x128xf32>, vector<128x16xf32>, vector<16x16xf32> -> vector<16x16xf32>
    %c0_28 = arith.constant 0 : index
    %c0_29 = arith.constant 0 : index
    %61 = vector.load %arg7[%c0_28, %c0_29] : memref<128x16xf32, #tpu.memory_space<vmem>>, vector<128x16xf32>
    %cst_30 = arith.constant dense<0.000000e+00> : vector<16x16xf32>
    %62 = tpu.matmul %58, %61, %cst_30 {dimension_numbers = #tpu.dot_dimension_numbers<[1], [0], [0], [1], [0, 0, 1, 1], [], []>} : vector<16x128xf32>, vector<128x16xf32>, vector<16x16xf32> -> vector<16x16xf32>
    %c0_31 = arith.constant 0 : index
    %c0_32 = arith.constant 0 : index
    %63 = vector.load %arg8[%c0_31, %c0_32] : memref<128x8xf32, #tpu.memory_space<vmem>>, vector<128x8xf32>
    %cst_33 = arith.constant dense<0.000000e+00> : vector<16x8xf32>
    %64 = tpu.matmul %58, %63, %cst_33 {dimension_numbers = #tpu.dot_dimension_numbers<[1], [0], [0], [1], [0, 0, 1, 1], [], []>} : vector<16x128xf32>, vector<128x8xf32>, vector<16x8xf32> -> vector<16x8xf32>
    %c0_34 = arith.constant 0 : index
    %c0_35 = arith.constant 0 : index
    %65 = vector.load %arg9[%c0_34, %c0_35] : memref<8x128xf32, #tpu.memory_space<vmem>>, vector<8x128xf32>
    %cst_36 = arith.constant dense<0.000000e+00> : vector<16x128xf32>
    %66 = tpu.matmul %64, %65, %cst_36 {dimension_numbers = #tpu.dot_dimension_numbers<[1], [0], [0], [1], [0, 0, 1, 1], [], []>} : vector<16x8xf32>, vector<8x128xf32>, vector<16x128xf32> -> vector<16x128xf32>
    %c0_37 = arith.constant 0 : index
    %c0_38 = arith.constant 0 : index
    %67 = vector.load %arg11[%c0_37, %c0_38] : memref<1x128xf32, #tpu.memory_space<vmem>>, vector<1x128xf32>
    %68 = vector.broadcast %67 : vector<1x128xf32> to vector<16x128xf32>
    %69 = arith.addf %68, %66 : vector<16x128xf32>
    %cst_39 = arith.constant 0.000000e+00 : f32
    %70 = vector.broadcast %cst_39 : f32 to vector<16x128xf32>
    %71 = arith.maximumf %69, %70 : vector<16x128xf32>
    %72 = math.absf %69 : vector<16x128xf32>
    %cst_40 = arith.constant 0.000000e+00 : f32
    %73 = vector.broadcast %cst_40 : f32 to vector<16x128xf32>
    %74 = arith.subf %73, %72 : vector<16x128xf32>
    %75 = math.exp %74 : vector<16x128xf32>
    %76 = math.log1p %75 : vector<16x128xf32>
    %77 = arith.addf %71, %76 : vector<16x128xf32>
    %c0_41 = arith.constant 0 : index
    %c0_42 = arith.constant 0 : index
    %78 = vector.load %arg10[%c0_41, %c0_42] : memref<16x128xf32, #tpu.memory_space<vmem>>, vector<16x128xf32>
    %cst_43 = arith.constant 0.000000e+00 : f32
    %79 = vector.broadcast %cst_43 : f32 to vector<16x128xf32>
    %80 = arith.subf %79, %78 : vector<16x128xf32>
    %81 = math.exp %80 : vector<16x128xf32>
    %82 = vector.shape_cast %77 : vector<16x128xf32> to vector<2x8x128xf32>
    %83 = vector.shape_cast %58 : vector<16x128xf32> to vector<2x8x128xf32>
    %84 = vector.shape_cast %60 : vector<16x16xf32> to vector<2x8x16xf32>
    %85 = vector.shape_cast %62 : vector<16x16xf32> to vector<2x8x16xf32>
    %cst_44 = arith.constant 0.000000e+00 : f32
    %86 = vector.broadcast %cst_44 : f32 to vector<2x16x128xf32>
    %cst_45 = arith.constant 0.000000e+00 : f32
    %87 = vector.broadcast %cst_45 : f32 to vector<2x8x128xf32>
    %88 = vector.extract_strided_slice %82 {offsets = [0, 0, 0], sizes = [2, 1, 128], strides = [1, 1, 1]} : vector<2x8x128xf32> to vector<2x1x128xf32>
    %89 = vector.shape_cast %88 : vector<2x1x128xf32> to vector<2x128xf32>
    %90 = vector.extract_strided_slice %83 {offsets = [0, 0, 0], sizes = [2, 1, 128], strides = [1, 1, 1]} : vector<2x8x128xf32> to vector<2x1x128xf32>
    %91 = vector.shape_cast %90 : vector<2x1x128xf32> to vector<2x128xf32>
    %92 = vector.extract_strided_slice %84 {offsets = [0, 0, 0], sizes = [2, 1, 16], strides = [1, 1, 1]} : vector<2x8x16xf32> to vector<2x1x16xf32>
    %93 = vector.shape_cast %92 : vector<2x1x16xf32> to vector<2x16xf32>
    %94 = vector.extract_strided_slice %85 {offsets = [0, 0, 0], sizes = [2, 1, 16], strides = [1, 1, 1]} : vector<2x8x16xf32> to vector<2x1x16xf32>
    %95 = vector.shape_cast %94 : vector<2x1x16xf32> to vector<2x16xf32>
    %96 = vector.shape_cast %81 : vector<16x128xf32> to vector<1x16x128xf32>
    %97 = vector.shape_cast %89 : vector<2x128xf32> to vector<2x1x128xf32>
    %98 = vector.broadcast %96 : vector<1x16x128xf32> to vector<2x16x128xf32>
    %99 = vector.broadcast %97 : vector<2x1x128xf32> to vector<2x16x128xf32>
    %100 = arith.mulf %98, %99 : vector<2x16x128xf32>
    %101 = vector.shape_cast %93 : vector<2x16xf32> to vector<2x16x1xf32>
    %102 = arith.mulf %89, %91 : vector<2x128xf32>
    %103 = vector.shape_cast %102 : vector<2x128xf32> to vector<2x1x128xf32>
    %104 = vector.broadcast %101 : vector<2x16x1xf32> to vector<2x16x128xf32>
    %105 = vector.broadcast %103 : vector<2x1x128xf32> to vector<2x16x128xf32>
    %106 = arith.mulf %104, %105 : vector<2x16x128xf32>
    %107 = arith.mulf %100, %86 : vector<2x16x128xf32>
    %108 = arith.addf %107, %106 : vector<2x16x128xf32>
    %109 = vector.shape_cast %95 : vector<2x16xf32> to vector<2x16x1xf32>
    %110 = vector.broadcast %109 : vector<2x16x1xf32> to vector<2x16x128xf32>
    %111 = arith.mulf %108, %110 : vector<2x16x128xf32>
    %cst_46 = arith.constant dense<0.000000e+00> : vector<2x128xf32>
    %112 = vector.multi_reduction <add>, %111, %cst_46 [1] : vector<2x16x128xf32> to vector<2x128xf32>
    %c0_i32 = arith.constant 0 : i32
    %113 = vector.broadcast %c0_i32 : i32 to vector<2x8x128xi32>
    %114 = arith.cmpi eq, %1, %113 : vector<2x8x128xi32>
    %115 = vector.shape_cast %112 : vector<2x128xf32> to vector<2x1x128xf32>
    %cst_47 = arith.constant 0.000000e+00 : f32
    %116 = vector.shape_cast %115 : vector<2x1x128xf32> to vector<2x1x128xf32>
    %117 = vector.broadcast %116 : vector<2x1x128xf32> to vector<2x8x128xf32>
    %118 = vector.broadcast %cst_47 : f32 to vector<2x8x128xf32>
    %119 = arith.select %114, %117, %118 : vector<2x8x128xi1>, vector<2x8x128xf32>
    %120 = arith.addf %87, %119 : vector<2x8x128xf32>
    %121 = vector.extract_strided_slice %82 {offsets = [0, 1, 0], sizes = [2, 1, 128], strides = [1, 1, 1]} : vector<2x8x128xf32> to vector<2x1x128xf32>
    %122 = vector.shape_cast %121 : vector<2x1x128xf32> to vector<2x128xf32>
    %123 = vector.extract_strided_slice %83 {offsets = [0, 1, 0], sizes = [2, 1, 128], strides = [1, 1, 1]} : vector<2x8x128xf32> to vector<2x1x128xf32>
    %124 = vector.shape_cast %123 : vector<2x1x128xf32> to vector<2x128xf32>
    %125 = vector.extract_strided_slice %84 {offsets = [0, 1, 0], sizes = [2, 1, 16], strides = [1, 1, 1]} : vector<2x8x16xf32> to vector<2x1x16xf32>
    %126 = vector.shape_cast %125 : vector<2x1x16xf32> to vector<2x16xf32>
    %127 = vector.extract_strided_slice %85 {offsets = [0, 1, 0], sizes = [2, 1, 16], strides = [1, 1, 1]} : vector<2x8x16xf32> to vector<2x1x16xf32>
    %128 = vector.shape_cast %127 : vector<2x1x16xf32> to vector<2x16xf32>
    %129 = vector.shape_cast %81 : vector<16x128xf32> to vector<1x16x128xf32>
    %130 = vector.shape_cast %122 : vector<2x128xf32> to vector<2x1x128xf32>
    %131 = vector.broadcast %129 : vector<1x16x128xf32> to vector<2x16x128xf32>
    %132 = vector.broadcast %130 : vector<2x1x128xf32> to vector<2x16x128xf32>
    %133 = arith.mulf %131, %132 : vector<2x16x128xf32>
    %134 = vector.shape_cast %126 : vector<2x16xf32> to vector<2x16x1xf32>
    %135 = arith.mulf %122, %124 : vector<2x128xf32>
    %136 = vector.shape_cast %135 : vector<2x128xf32> to vector<2x1x128xf32>
    %137 = vector.broadcast %134 : vector<2x16x1xf32> to vector<2x16x128xf32>
    %138 = vector.broadcast %136 : vector<2x1x128xf32> to vector<2x16x128xf32>
    %139 = arith.mulf %137, %138 : vector<2x16x128xf32>
    %140 = arith.mulf %133, %108 : vector<2x16x128xf32>
    %141 = arith.addf %140, %139 : vector<2x16x128xf32>
    %142 = vector.shape_cast %128 : vector<2x16xf32> to vector<2x16x1xf32>
    %143 = vector.broadcast %142 : vector<2x16x1xf32> to vector<2x16x128xf32>
    %144 = arith.mulf %141, %143 : vector<2x16x128xf32>
    %cst_48 = arith.constant dense<0.000000e+00> : vector<2x128xf32>
    %145 = vector.multi_reduction <add>, %144, %cst_48 [1] : vector<2x16x128xf32> to vector<2x128xf32>
    %c1_i32_49 = arith.constant 1 : i32
    %146 = vector.broadcast %c1_i32_49 : i32 to vector<2x8x128xi32>
    %147 = arith.cmpi eq, %1, %146 : vector<2x8x128xi32>
    %148 = vector.shape_cast %145 : vector<2x128xf32> to vector<2x1x128xf32>
    %cst_50 = arith.constant 0.000000e+00 : f32
    %149 = vector.shape_cast %148 : vector<2x1x128xf32> to vector<2x1x128xf32>
    %150 = vector.broadcast %149 : vector<2x1x128xf32> to vector<2x8x128xf32>
    %151 = vector.broadcast %cst_50 : f32 to vector<2x8x128xf32>
    %152 = arith.select %147, %150, %151 : vector<2x8x128xi1>, vector<2x8x128xf32>
    %153 = arith.addf %120, %152 : vector<2x8x128xf32>
    %154 = vector.extract_strided_slice %82 {offsets = [0, 2, 0], sizes = [2, 1, 128], strides = [1, 1, 1]} : vector<2x8x128xf32> to vector<2x1x128xf32>
    %155 = vector.shape_cast %154 : vector<2x1x128xf32> to vector<2x128xf32>
    %156 = vector.extract_strided_slice %83 {offsets = [0, 2, 0], sizes = [2, 1, 128], strides = [1, 1, 1]} : vector<2x8x128xf32> to vector<2x1x128xf32>
    %157 = vector.shape_cast %156 : vector<2x1x128xf32> to vector<2x128xf32>
    %158 = vector.extract_strided_slice %84 {offsets = [0, 2, 0], sizes = [2, 1, 16], strides = [1, 1, 1]} : vector<2x8x16xf32> to vector<2x1x16xf32>
    %159 = vector.shape_cast %158 : vector<2x1x16xf32> to vector<2x16xf32>
    %160 = vector.extract_strided_slice %85 {offsets = [0, 2, 0], sizes = [2, 1, 16], strides = [1, 1, 1]} : vector<2x8x16xf32> to vector<2x1x16xf32>
    %161 = vector.shape_cast %160 : vector<2x1x16xf32> to vector<2x16xf32>
    %162 = vector.shape_cast %81 : vector<16x128xf32> to vector<1x16x128xf32>
    %163 = vector.shape_cast %155 : vector<2x128xf32> to vector<2x1x128xf32>
    %164 = vector.broadcast %162 : vector<1x16x128xf32> to vector<2x16x128xf32>
    %165 = vector.broadcast %163 : vector<2x1x128xf32> to vector<2x16x128xf32>
    %166 = arith.mulf %164, %165 : vector<2x16x128xf32>
    %167 = vector.shape_cast %159 : vector<2x16xf32> to vector<2x16x1xf32>
    %168 = arith.mulf %155, %157 : vector<2x128xf32>
    %169 = vector.shape_cast %168 : vector<2x128xf32> to vector<2x1x128xf32>
    %170 = vector.broadcast %167 : vector<2x16x1xf32> to vector<2x16x128xf32>
    %171 = vector.broadcast %169 : vector<2x1x128xf32> to vector<2x16x128xf32>
    %172 = arith.mulf %170, %171 : vector<2x16x128xf32>
    %173 = arith.mulf %166, %141 : vector<2x16x128xf32>
    %174 = arith.addf %173, %172 : vector<2x16x128xf32>
    %175 = vector.shape_cast %161 : vector<2x16xf32> to vector<2x16x1xf32>
    %176 = vector.broadcast %175 : vector<2x16x1xf32> to vector<2x16x128xf32>
    %177 = arith.mulf %174, %176 : vector<2x16x128xf32>
    %cst_51 = arith.constant dense<0.000000e+00> : vector<2x128xf32>
    %178 = vector.multi_reduction <add>, %177, %cst_51 [1] : vector<2x16x128xf32> to vector<2x128xf32>
    %c2_i32_52 = arith.constant 2 : i32
    %179 = vector.broadcast %c2_i32_52 : i32 to vector<2x8x128xi32>
    %180 = arith.cmpi eq, %1, %179 : vector<2x8x128xi32>
    %181 = vector.shape_cast %178 : vector<2x128xf32> to vector<2x1x128xf32>
    %cst_53 = arith.constant 0.000000e+00 : f32
    %182 = vector.shape_cast %181 : vector<2x1x128xf32> to vector<2x1x128xf32>
    %183 = vector.broadcast %182 : vector<2x1x128xf32> to vector<2x8x128xf32>
    %184 = vector.broadcast %cst_53 : f32 to vector<2x8x128xf32>
    %185 = arith.select %180, %183, %184 : vector<2x8x128xi1>, vector<2x8x128xf32>
    %186 = arith.addf %153, %185 : vector<2x8x128xf32>
    %187 = vector.extract_strided_slice %82 {offsets = [0, 3, 0], sizes = [2, 1, 128], strides = [1, 1, 1]} : vector<2x8x128xf32> to vector<2x1x128xf32>
    %188 = vector.shape_cast %187 : vector<2x1x128xf32> to vector<2x128xf32>
    %189 = vector.extract_strided_slice %83 {offsets = [0, 3, 0], sizes = [2, 1, 128], strides = [1, 1, 1]} : vector<2x8x128xf32> to vector<2x1x128xf32>
    %190 = vector.shape_cast %189 : vector<2x1x128xf32> to vector<2x128xf32>
    %191 = vector.extract_strided_slice %84 {offsets = [0, 3, 0], sizes = [2, 1, 16], strides = [1, 1, 1]} : vector<2x8x16xf32> to vector<2x1x16xf32>
    %192 = vector.shape_cast %191 : vector<2x1x16xf32> to vector<2x16xf32>
    %193 = vector.extract_strided_slice %85 {offsets = [0, 3, 0], sizes = [2, 1, 16], strides = [1, 1, 1]} : vector<2x8x16xf32> to vector<2x1x16xf32>
    %194 = vector.shape_cast %193 : vector<2x1x16xf32> to vector<2x16xf32>
    %195 = vector.shape_cast %81 : vector<16x128xf32> to vector<1x16x128xf32>
    %196 = vector.shape_cast %188 : vector<2x128xf32> to vector<2x1x128xf32>
    %197 = vector.broadcast %195 : vector<1x16x128xf32> to vector<2x16x128xf32>
    %198 = vector.broadcast %196 : vector<2x1x128xf32> to vector<2x16x128xf32>
    %199 = arith.mulf %197, %198 : vector<2x16x128xf32>
    %200 = vector.shape_cast %192 : vector<2x16xf32> to vector<2x16x1xf32>
    %201 = arith.mulf %188, %190 : vector<2x128xf32>
    %202 = vector.shape_cast %201 : vector<2x128xf32> to vector<2x1x128xf32>
    %203 = vector.broadcast %200 : vector<2x16x1xf32> to vector<2x16x128xf32>
    %204 = vector.broadcast %202 : vector<2x1x128xf32> to vector<2x16x128xf32>
    %205 = arith.mulf %203, %204 : vector<2x16x128xf32>
    %206 = arith.mulf %199, %174 : vector<2x16x128xf32>
    %207 = arith.addf %206, %205 : vector<2x16x128xf32>
    %208 = vector.shape_cast %194 : vector<2x16xf32> to vector<2x16x1xf32>
    %209 = vector.broadcast %208 : vector<2x16x1xf32> to vector<2x16x128xf32>
    %210 = arith.mulf %207, %209 : vector<2x16x128xf32>
    %cst_54 = arith.constant dense<0.000000e+00> : vector<2x128xf32>
    %211 = vector.multi_reduction <add>, %210, %cst_54 [1] : vector<2x16x128xf32> to vector<2x128xf32>
    %c3_i32_55 = arith.constant 3 : i32
    %212 = vector.broadcast %c3_i32_55 : i32 to vector<2x8x128xi32>
    %213 = arith.cmpi eq, %1, %212 : vector<2x8x128xi32>
    %214 = vector.shape_cast %211 : vector<2x128xf32> to vector<2x1x128xf32>
    %cst_56 = arith.constant 0.000000e+00 : f32
    %215 = vector.shape_cast %214 : vector<2x1x128xf32> to vector<2x1x128xf32>
    %216 = vector.broadcast %215 : vector<2x1x128xf32> to vector<2x8x128xf32>
    %217 = vector.broadcast %cst_56 : f32 to vector<2x8x128xf32>
    %218 = arith.select %213, %216, %217 : vector<2x8x128xi1>, vector<2x8x128xf32>
    %219 = arith.addf %186, %218 : vector<2x8x128xf32>
    %220 = vector.extract_strided_slice %82 {offsets = [0, 4, 0], sizes = [2, 1, 128], strides = [1, 1, 1]} : vector<2x8x128xf32> to vector<2x1x128xf32>
    %221 = vector.shape_cast %220 : vector<2x1x128xf32> to vector<2x128xf32>
    %222 = vector.extract_strided_slice %83 {offsets = [0, 4, 0], sizes = [2, 1, 128], strides = [1, 1, 1]} : vector<2x8x128xf32> to vector<2x1x128xf32>
    %223 = vector.shape_cast %222 : vector<2x1x128xf32> to vector<2x128xf32>
    %224 = vector.extract_strided_slice %84 {offsets = [0, 4, 0], sizes = [2, 1, 16], strides = [1, 1, 1]} : vector<2x8x16xf32> to vector<2x1x16xf32>
    %225 = vector.shape_cast %224 : vector<2x1x16xf32> to vector<2x16xf32>
    %226 = vector.extract_strided_slice %85 {offsets = [0, 4, 0], sizes = [2, 1, 16], strides = [1, 1, 1]} : vector<2x8x16xf32> to vector<2x1x16xf32>
    %227 = vector.shape_cast %226 : vector<2x1x16xf32> to vector<2x16xf32>
    %228 = vector.shape_cast %81 : vector<16x128xf32> to vector<1x16x128xf32>
    %229 = vector.shape_cast %221 : vector<2x128xf32> to vector<2x1x128xf32>
    %230 = vector.broadcast %228 : vector<1x16x128xf32> to vector<2x16x128xf32>
    %231 = vector.broadcast %229 : vector<2x1x128xf32> to vector<2x16x128xf32>
    %232 = arith.mulf %230, %231 : vector<2x16x128xf32>
    %233 = vector.shape_cast %225 : vector<2x16xf32> to vector<2x16x1xf32>
    %234 = arith.mulf %221, %223 : vector<2x128xf32>
    %235 = vector.shape_cast %234 : vector<2x128xf32> to vector<2x1x128xf32>
    %236 = vector.broadcast %233 : vector<2x16x1xf32> to vector<2x16x128xf32>
    %237 = vector.broadcast %235 : vector<2x1x128xf32> to vector<2x16x128xf32>
    %238 = arith.mulf %236, %237 : vector<2x16x128xf32>
    %239 = arith.mulf %232, %207 : vector<2x16x128xf32>
    %240 = arith.addf %239, %238 : vector<2x16x128xf32>
    %241 = vector.shape_cast %227 : vector<2x16xf32> to vector<2x16x1xf32>
    %242 = vector.broadcast %241 : vector<2x16x1xf32> to vector<2x16x128xf32>
    %243 = arith.mulf %240, %242 : vector<2x16x128xf32>
    %cst_57 = arith.constant dense<0.000000e+00> : vector<2x128xf32>
    %244 = vector.multi_reduction <add>, %243, %cst_57 [1] : vector<2x16x128xf32> to vector<2x128xf32>
    %c4_i32 = arith.constant 4 : i32
    %245 = vector.broadcast %c4_i32 : i32 to vector<2x8x128xi32>
    %246 = arith.cmpi eq, %1, %245 : vector<2x8x128xi32>
    %247 = vector.shape_cast %244 : vector<2x128xf32> to vector<2x1x128xf32>
    %cst_58 = arith.constant 0.000000e+00 : f32
    %248 = vector.shape_cast %247 : vector<2x1x128xf32> to vector<2x1x128xf32>
    %249 = vector.broadcast %248 : vector<2x1x128xf32> to vector<2x8x128xf32>
    %250 = vector.broadcast %cst_58 : f32 to vector<2x8x128xf32>
    %251 = arith.select %246, %249, %250 : vector<2x8x128xi1>, vector<2x8x128xf32>
    %252 = arith.addf %219, %251 : vector<2x8x128xf32>
    %253 = vector.extract_strided_slice %82 {offsets = [0, 5, 0], sizes = [2, 1, 128], strides = [1, 1, 1]} : vector<2x8x128xf32> to vector<2x1x128xf32>
    %254 = vector.shape_cast %253 : vector<2x1x128xf32> to vector<2x128xf32>
    %255 = vector.extract_strided_slice %83 {offsets = [0, 5, 0], sizes = [2, 1, 128], strides = [1, 1, 1]} : vector<2x8x128xf32> to vector<2x1x128xf32>
    %256 = vector.shape_cast %255 : vector<2x1x128xf32> to vector<2x128xf32>
    %257 = vector.extract_strided_slice %84 {offsets = [0, 5, 0], sizes = [2, 1, 16], strides = [1, 1, 1]} : vector<2x8x16xf32> to vector<2x1x16xf32>
    %258 = vector.shape_cast %257 : vector<2x1x16xf32> to vector<2x16xf32>
    %259 = vector.extract_strided_slice %85 {offsets = [0, 5, 0], sizes = [2, 1, 16], strides = [1, 1, 1]} : vector<2x8x16xf32> to vector<2x1x16xf32>
    %260 = vector.shape_cast %259 : vector<2x1x16xf32> to vector<2x16xf32>
    %261 = vector.shape_cast %81 : vector<16x128xf32> to vector<1x16x128xf32>
    %262 = vector.shape_cast %254 : vector<2x128xf32> to vector<2x1x128xf32>
    %263 = vector.broadcast %261 : vector<1x16x128xf32> to vector<2x16x128xf32>
    %264 = vector.broadcast %262 : vector<2x1x128xf32> to vector<2x16x128xf32>
    %265 = arith.mulf %263, %264 : vector<2x16x128xf32>
    %266 = vector.shape_cast %258 : vector<2x16xf32> to vector<2x16x1xf32>
    %267 = arith.mulf %254, %256 : vector<2x128xf32>
    %268 = vector.shape_cast %267 : vector<2x128xf32> to vector<2x1x128xf32>
    %269 = vector.broadcast %266 : vector<2x16x1xf32> to vector<2x16x128xf32>
    %270 = vector.broadcast %268 : vector<2x1x128xf32> to vector<2x16x128xf32>
    %271 = arith.mulf %269, %270 : vector<2x16x128xf32>
    %272 = arith.mulf %265, %240 : vector<2x16x128xf32>
    %273 = arith.addf %272, %271 : vector<2x16x128xf32>
    %274 = vector.shape_cast %260 : vector<2x16xf32> to vector<2x16x1xf32>
    %275 = vector.broadcast %274 : vector<2x16x1xf32> to vector<2x16x128xf32>
    %276 = arith.mulf %273, %275 : vector<2x16x128xf32>
    %cst_59 = arith.constant dense<0.000000e+00> : vector<2x128xf32>
    %277 = vector.multi_reduction <add>, %276, %cst_59 [1] : vector<2x16x128xf32> to vector<2x128xf32>
    %c5_i32 = arith.constant 5 : i32
    %278 = vector.broadcast %c5_i32 : i32 to vector<2x8x128xi32>
    %279 = arith.cmpi eq, %1, %278 : vector<2x8x128xi32>
    %280 = vector.shape_cast %277 : vector<2x128xf32> to vector<2x1x128xf32>
    %cst_60 = arith.constant 0.000000e+00 : f32
    %281 = vector.shape_cast %280 : vector<2x1x128xf32> to vector<2x1x128xf32>
    %282 = vector.broadcast %281 : vector<2x1x128xf32> to vector<2x8x128xf32>
    %283 = vector.broadcast %cst_60 : f32 to vector<2x8x128xf32>
    %284 = arith.select %279, %282, %283 : vector<2x8x128xi1>, vector<2x8x128xf32>
    %285 = arith.addf %252, %284 : vector<2x8x128xf32>
    %286 = vector.extract_strided_slice %82 {offsets = [0, 6, 0], sizes = [2, 1, 128], strides = [1, 1, 1]} : vector<2x8x128xf32> to vector<2x1x128xf32>
    %287 = vector.shape_cast %286 : vector<2x1x128xf32> to vector<2x128xf32>
    %288 = vector.extract_strided_slice %83 {offsets = [0, 6, 0], sizes = [2, 1, 128], strides = [1, 1, 1]} : vector<2x8x128xf32> to vector<2x1x128xf32>
    %289 = vector.shape_cast %288 : vector<2x1x128xf32> to vector<2x128xf32>
    %290 = vector.extract_strided_slice %84 {offsets = [0, 6, 0], sizes = [2, 1, 16], strides = [1, 1, 1]} : vector<2x8x16xf32> to vector<2x1x16xf32>
    %291 = vector.shape_cast %290 : vector<2x1x16xf32> to vector<2x16xf32>
    %292 = vector.extract_strided_slice %85 {offsets = [0, 6, 0], sizes = [2, 1, 16], strides = [1, 1, 1]} : vector<2x8x16xf32> to vector<2x1x16xf32>
    %293 = vector.shape_cast %292 : vector<2x1x16xf32> to vector<2x16xf32>
    %294 = vector.shape_cast %81 : vector<16x128xf32> to vector<1x16x128xf32>
    %295 = vector.shape_cast %287 : vector<2x128xf32> to vector<2x1x128xf32>
    %296 = vector.broadcast %294 : vector<1x16x128xf32> to vector<2x16x128xf32>
    %297 = vector.broadcast %295 : vector<2x1x128xf32> to vector<2x16x128xf32>
    %298 = arith.mulf %296, %297 : vector<2x16x128xf32>
    %299 = vector.shape_cast %291 : vector<2x16xf32> to vector<2x16x1xf32>
    %300 = arith.mulf %287, %289 : vector<2x128xf32>
    %301 = vector.shape_cast %300 : vector<2x128xf32> to vector<2x1x128xf32>
    %302 = vector.broadcast %299 : vector<2x16x1xf32> to vector<2x16x128xf32>
    %303 = vector.broadcast %301 : vector<2x1x128xf32> to vector<2x16x128xf32>
    %304 = arith.mulf %302, %303 : vector<2x16x128xf32>
    %305 = arith.mulf %298, %273 : vector<2x16x128xf32>
    %306 = arith.addf %305, %304 : vector<2x16x128xf32>
    %307 = vector.shape_cast %293 : vector<2x16xf32> to vector<2x16x1xf32>
    %308 = vector.broadcast %307 : vector<2x16x1xf32> to vector<2x16x128xf32>
    %309 = arith.mulf %306, %308 : vector<2x16x128xf32>
    %cst_61 = arith.constant dense<0.000000e+00> : vector<2x128xf32>
    %310 = vector.multi_reduction <add>, %309, %cst_61 [1] : vector<2x16x128xf32> to vector<2x128xf32>
    %c6_i32 = arith.constant 6 : i32
    %311 = vector.broadcast %c6_i32 : i32 to vector<2x8x128xi32>
    %312 = arith.cmpi eq, %1, %311 : vector<2x8x128xi32>
    %313 = vector.shape_cast %310 : vector<2x128xf32> to vector<2x1x128xf32>
    %cst_62 = arith.constant 0.000000e+00 : f32
    %314 = vector.shape_cast %313 : vector<2x1x128xf32> to vector<2x1x128xf32>
    %315 = vector.broadcast %314 : vector<2x1x128xf32> to vector<2x8x128xf32>
    %316 = vector.broadcast %cst_62 : f32 to vector<2x8x128xf32>
    %317 = arith.select %312, %315, %316 : vector<2x8x128xi1>, vector<2x8x128xf32>
    %318 = arith.addf %285, %317 : vector<2x8x128xf32>
    %319 = vector.extract_strided_slice %82 {offsets = [0, 7, 0], sizes = [2, 1, 128], strides = [1, 1, 1]} : vector<2x8x128xf32> to vector<2x1x128xf32>
    %320 = vector.shape_cast %319 : vector<2x1x128xf32> to vector<2x128xf32>
    %321 = vector.extract_strided_slice %83 {offsets = [0, 7, 0], sizes = [2, 1, 128], strides = [1, 1, 1]} : vector<2x8x128xf32> to vector<2x1x128xf32>
    %322 = vector.shape_cast %321 : vector<2x1x128xf32> to vector<2x128xf32>
    %323 = vector.extract_strided_slice %84 {offsets = [0, 7, 0], sizes = [2, 1, 16], strides = [1, 1, 1]} : vector<2x8x16xf32> to vector<2x1x16xf32>
    %324 = vector.shape_cast %323 : vector<2x1x16xf32> to vector<2x16xf32>
    %325 = vector.extract_strided_slice %85 {offsets = [0, 7, 0], sizes = [2, 1, 16], strides = [1, 1, 1]} : vector<2x8x16xf32> to vector<2x1x16xf32>
    %326 = vector.shape_cast %325 : vector<2x1x16xf32> to vector<2x16xf32>
    %327 = vector.shape_cast %81 : vector<16x128xf32> to vector<1x16x128xf32>
    %328 = vector.shape_cast %320 : vector<2x128xf32> to vector<2x1x128xf32>
    %329 = vector.broadcast %327 : vector<1x16x128xf32> to vector<2x16x128xf32>
    %330 = vector.broadcast %328 : vector<2x1x128xf32> to vector<2x16x128xf32>
    %331 = arith.mulf %329, %330 : vector<2x16x128xf32>
    %332 = vector.shape_cast %324 : vector<2x16xf32> to vector<2x16x1xf32>
    %333 = arith.mulf %320, %322 : vector<2x128xf32>
    %334 = vector.shape_cast %333 : vector<2x128xf32> to vector<2x1x128xf32>
    %335 = vector.broadcast %332 : vector<2x16x1xf32> to vector<2x16x128xf32>
    %336 = vector.broadcast %334 : vector<2x1x128xf32> to vector<2x16x128xf32>
    %337 = arith.mulf %335, %336 : vector<2x16x128xf32>
    %338 = arith.mulf %331, %306 : vector<2x16x128xf32>
    %339 = arith.addf %338, %337 : vector<2x16x128xf32>
    %340 = vector.shape_cast %326 : vector<2x16xf32> to vector<2x16x1xf32>
    %341 = vector.broadcast %340 : vector<2x16x1xf32> to vector<2x16x128xf32>
    %342 = arith.mulf %339, %341 : vector<2x16x128xf32>
    %cst_63 = arith.constant dense<0.000000e+00> : vector<2x128xf32>
    %343 = vector.multi_reduction <add>, %342, %cst_63 [1] : vector<2x16x128xf32> to vector<2x128xf32>
    %c7_i32 = arith.constant 7 : i32
    %344 = vector.broadcast %c7_i32 : i32 to vector<2x8x128xi32>
    %345 = arith.cmpi eq, %1, %344 : vector<2x8x128xi32>
    %346 = vector.shape_cast %343 : vector<2x128xf32> to vector<2x1x128xf32>
    %cst_64 = arith.constant 0.000000e+00 : f32
    %347 = vector.shape_cast %346 : vector<2x1x128xf32> to vector<2x1x128xf32>
    %348 = vector.broadcast %347 : vector<2x1x128xf32> to vector<2x8x128xf32>
    %349 = vector.broadcast %cst_64 : f32 to vector<2x8x128xf32>
    %350 = arith.select %345, %348, %349 : vector<2x8x128xi1>, vector<2x8x128xf32>
    %351 = arith.addf %318, %350 : vector<2x8x128xf32>
    %352 = vector.shape_cast %351 : vector<2x8x128xf32> to vector<16x128xf32>
    %c0_65 = arith.constant 0 : index
    %c0_66 = arith.constant 0 : index
    %353 = vector.load %arg11[%c0_65, %c0_66] : memref<1x128xf32, #tpu.memory_space<vmem>>, vector<1x128xf32>
    %354 = vector.broadcast %353 : vector<1x128xf32> to vector<16x128xf32>
    %355 = arith.mulf %354, %58 : vector<16x128xf32>
    %356 = arith.addf %352, %355 : vector<16x128xf32>
    %357 = arith.negf %19 : vector<16x128xf32>
    %358 = math.exp %357 : vector<16x128xf32>
    %cst_67 = arith.constant 1.000000e+00 : f32
    %359 = vector.broadcast %cst_67 : f32 to vector<16x128xf32>
    %360 = arith.addf %359, %358 : vector<16x128xf32>
    %361 = arith.divf %359, %360 : vector<16x128xf32>
    %362 = arith.mulf %19, %361 : vector<16x128xf32>
    %363 = arith.mulf %356, %362 : vector<16x128xf32>
    %c0_68 = arith.constant 0 : index
    %c0_69 = arith.constant 0 : index
    %364 = vector.load %arg12[%c0_68, %c0_69] : memref<128x128xf32, #tpu.memory_space<vmem>>, vector<128x128xf32>
    %cst_70 = arith.constant dense<0.000000e+00> : vector<16x128xf32>
    %365 = tpu.matmul %363, %364, %cst_70 {dimension_numbers = #tpu.dot_dimension_numbers<[1], [0], [0], [1], [0, 0, 1, 1], [], []>} : vector<16x128xf32>, vector<128x128xf32>, vector<16x128xf32> -> vector<16x128xf32>
    %366 = arith.addf %365, %0 : vector<16x128xf32>
    %367 = tpu.iota {dimensions = array<i32: 1>} : vector<2x8x128xi32>
    %368 = vector.shape_cast %367 : vector<2x8x128xi32> to vector<16x128xi32>
    %369 = arith.mulf %366, %366 : vector<16x128xf32>
    %cst_71 = arith.constant dense<0.000000e+00> : vector<16xf32>
    %370 = vector.multi_reduction <add>, %369, %cst_71 [1] : vector<16x128xf32> to vector<16xf32>
    %371 = vector.shape_cast %370 : vector<16xf32> to vector<16x1xf32>
    %372 = math.sqrt %371 : vector<16x1xf32>
    %cst_72 = arith.constant 9.99999974E-6 : f32
    %373 = vector.broadcast %cst_72 : f32 to vector<16x1xf32>
    %374 = arith.addf %372, %373 : vector<16x1xf32>
    %cst_73 = arith.constant 11.3137083 : f32
    %375 = vector.broadcast %cst_73 : f32 to vector<16x1xf32>
    %376 = arith.divf %375, %374 : vector<16x1xf32>
    %377 = vector.broadcast %376 : vector<16x1xf32> to vector<16x128xf32>
    %378 = arith.mulf %366, %377 : vector<16x128xf32>
    %c0_74 = arith.constant 0 : index
    %c0_75 = arith.constant 0 : index
    %379 = vector.load %arg13[%c0_74, %c0_75] : memref<1x128xf32, #tpu.memory_space<vmem>>, vector<1x128xf32>
    %380 = vector.broadcast %379 : vector<1x128xf32> to vector<16x128xf32>
    %381 = arith.mulf %378, %380 : vector<16x128xf32>
    %c0_76 = arith.constant 0 : index
    %c0_77 = arith.constant 0 : index
    %382 = vector.load %arg14[%c0_76, %c0_77] : memref<128x128xf32, #tpu.memory_space<vmem>>, vector<128x128xf32>
    %cst_78 = arith.constant dense<0.000000e+00> : vector<16x128xf32>
    %383 = tpu.matmul %381, %382, %cst_78 {dimension_numbers = #tpu.dot_dimension_numbers<[1], [0], [0], [1], [0, 0, 1, 1], [], []>} : vector<16x128xf32>, vector<128x128xf32>, vector<16x128xf32> -> vector<16x128xf32>
    %c0_79 = arith.constant 0 : index
    %c0_80 = arith.constant 0 : index
    %384 = vector.load %arg15[%c0_79, %c0_80] : memref<128x128xf32, #tpu.memory_space<vmem>>, vector<128x128xf32>
    %cst_81 = arith.constant dense<0.000000e+00> : vector<16x128xf32>
    %385 = tpu.matmul %381, %384, %cst_81 {dimension_numbers = #tpu.dot_dimension_numbers<[1], [0], [0], [1], [0, 0, 1, 1], [], []>} : vector<16x128xf32>, vector<128x128xf32>, vector<16x128xf32> -> vector<16x128xf32>
    %c0_82 = arith.constant 0 : index
    %c0_83 = arith.constant 0 : index
    %386 = vector.load %arg17[%c0_82, %c0_83] : memref<1x128xf32, #tpu.memory_space<vmem>>, vector<1x128xf32>
    %c3_84 = arith.constant 3 : index
    %c0_85 = arith.constant 0 : index
    %387 = vector.load %arg16[%c3_84, %c0_85] : memref<4x128xf32, #tpu.memory_space<vmem>>, vector<1x128xf32>
    %388 = vector.broadcast %387 : vector<1x128xf32> to vector<16x128xf32>
    %389 = arith.mulf %383, %388 : vector<16x128xf32>
    %390 = vector.broadcast %386 : vector<1x128xf32> to vector<16x128xf32>
    %391 = arith.addf %390, %389 : vector<16x128xf32>
    %c1_i32_86 = arith.constant 1 : i32
    %392 = tpu.dynamic_rotate %383 by %c1_i32_86 dim 0 : vector<16x128xf32>, i32 -> vector<16x128xf32>
    %c1_i32_87 = arith.constant 1 : i32
    %393 = vector.broadcast %c1_i32_87 : i32 to vector<16x128xi32>
    %394 = arith.cmpi sge, %368, %393 : vector<16x128xi32>
    %cst_88 = arith.constant 0.000000e+00 : f32
    %395 = vector.broadcast %cst_88 : f32 to vector<16x128xf32>
    %396 = arith.select %394, %392, %395 : vector<16x128xi1>, vector<16x128xf32>
    %c2_89 = arith.constant 2 : index
    %c0_90 = arith.constant 0 : index
    %397 = vector.load %arg16[%c2_89, %c0_90] : memref<4x128xf32, #tpu.memory_space<vmem>>, vector<1x128xf32>
    %398 = vector.broadcast %397 : vector<1x128xf32> to vector<16x128xf32>
    %399 = arith.mulf %396, %398 : vector<16x128xf32>
    %400 = arith.addf %391, %399 : vector<16x128xf32>
    %c2_i32_91 = arith.constant 2 : i32
    %401 = tpu.dynamic_rotate %383 by %c2_i32_91 dim 0 : vector<16x128xf32>, i32 -> vector<16x128xf32>
    %c2_i32_92 = arith.constant 2 : i32
    %402 = vector.broadcast %c2_i32_92 : i32 to vector<16x128xi32>
    %403 = arith.cmpi sge, %368, %402 : vector<16x128xi32>
    %cst_93 = arith.constant 0.000000e+00 : f32
    %404 = vector.broadcast %cst_93 : f32 to vector<16x128xf32>
    %405 = arith.select %403, %401, %404 : vector<16x128xi1>, vector<16x128xf32>
    %c1_94 = arith.constant 1 : index
    %c0_95 = arith.constant 0 : index
    %406 = vector.load %arg16[%c1_94, %c0_95] : memref<4x128xf32, #tpu.memory_space<vmem>>, vector<1x128xf32>
    %407 = vector.broadcast %406 : vector<1x128xf32> to vector<16x128xf32>
    %408 = arith.mulf %405, %407 : vector<16x128xf32>
    %409 = arith.addf %400, %408 : vector<16x128xf32>
    %c3_i32_96 = arith.constant 3 : i32
    %410 = tpu.dynamic_rotate %383 by %c3_i32_96 dim 0 : vector<16x128xf32>, i32 -> vector<16x128xf32>
    %c3_i32_97 = arith.constant 3 : i32
    %411 = vector.broadcast %c3_i32_97 : i32 to vector<16x128xi32>
    %412 = arith.cmpi sge, %368, %411 : vector<16x128xi32>
    %cst_98 = arith.constant 0.000000e+00 : f32
    %413 = vector.broadcast %cst_98 : f32 to vector<16x128xf32>
    %414 = arith.select %412, %410, %413 : vector<16x128xi1>, vector<16x128xf32>
    %c0_99 = arith.constant 0 : index
    %c0_100 = arith.constant 0 : index
    %415 = vector.load %arg16[%c0_99, %c0_100] : memref<4x128xf32, #tpu.memory_space<vmem>>, vector<1x128xf32>
    %416 = vector.broadcast %415 : vector<1x128xf32> to vector<16x128xf32>
    %417 = arith.mulf %414, %416 : vector<16x128xf32>
    %418 = arith.addf %409, %417 : vector<16x128xf32>
    %419 = arith.negf %418 : vector<16x128xf32>
    %420 = math.exp %419 : vector<16x128xf32>
    %cst_101 = arith.constant 1.000000e+00 : f32
    %421 = vector.broadcast %cst_101 : f32 to vector<16x128xf32>
    %422 = arith.addf %421, %420 : vector<16x128xf32>
    %423 = arith.divf %421, %422 : vector<16x128xf32>
    %424 = arith.mulf %418, %423 : vector<16x128xf32>
    %c0_102 = arith.constant 0 : index
    %c0_103 = arith.constant 0 : index
    %425 = vector.load %arg18[%c0_102, %c0_103] : memref<128x16xf32, #tpu.memory_space<vmem>>, vector<128x16xf32>
    %cst_104 = arith.constant dense<0.000000e+00> : vector<16x16xf32>
    %426 = tpu.matmul %424, %425, %cst_104 {dimension_numbers = #tpu.dot_dimension_numbers<[1], [0], [0], [1], [0, 0, 1, 1], [], []>} : vector<16x128xf32>, vector<128x16xf32>, vector<16x16xf32> -> vector<16x16xf32>
    %c0_105 = arith.constant 0 : index
    %c0_106 = arith.constant 0 : index
    %427 = vector.load %arg19[%c0_105, %c0_106] : memref<128x16xf32, #tpu.memory_space<vmem>>, vector<128x16xf32>
    %cst_107 = arith.constant dense<0.000000e+00> : vector<16x16xf32>
    %428 = tpu.matmul %424, %427, %cst_107 {dimension_numbers = #tpu.dot_dimension_numbers<[1], [0], [0], [1], [0, 0, 1, 1], [], []>} : vector<16x128xf32>, vector<128x16xf32>, vector<16x16xf32> -> vector<16x16xf32>
    %c0_108 = arith.constant 0 : index
    %c0_109 = arith.constant 0 : index
    %429 = vector.load %arg20[%c0_108, %c0_109] : memref<128x8xf32, #tpu.memory_space<vmem>>, vector<128x8xf32>
    %cst_110 = arith.constant dense<0.000000e+00> : vector<16x8xf32>
    %430 = tpu.matmul %424, %429, %cst_110 {dimension_numbers = #tpu.dot_dimension_numbers<[1], [0], [0], [1], [0, 0, 1, 1], [], []>} : vector<16x128xf32>, vector<128x8xf32>, vector<16x8xf32> -> vector<16x8xf32>
    %c0_111 = arith.constant 0 : index
    %c0_112 = arith.constant 0 : index
    %431 = vector.load %arg21[%c0_111, %c0_112] : memref<8x128xf32, #tpu.memory_space<vmem>>, vector<8x128xf32>
    %cst_113 = arith.constant dense<0.000000e+00> : vector<16x128xf32>
    %432 = tpu.matmul %430, %431, %cst_113 {dimension_numbers = #tpu.dot_dimension_numbers<[1], [0], [0], [1], [0, 0, 1, 1], [], []>} : vector<16x8xf32>, vector<8x128xf32>, vector<16x128xf32> -> vector<16x128xf32>
    %c0_114 = arith.constant 0 : index
    %c0_115 = arith.constant 0 : index
    %433 = vector.load %arg23[%c0_114, %c0_115] : memref<1x128xf32, #tpu.memory_space<vmem>>, vector<1x128xf32>
    %434 = vector.broadcast %433 : vector<1x128xf32> to vector<16x128xf32>
    %435 = arith.addf %434, %432 : vector<16x128xf32>
    %cst_116 = arith.constant 0.000000e+00 : f32
    %436 = vector.broadcast %cst_116 : f32 to vector<16x128xf32>
    %437 = arith.maximumf %435, %436 : vector<16x128xf32>
    %438 = math.absf %435 : vector<16x128xf32>
    %cst_117 = arith.constant 0.000000e+00 : f32
    %439 = vector.broadcast %cst_117 : f32 to vector<16x128xf32>
    %440 = arith.subf %439, %438 : vector<16x128xf32>
    %441 = math.exp %440 : vector<16x128xf32>
    %442 = math.log1p %441 : vector<16x128xf32>
    %443 = arith.addf %437, %442 : vector<16x128xf32>
    %c0_118 = arith.constant 0 : index
    %c0_119 = arith.constant 0 : index
    %444 = vector.load %arg22[%c0_118, %c0_119] : memref<16x128xf32, #tpu.memory_space<vmem>>, vector<16x128xf32>
    %cst_120 = arith.constant 0.000000e+00 : f32
    %445 = vector.broadcast %cst_120 : f32 to vector<16x128xf32>
    %446 = arith.subf %445, %444 : vector<16x128xf32>
    %447 = math.exp %446 : vector<16x128xf32>
    %448 = vector.shape_cast %443 : vector<16x128xf32> to vector<2x8x128xf32>
    %449 = vector.shape_cast %424 : vector<16x128xf32> to vector<2x8x128xf32>
    %450 = vector.shape_cast %426 : vector<16x16xf32> to vector<2x8x16xf32>
    %451 = vector.shape_cast %428 : vector<16x16xf32> to vector<2x8x16xf32>
    %cst_121 = arith.constant 0.000000e+00 : f32
    %452 = vector.broadcast %cst_121 : f32 to vector<2x16x128xf32>
    %cst_122 = arith.constant 0.000000e+00 : f32
    %453 = vector.broadcast %cst_122 : f32 to vector<2x8x128xf32>
    %454 = vector.extract_strided_slice %448 {offsets = [0, 0, 0], sizes = [2, 1, 128], strides = [1, 1, 1]} : vector<2x8x128xf32> to vector<2x1x128xf32>
    %455 = vector.shape_cast %454 : vector<2x1x128xf32> to vector<2x128xf32>
    %456 = vector.extract_strided_slice %449 {offsets = [0, 0, 0], sizes = [2, 1, 128], strides = [1, 1, 1]} : vector<2x8x128xf32> to vector<2x1x128xf32>
    %457 = vector.shape_cast %456 : vector<2x1x128xf32> to vector<2x128xf32>
    %458 = vector.extract_strided_slice %450 {offsets = [0, 0, 0], sizes = [2, 1, 16], strides = [1, 1, 1]} : vector<2x8x16xf32> to vector<2x1x16xf32>
    %459 = vector.shape_cast %458 : vector<2x1x16xf32> to vector<2x16xf32>
    %460 = vector.extract_strided_slice %451 {offsets = [0, 0, 0], sizes = [2, 1, 16], strides = [1, 1, 1]} : vector<2x8x16xf32> to vector<2x1x16xf32>
    %461 = vector.shape_cast %460 : vector<2x1x16xf32> to vector<2x16xf32>
    %462 = vector.shape_cast %447 : vector<16x128xf32> to vector<1x16x128xf32>
    %463 = vector.shape_cast %455 : vector<2x128xf32> to vector<2x1x128xf32>
    %464 = vector.broadcast %462 : vector<1x16x128xf32> to vector<2x16x128xf32>
    %465 = vector.broadcast %463 : vector<2x1x128xf32> to vector<2x16x128xf32>
    %466 = arith.mulf %464, %465 : vector<2x16x128xf32>
    %467 = vector.shape_cast %459 : vector<2x16xf32> to vector<2x16x1xf32>
    %468 = arith.mulf %455, %457 : vector<2x128xf32>
    %469 = vector.shape_cast %468 : vector<2x128xf32> to vector<2x1x128xf32>
    %470 = vector.broadcast %467 : vector<2x16x1xf32> to vector<2x16x128xf32>
    %471 = vector.broadcast %469 : vector<2x1x128xf32> to vector<2x16x128xf32>
    %472 = arith.mulf %470, %471 : vector<2x16x128xf32>
    %473 = arith.mulf %466, %452 : vector<2x16x128xf32>
    %474 = arith.addf %473, %472 : vector<2x16x128xf32>
    %475 = vector.shape_cast %461 : vector<2x16xf32> to vector<2x16x1xf32>
    %476 = vector.broadcast %475 : vector<2x16x1xf32> to vector<2x16x128xf32>
    %477 = arith.mulf %474, %476 : vector<2x16x128xf32>
    %cst_123 = arith.constant dense<0.000000e+00> : vector<2x128xf32>
    %478 = vector.multi_reduction <add>, %477, %cst_123 [1] : vector<2x16x128xf32> to vector<2x128xf32>
    %c0_i32_124 = arith.constant 0 : i32
    %479 = vector.broadcast %c0_i32_124 : i32 to vector<2x8x128xi32>
    %480 = arith.cmpi eq, %367, %479 : vector<2x8x128xi32>
    %481 = vector.shape_cast %478 : vector<2x128xf32> to vector<2x1x128xf32>
    %cst_125 = arith.constant 0.000000e+00 : f32
    %482 = vector.shape_cast %481 : vector<2x1x128xf32> to vector<2x1x128xf32>
    %483 = vector.broadcast %482 : vector<2x1x128xf32> to vector<2x8x128xf32>
    %484 = vector.broadcast %cst_125 : f32 to vector<2x8x128xf32>
    %485 = arith.select %480, %483, %484 : vector<2x8x128xi1>, vector<2x8x128xf32>
    %486 = arith.addf %453, %485 : vector<2x8x128xf32>
    %487 = vector.extract_strided_slice %448 {offsets = [0, 1, 0], sizes = [2, 1, 128], strides = [1, 1, 1]} : vector<2x8x128xf32> to vector<2x1x128xf32>
    %488 = vector.shape_cast %487 : vector<2x1x128xf32> to vector<2x128xf32>
    %489 = vector.extract_strided_slice %449 {offsets = [0, 1, 0], sizes = [2, 1, 128], strides = [1, 1, 1]} : vector<2x8x128xf32> to vector<2x1x128xf32>
    %490 = vector.shape_cast %489 : vector<2x1x128xf32> to vector<2x128xf32>
    %491 = vector.extract_strided_slice %450 {offsets = [0, 1, 0], sizes = [2, 1, 16], strides = [1, 1, 1]} : vector<2x8x16xf32> to vector<2x1x16xf32>
    %492 = vector.shape_cast %491 : vector<2x1x16xf32> to vector<2x16xf32>
    %493 = vector.extract_strided_slice %451 {offsets = [0, 1, 0], sizes = [2, 1, 16], strides = [1, 1, 1]} : vector<2x8x16xf32> to vector<2x1x16xf32>
    %494 = vector.shape_cast %493 : vector<2x1x16xf32> to vector<2x16xf32>
    %495 = vector.shape_cast %447 : vector<16x128xf32> to vector<1x16x128xf32>
    %496 = vector.shape_cast %488 : vector<2x128xf32> to vector<2x1x128xf32>
    %497 = vector.broadcast %495 : vector<1x16x128xf32> to vector<2x16x128xf32>
    %498 = vector.broadcast %496 : vector<2x1x128xf32> to vector<2x16x128xf32>
    %499 = arith.mulf %497, %498 : vector<2x16x128xf32>
    %500 = vector.shape_cast %492 : vector<2x16xf32> to vector<2x16x1xf32>
    %501 = arith.mulf %488, %490 : vector<2x128xf32>
    %502 = vector.shape_cast %501 : vector<2x128xf32> to vector<2x1x128xf32>
    %503 = vector.broadcast %500 : vector<2x16x1xf32> to vector<2x16x128xf32>
    %504 = vector.broadcast %502 : vector<2x1x128xf32> to vector<2x16x128xf32>
    %505 = arith.mulf %503, %504 : vector<2x16x128xf32>
    %506 = arith.mulf %499, %474 : vector<2x16x128xf32>
    %507 = arith.addf %506, %505 : vector<2x16x128xf32>
    %508 = vector.shape_cast %494 : vector<2x16xf32> to vector<2x16x1xf32>
    %509 = vector.broadcast %508 : vector<2x16x1xf32> to vector<2x16x128xf32>
    %510 = arith.mulf %507, %509 : vector<2x16x128xf32>
    %cst_126 = arith.constant dense<0.000000e+00> : vector<2x128xf32>
    %511 = vector.multi_reduction <add>, %510, %cst_126 [1] : vector<2x16x128xf32> to vector<2x128xf32>
    %c1_i32_127 = arith.constant 1 : i32
    %512 = vector.broadcast %c1_i32_127 : i32 to vector<2x8x128xi32>
    %513 = arith.cmpi eq, %367, %512 : vector<2x8x128xi32>
    %514 = vector.shape_cast %511 : vector<2x128xf32> to vector<2x1x128xf32>
    %cst_128 = arith.constant 0.000000e+00 : f32
    %515 = vector.shape_cast %514 : vector<2x1x128xf32> to vector<2x1x128xf32>
    %516 = vector.broadcast %515 : vector<2x1x128xf32> to vector<2x8x128xf32>
    %517 = vector.broadcast %cst_128 : f32 to vector<2x8x128xf32>
    %518 = arith.select %513, %516, %517 : vector<2x8x128xi1>, vector<2x8x128xf32>
    %519 = arith.addf %486, %518 : vector<2x8x128xf32>
    %520 = vector.extract_strided_slice %448 {offsets = [0, 2, 0], sizes = [2, 1, 128], strides = [1, 1, 1]} : vector<2x8x128xf32> to vector<2x1x128xf32>
    %521 = vector.shape_cast %520 : vector<2x1x128xf32> to vector<2x128xf32>
    %522 = vector.extract_strided_slice %449 {offsets = [0, 2, 0], sizes = [2, 1, 128], strides = [1, 1, 1]} : vector<2x8x128xf32> to vector<2x1x128xf32>
    %523 = vector.shape_cast %522 : vector<2x1x128xf32> to vector<2x128xf32>
    %524 = vector.extract_strided_slice %450 {offsets = [0, 2, 0], sizes = [2, 1, 16], strides = [1, 1, 1]} : vector<2x8x16xf32> to vector<2x1x16xf32>
    %525 = vector.shape_cast %524 : vector<2x1x16xf32> to vector<2x16xf32>
    %526 = vector.extract_strided_slice %451 {offsets = [0, 2, 0], sizes = [2, 1, 16], strides = [1, 1, 1]} : vector<2x8x16xf32> to vector<2x1x16xf32>
    %527 = vector.shape_cast %526 : vector<2x1x16xf32> to vector<2x16xf32>
    %528 = vector.shape_cast %447 : vector<16x128xf32> to vector<1x16x128xf32>
    %529 = vector.shape_cast %521 : vector<2x128xf32> to vector<2x1x128xf32>
    %530 = vector.broadcast %528 : vector<1x16x128xf32> to vector<2x16x128xf32>
    %531 = vector.broadcast %529 : vector<2x1x128xf32> to vector<2x16x128xf32>
    %532 = arith.mulf %530, %531 : vector<2x16x128xf32>
    %533 = vector.shape_cast %525 : vector<2x16xf32> to vector<2x16x1xf32>
    %534 = arith.mulf %521, %523 : vector<2x128xf32>
    %535 = vector.shape_cast %534 : vector<2x128xf32> to vector<2x1x128xf32>
    %536 = vector.broadcast %533 : vector<2x16x1xf32> to vector<2x16x128xf32>
    %537 = vector.broadcast %535 : vector<2x1x128xf32> to vector<2x16x128xf32>
    %538 = arith.mulf %536, %537 : vector<2x16x128xf32>
    %539 = arith.mulf %532, %507 : vector<2x16x128xf32>
    %540 = arith.addf %539, %538 : vector<2x16x128xf32>
    %541 = vector.shape_cast %527 : vector<2x16xf32> to vector<2x16x1xf32>
    %542 = vector.broadcast %541 : vector<2x16x1xf32> to vector<2x16x128xf32>
    %543 = arith.mulf %540, %542 : vector<2x16x128xf32>
    %cst_129 = arith.constant dense<0.000000e+00> : vector<2x128xf32>
    %544 = vector.multi_reduction <add>, %543, %cst_129 [1] : vector<2x16x128xf32> to vector<2x128xf32>
    %c2_i32_130 = arith.constant 2 : i32
    %545 = vector.broadcast %c2_i32_130 : i32 to vector<2x8x128xi32>
    %546 = arith.cmpi eq, %367, %545 : vector<2x8x128xi32>
    %547 = vector.shape_cast %544 : vector<2x128xf32> to vector<2x1x128xf32>
    %cst_131 = arith.constant 0.000000e+00 : f32
    %548 = vector.shape_cast %547 : vector<2x1x128xf32> to vector<2x1x128xf32>
    %549 = vector.broadcast %548 : vector<2x1x128xf32> to vector<2x8x128xf32>
    %550 = vector.broadcast %cst_131 : f32 to vector<2x8x128xf32>
    %551 = arith.select %546, %549, %550 : vector<2x8x128xi1>, vector<2x8x128xf32>
    %552 = arith.addf %519, %551 : vector<2x8x128xf32>
    %553 = vector.extract_strided_slice %448 {offsets = [0, 3, 0], sizes = [2, 1, 128], strides = [1, 1, 1]} : vector<2x8x128xf32> to vector<2x1x128xf32>
    %554 = vector.shape_cast %553 : vector<2x1x128xf32> to vector<2x128xf32>
    %555 = vector.extract_strided_slice %449 {offsets = [0, 3, 0], sizes = [2, 1, 128], strides = [1, 1, 1]} : vector<2x8x128xf32> to vector<2x1x128xf32>
    %556 = vector.shape_cast %555 : vector<2x1x128xf32> to vector<2x128xf32>
    %557 = vector.extract_strided_slice %450 {offsets = [0, 3, 0], sizes = [2, 1, 16], strides = [1, 1, 1]} : vector<2x8x16xf32> to vector<2x1x16xf32>
    %558 = vector.shape_cast %557 : vector<2x1x16xf32> to vector<2x16xf32>
    %559 = vector.extract_strided_slice %451 {offsets = [0, 3, 0], sizes = [2, 1, 16], strides = [1, 1, 1]} : vector<2x8x16xf32> to vector<2x1x16xf32>
    %560 = vector.shape_cast %559 : vector<2x1x16xf32> to vector<2x16xf32>
    %561 = vector.shape_cast %447 : vector<16x128xf32> to vector<1x16x128xf32>
    %562 = vector.shape_cast %554 : vector<2x128xf32> to vector<2x1x128xf32>
    %563 = vector.broadcast %561 : vector<1x16x128xf32> to vector<2x16x128xf32>
    %564 = vector.broadcast %562 : vector<2x1x128xf32> to vector<2x16x128xf32>
    %565 = arith.mulf %563, %564 : vector<2x16x128xf32>
    %566 = vector.shape_cast %558 : vector<2x16xf32> to vector<2x16x1xf32>
    %567 = arith.mulf %554, %556 : vector<2x128xf32>
    %568 = vector.shape_cast %567 : vector<2x128xf32> to vector<2x1x128xf32>
    %569 = vector.broadcast %566 : vector<2x16x1xf32> to vector<2x16x128xf32>
    %570 = vector.broadcast %568 : vector<2x1x128xf32> to vector<2x16x128xf32>
    %571 = arith.mulf %569, %570 : vector<2x16x128xf32>
    %572 = arith.mulf %565, %540 : vector<2x16x128xf32>
    %573 = arith.addf %572, %571 : vector<2x16x128xf32>
    %574 = vector.shape_cast %560 : vector<2x16xf32> to vector<2x16x1xf32>
    %575 = vector.broadcast %574 : vector<2x16x1xf32> to vector<2x16x128xf32>
    %576 = arith.mulf %573, %575 : vector<2x16x128xf32>
    %cst_132 = arith.constant dense<0.000000e+00> : vector<2x128xf32>
    %577 = vector.multi_reduction <add>, %576, %cst_132 [1] : vector<2x16x128xf32> to vector<2x128xf32>
    %c3_i32_133 = arith.constant 3 : i32
    %578 = vector.broadcast %c3_i32_133 : i32 to vector<2x8x128xi32>
    %579 = arith.cmpi eq, %367, %578 : vector<2x8x128xi32>
    %580 = vector.shape_cast %577 : vector<2x128xf32> to vector<2x1x128xf32>
    %cst_134 = arith.constant 0.000000e+00 : f32
    %581 = vector.shape_cast %580 : vector<2x1x128xf32> to vector<2x1x128xf32>
    %582 = vector.broadcast %581 : vector<2x1x128xf32> to vector<2x8x128xf32>
    %583 = vector.broadcast %cst_134 : f32 to vector<2x8x128xf32>
    %584 = arith.select %579, %582, %583 : vector<2x8x128xi1>, vector<2x8x128xf32>
    %585 = arith.addf %552, %584 : vector<2x8x128xf32>
    %586 = vector.extract_strided_slice %448 {offsets = [0, 4, 0], sizes = [2, 1, 128], strides = [1, 1, 1]} : vector<2x8x128xf32> to vector<2x1x128xf32>
    %587 = vector.shape_cast %586 : vector<2x1x128xf32> to vector<2x128xf32>
    %588 = vector.extract_strided_slice %449 {offsets = [0, 4, 0], sizes = [2, 1, 128], strides = [1, 1, 1]} : vector<2x8x128xf32> to vector<2x1x128xf32>
    %589 = vector.shape_cast %588 : vector<2x1x128xf32> to vector<2x128xf32>
    %590 = vector.extract_strided_slice %450 {offsets = [0, 4, 0], sizes = [2, 1, 16], strides = [1, 1, 1]} : vector<2x8x16xf32> to vector<2x1x16xf32>
    %591 = vector.shape_cast %590 : vector<2x1x16xf32> to vector<2x16xf32>
    %592 = vector.extract_strided_slice %451 {offsets = [0, 4, 0], sizes = [2, 1, 16], strides = [1, 1, 1]} : vector<2x8x16xf32> to vector<2x1x16xf32>
    %593 = vector.shape_cast %592 : vector<2x1x16xf32> to vector<2x16xf32>
    %594 = vector.shape_cast %447 : vector<16x128xf32> to vector<1x16x128xf32>
    %595 = vector.shape_cast %587 : vector<2x128xf32> to vector<2x1x128xf32>
    %596 = vector.broadcast %594 : vector<1x16x128xf32> to vector<2x16x128xf32>
    %597 = vector.broadcast %595 : vector<2x1x128xf32> to vector<2x16x128xf32>
    %598 = arith.mulf %596, %597 : vector<2x16x128xf32>
    %599 = vector.shape_cast %591 : vector<2x16xf32> to vector<2x16x1xf32>
    %600 = arith.mulf %587, %589 : vector<2x128xf32>
    %601 = vector.shape_cast %600 : vector<2x128xf32> to vector<2x1x128xf32>
    %602 = vector.broadcast %599 : vector<2x16x1xf32> to vector<2x16x128xf32>
    %603 = vector.broadcast %601 : vector<2x1x128xf32> to vector<2x16x128xf32>
    %604 = arith.mulf %602, %603 : vector<2x16x128xf32>
    %605 = arith.mulf %598, %573 : vector<2x16x128xf32>
    %606 = arith.addf %605, %604 : vector<2x16x128xf32>
    %607 = vector.shape_cast %593 : vector<2x16xf32> to vector<2x16x1xf32>
    %608 = vector.broadcast %607 : vector<2x16x1xf32> to vector<2x16x128xf32>
    %609 = arith.mulf %606, %608 : vector<2x16x128xf32>
    %cst_135 = arith.constant dense<0.000000e+00> : vector<2x128xf32>
    %610 = vector.multi_reduction <add>, %609, %cst_135 [1] : vector<2x16x128xf32> to vector<2x128xf32>
    %c4_i32_136 = arith.constant 4 : i32
    %611 = vector.broadcast %c4_i32_136 : i32 to vector<2x8x128xi32>
    %612 = arith.cmpi eq, %367, %611 : vector<2x8x128xi32>
    %613 = vector.shape_cast %610 : vector<2x128xf32> to vector<2x1x128xf32>
    %cst_137 = arith.constant 0.000000e+00 : f32
    %614 = vector.shape_cast %613 : vector<2x1x128xf32> to vector<2x1x128xf32>
    %615 = vector.broadcast %614 : vector<2x1x128xf32> to vector<2x8x128xf32>
    %616 = vector.broadcast %cst_137 : f32 to vector<2x8x128xf32>
    %617 = arith.select %612, %615, %616 : vector<2x8x128xi1>, vector<2x8x128xf32>
    %618 = arith.addf %585, %617 : vector<2x8x128xf32>
    %619 = vector.extract_strided_slice %448 {offsets = [0, 5, 0], sizes = [2, 1, 128], strides = [1, 1, 1]} : vector<2x8x128xf32> to vector<2x1x128xf32>
    %620 = vector.shape_cast %619 : vector<2x1x128xf32> to vector<2x128xf32>
    %621 = vector.extract_strided_slice %449 {offsets = [0, 5, 0], sizes = [2, 1, 128], strides = [1, 1, 1]} : vector<2x8x128xf32> to vector<2x1x128xf32>
    %622 = vector.shape_cast %621 : vector<2x1x128xf32> to vector<2x128xf32>
    %623 = vector.extract_strided_slice %450 {offsets = [0, 5, 0], sizes = [2, 1, 16], strides = [1, 1, 1]} : vector<2x8x16xf32> to vector<2x1x16xf32>
    %624 = vector.shape_cast %623 : vector<2x1x16xf32> to vector<2x16xf32>
    %625 = vector.extract_strided_slice %451 {offsets = [0, 5, 0], sizes = [2, 1, 16], strides = [1, 1, 1]} : vector<2x8x16xf32> to vector<2x1x16xf32>
    %626 = vector.shape_cast %625 : vector<2x1x16xf32> to vector<2x16xf32>
    %627 = vector.shape_cast %447 : vector<16x128xf32> to vector<1x16x128xf32>
    %628 = vector.shape_cast %620 : vector<2x128xf32> to vector<2x1x128xf32>
    %629 = vector.broadcast %627 : vector<1x16x128xf32> to vector<2x16x128xf32>
    %630 = vector.broadcast %628 : vector<2x1x128xf32> to vector<2x16x128xf32>
    %631 = arith.mulf %629, %630 : vector<2x16x128xf32>
    %632 = vector.shape_cast %624 : vector<2x16xf32> to vector<2x16x1xf32>
    %633 = arith.mulf %620, %622 : vector<2x128xf32>
    %634 = vector.shape_cast %633 : vector<2x128xf32> to vector<2x1x128xf32>
    %635 = vector.broadcast %632 : vector<2x16x1xf32> to vector<2x16x128xf32>
    %636 = vector.broadcast %634 : vector<2x1x128xf32> to vector<2x16x128xf32>
    %637 = arith.mulf %635, %636 : vector<2x16x128xf32>
    %638 = arith.mulf %631, %606 : vector<2x16x128xf32>
    %639 = arith.addf %638, %637 : vector<2x16x128xf32>
    %640 = vector.shape_cast %626 : vector<2x16xf32> to vector<2x16x1xf32>
    %641 = vector.broadcast %640 : vector<2x16x1xf32> to vector<2x16x128xf32>
    %642 = arith.mulf %639, %641 : vector<2x16x128xf32>
    %cst_138 = arith.constant dense<0.000000e+00> : vector<2x128xf32>
    %643 = vector.multi_reduction <add>, %642, %cst_138 [1] : vector<2x16x128xf32> to vector<2x128xf32>
    %c5_i32_139 = arith.constant 5 : i32
    %644 = vector.broadcast %c5_i32_139 : i32 to vector<2x8x128xi32>
    %645 = arith.cmpi eq, %367, %644 : vector<2x8x128xi32>
    %646 = vector.shape_cast %643 : vector<2x128xf32> to vector<2x1x128xf32>
    %cst_140 = arith.constant 0.000000e+00 : f32
    %647 = vector.shape_cast %646 : vector<2x1x128xf32> to vector<2x1x128xf32>
    %648 = vector.broadcast %647 : vector<2x1x128xf32> to vector<2x8x128xf32>
    %649 = vector.broadcast %cst_140 : f32 to vector<2x8x128xf32>
    %650 = arith.select %645, %648, %649 : vector<2x8x128xi1>, vector<2x8x128xf32>
    %651 = arith.addf %618, %650 : vector<2x8x128xf32>
    %652 = vector.extract_strided_slice %448 {offsets = [0, 6, 0], sizes = [2, 1, 128], strides = [1, 1, 1]} : vector<2x8x128xf32> to vector<2x1x128xf32>
    %653 = vector.shape_cast %652 : vector<2x1x128xf32> to vector<2x128xf32>
    %654 = vector.extract_strided_slice %449 {offsets = [0, 6, 0], sizes = [2, 1, 128], strides = [1, 1, 1]} : vector<2x8x128xf32> to vector<2x1x128xf32>
    %655 = vector.shape_cast %654 : vector<2x1x128xf32> to vector<2x128xf32>
    %656 = vector.extract_strided_slice %450 {offsets = [0, 6, 0], sizes = [2, 1, 16], strides = [1, 1, 1]} : vector<2x8x16xf32> to vector<2x1x16xf32>
    %657 = vector.shape_cast %656 : vector<2x1x16xf32> to vector<2x16xf32>
    %658 = vector.extract_strided_slice %451 {offsets = [0, 6, 0], sizes = [2, 1, 16], strides = [1, 1, 1]} : vector<2x8x16xf32> to vector<2x1x16xf32>
    %659 = vector.shape_cast %658 : vector<2x1x16xf32> to vector<2x16xf32>
    %660 = vector.shape_cast %447 : vector<16x128xf32> to vector<1x16x128xf32>
    %661 = vector.shape_cast %653 : vector<2x128xf32> to vector<2x1x128xf32>
    %662 = vector.broadcast %660 : vector<1x16x128xf32> to vector<2x16x128xf32>
    %663 = vector.broadcast %661 : vector<2x1x128xf32> to vector<2x16x128xf32>
    %664 = arith.mulf %662, %663 : vector<2x16x128xf32>
    %665 = vector.shape_cast %657 : vector<2x16xf32> to vector<2x16x1xf32>
    %666 = arith.mulf %653, %655 : vector<2x128xf32>
    %667 = vector.shape_cast %666 : vector<2x128xf32> to vector<2x1x128xf32>
    %668 = vector.broadcast %665 : vector<2x16x1xf32> to vector<2x16x128xf32>
    %669 = vector.broadcast %667 : vector<2x1x128xf32> to vector<2x16x128xf32>
    %670 = arith.mulf %668, %669 : vector<2x16x128xf32>
    %671 = arith.mulf %664, %639 : vector<2x16x128xf32>
    %672 = arith.addf %671, %670 : vector<2x16x128xf32>
    %673 = vector.shape_cast %659 : vector<2x16xf32> to vector<2x16x1xf32>
    %674 = vector.broadcast %673 : vector<2x16x1xf32> to vector<2x16x128xf32>
    %675 = arith.mulf %672, %674 : vector<2x16x128xf32>
    %cst_141 = arith.constant dense<0.000000e+00> : vector<2x128xf32>
    %676 = vector.multi_reduction <add>, %675, %cst_141 [1] : vector<2x16x128xf32> to vector<2x128xf32>
    %c6_i32_142 = arith.constant 6 : i32
    %677 = vector.broadcast %c6_i32_142 : i32 to vector<2x8x128xi32>
    %678 = arith.cmpi eq, %367, %677 : vector<2x8x128xi32>
    %679 = vector.shape_cast %676 : vector<2x128xf32> to vector<2x1x128xf32>
    %cst_143 = arith.constant 0.000000e+00 : f32
    %680 = vector.shape_cast %679 : vector<2x1x128xf32> to vector<2x1x128xf32>
    %681 = vector.broadcast %680 : vector<2x1x128xf32> to vector<2x8x128xf32>
    %682 = vector.broadcast %cst_143 : f32 to vector<2x8x128xf32>
    %683 = arith.select %678, %681, %682 : vector<2x8x128xi1>, vector<2x8x128xf32>
    %684 = arith.addf %651, %683 : vector<2x8x128xf32>
    %685 = vector.extract_strided_slice %448 {offsets = [0, 7, 0], sizes = [2, 1, 128], strides = [1, 1, 1]} : vector<2x8x128xf32> to vector<2x1x128xf32>
    %686 = vector.shape_cast %685 : vector<2x1x128xf32> to vector<2x128xf32>
    %687 = vector.extract_strided_slice %449 {offsets = [0, 7, 0], sizes = [2, 1, 128], strides = [1, 1, 1]} : vector<2x8x128xf32> to vector<2x1x128xf32>
    %688 = vector.shape_cast %687 : vector<2x1x128xf32> to vector<2x128xf32>
    %689 = vector.extract_strided_slice %450 {offsets = [0, 7, 0], sizes = [2, 1, 16], strides = [1, 1, 1]} : vector<2x8x16xf32> to vector<2x1x16xf32>
    %690 = vector.shape_cast %689 : vector<2x1x16xf32> to vector<2x16xf32>
    %691 = vector.extract_strided_slice %451 {offsets = [0, 7, 0], sizes = [2, 1, 16], strides = [1, 1, 1]} : vector<2x8x16xf32> to vector<2x1x16xf32>
    %692 = vector.shape_cast %691 : vector<2x1x16xf32> to vector<2x16xf32>
    %693 = vector.shape_cast %447 : vector<16x128xf32> to vector<1x16x128xf32>
    %694 = vector.shape_cast %686 : vector<2x128xf32> to vector<2x1x128xf32>
    %695 = vector.broadcast %693 : vector<1x16x128xf32> to vector<2x16x128xf32>
    %696 = vector.broadcast %694 : vector<2x1x128xf32> to vector<2x16x128xf32>
    %697 = arith.mulf %695, %696 : vector<2x16x128xf32>
    %698 = vector.shape_cast %690 : vector<2x16xf32> to vector<2x16x1xf32>
    %699 = arith.mulf %686, %688 : vector<2x128xf32>
    %700 = vector.shape_cast %699 : vector<2x128xf32> to vector<2x1x128xf32>
    %701 = vector.broadcast %698 : vector<2x16x1xf32> to vector<2x16x128xf32>
    %702 = vector.broadcast %700 : vector<2x1x128xf32> to vector<2x16x128xf32>
    %703 = arith.mulf %701, %702 : vector<2x16x128xf32>
    %704 = arith.mulf %697, %672 : vector<2x16x128xf32>
    %705 = arith.addf %704, %703 : vector<2x16x128xf32>
    %706 = vector.shape_cast %692 : vector<2x16xf32> to vector<2x16x1xf32>
    %707 = vector.broadcast %706 : vector<2x16x1xf32> to vector<2x16x128xf32>
    %708 = arith.mulf %705, %707 : vector<2x16x128xf32>
    %cst_144 = arith.constant dense<0.000000e+00> : vector<2x128xf32>
    %709 = vector.multi_reduction <add>, %708, %cst_144 [1] : vector<2x16x128xf32> to vector<2x128xf32>
    %c7_i32_145 = arith.constant 7 : i32
    %710 = vector.broadcast %c7_i32_145 : i32 to vector<2x8x128xi32>
    %711 = arith.cmpi eq, %367, %710 : vector<2x8x128xi32>
    %712 = vector.shape_cast %709 : vector<2x128xf32> to vector<2x1x128xf32>
    %cst_146 = arith.constant 0.000000e+00 : f32
    %713 = vector.shape_cast %712 : vector<2x1x128xf32> to vector<2x1x128xf32>
    %714 = vector.broadcast %713 : vector<2x1x128xf32> to vector<2x8x128xf32>
    %715 = vector.broadcast %cst_146 : f32 to vector<2x8x128xf32>
    %716 = arith.select %711, %714, %715 : vector<2x8x128xi1>, vector<2x8x128xf32>
    %717 = arith.addf %684, %716 : vector<2x8x128xf32>
    %718 = vector.shape_cast %717 : vector<2x8x128xf32> to vector<16x128xf32>
    %c0_147 = arith.constant 0 : index
    %c0_148 = arith.constant 0 : index
    %719 = vector.load %arg23[%c0_147, %c0_148] : memref<1x128xf32, #tpu.memory_space<vmem>>, vector<1x128xf32>
    %720 = vector.broadcast %719 : vector<1x128xf32> to vector<16x128xf32>
    %721 = arith.mulf %720, %424 : vector<16x128xf32>
    %722 = arith.addf %718, %721 : vector<16x128xf32>
    %723 = arith.negf %385 : vector<16x128xf32>
    %724 = math.exp %723 : vector<16x128xf32>
    %cst_149 = arith.constant 1.000000e+00 : f32
    %725 = vector.broadcast %cst_149 : f32 to vector<16x128xf32>
    %726 = arith.addf %725, %724 : vector<16x128xf32>
    %727 = arith.divf %725, %726 : vector<16x128xf32>
    %728 = arith.mulf %385, %727 : vector<16x128xf32>
    %729 = arith.mulf %722, %728 : vector<16x128xf32>
    %c0_150 = arith.constant 0 : index
    %c0_151 = arith.constant 0 : index
    %730 = vector.load %arg24[%c0_150, %c0_151] : memref<128x128xf32, #tpu.memory_space<vmem>>, vector<128x128xf32>
    %cst_152 = arith.constant dense<0.000000e+00> : vector<16x128xf32>
    %731 = tpu.matmul %729, %730, %cst_152 {dimension_numbers = #tpu.dot_dimension_numbers<[1], [0], [0], [1], [0, 0, 1, 1], [], []>} : vector<16x128xf32>, vector<128x128xf32>, vector<16x128xf32> -> vector<16x128xf32>
    %732 = arith.addf %731, %366 : vector<16x128xf32>
    %c0_153 = arith.constant 0 : index
    %c0_154 = arith.constant 0 : index
    %733 = vector.load %arg25[%c0_153, %c0_154] : memref<128x256xf32, #tpu.memory_space<vmem>>, vector<128x256xf32>
    %cst_155 = arith.constant dense<0.000000e+00> : vector<16x256xf32>
    %734 = tpu.matmul %732, %733, %cst_155 {dimension_numbers = #tpu.dot_dimension_numbers<[1], [0], [0], [1], [0, 0, 1, 1], [], []>} : vector<16x128xf32>, vector<128x256xf32>, vector<16x256xf32> -> vector<16x256xf32>
    %c0_156 = arith.constant 0 : index
    %c0_157 = arith.constant 0 : index
    %735 = vector.load %arg26[%c0_156, %c0_157] : memref<16x256xf32, #tpu.memory_space<vmem>>, vector<16x256xf32>
    tpu.vector_store %arg26[%c0_156, %c0_157], %734 {strides = array<i32>} : memref<16x256xf32, #tpu.memory_space<vmem>>, vector<16x256xf32>,
    return
  }
}

</mosaic_0001>

<llo_original>
// kernel: model_forward.1
$region0: #{model_forward.1}
  #allocation0 [shape = 'u32[]', space=smem, size = 0x4, offset = 0x4, fixed_abs, tag = 'smem constant byte address 0x4 - core index']
  #allocation1 [shape = 'u32[72,128]{1,0:T(1,128)}', space=vmem, size = 0x9000, scoped, tag = 'internal scratch']
  %s0 = inlined_call_operand.vmem [shape: f32[16,128], index: 0, kind: input, shape index: {}]
  %s1 = inlined_call_operand.hbm [shape: f32[1,128], index: 1, kind: input, shape index: {}]
  %s2 = inlined_call_operand.vmem [shape: f32[128,128], index: 2, kind: input, shape index: {}]
  %s3 = inlined_call_operand.vmem [shape: f32[128,128], index: 3, kind: input, shape index: {}]
  %s4 = inlined_call_operand.hbm [shape: f32[4,128], index: 4, kind: input, shape index: {}]
  %s5 = inlined_call_operand.hbm [shape: f32[1,128], index: 5, kind: input, shape index: {}]
  %s6 = inlined_call_operand.vmem [shape: f32[128,16], index: 6, kind: input, shape index: {}]
  %s7 = inlined_call_operand.vmem [shape: f32[128,16], index: 7, kind: input, shape index: {}]
  %s8 = inlined_call_operand.vmem [shape: f32[128,8], index: 8, kind: input, shape index: {}]
  %s9 = inlined_call_operand.vmem [shape: f32[8,128], index: 9, kind: input, shape index: {}]
  %s10 = inlined_call_operand.vmem [shape: f32[16,128], index: 10, kind: input, shape index: {}]
  %s11 = inlined_call_operand.hbm [shape: f32[1,128], index: 11, kind: input, shape index: {}]
  %s12 = inlined_call_operand.vmem [shape: f32[128,128], index: 12, kind: input, shape index: {}]
  %s13 = inlined_call_operand.vmem [shape: f32[1,128], index: 13, kind: input, shape index: {}]
  %s14 = inlined_call_operand.vmem [shape: f32[128,128], index: 14, kind: input, shape index: {}]
  %s15 = inlined_call_operand.vmem [shape: f32[128,128], index: 15, kind: input, shape index: {}]
  %s16 = inlined_call_operand.hbm [shape: f32[4,128], index: 16, kind: input, shape index: {}]
  %s17 = inlined_call_operand.hbm [shape: f32[1,128], index: 17, kind: input, shape index: {}]
  %s18 = inlined_call_operand.vmem [shape: f32[128,16], index: 18, kind: input, shape index: {}]
  %s19 = inlined_call_operand.vmem [shape: f32[128,16], index: 19, kind: input, shape index: {}]
  %s20 = inlined_call_operand.vmem [shape: f32[128,8], index: 20, kind: input, shape index: {}]
  %s21 = inlined_call_operand.vmem [shape: f32[8,128], index: 21, kind: input, shape index: {}]
  %s22 = inlined_call_operand.vmem [shape: f32[16,128], index: 22, kind: input, shape index: {}]
  %s23 = inlined_call_operand.hbm [shape: f32[1,128], index: 23, kind: input, shape index: {}]
  %s24 = inlined_call_operand.hbm [shape: f32[128,128], index: 24, kind: input, shape index: {}]
  %s25 = inlined_call_operand.vmem [shape: f32[128,256], index: 25, kind: input, shape index: {}]
  %s26 = inlined_call_operand.hbm [shape: f32[16,256], index: 26, kind: output, shape index: {}]
  %s27 = sld [smem:[#allocation0]]
  $region146: #{model_forward.1} parent=0
    _
  %s29 = ssub.s32 1, %s27
  %s30 = scalar_select 0, %s29, %s27
  $region1: #{model_forward.1} parent=0
    #allocation2 [shape = 'u8[512]{0}', space=vmem, size = 0x400, scoped, tag = 'input window, operand 1, single buffered']
    #allocation3 [shape = 's32[1]{0}', space=sflag, size = 0x4, scoped, tag = 'scoped memory for model_forward.1']
    #allocation4 [shape = 's32[1]{0}', space=sflag, size = 0x4, scoped, tag = 'scoped memory for model_forward.1']
    #allocation5 [shape = 'u8[2048]{0}', space=vmem, size = 0x800, scoped, tag = 'input window, operand 4, single buffered']
    #allocation6 [shape = 's32[1]{0}', space=sflag, size = 0x4, scoped, tag = 'scoped memory for model_forward.1']
    #allocation7 [shape = 'u8[512]{0}', space=vmem, size = 0x400, scoped, tag = 'input window, operand 5, single buffered']
    #allocation8 [shape = 'u8[512]{0}', space=vmem, size = 0x400, scoped, tag = 'input window, operand 11, single buffered']
    #allocation9 [shape = 's32[1]{0}', space=sflag, size = 0x4, scoped, tag = 'scoped memory for model_forward.1']
    #allocation10 [shape = 'u8[2048]{0}', space=vmem, size = 0x800, scoped, tag = 'input window, operand 16, single buffered']
    #allocation11 [shape = 'u8[512]{0}', space=vmem, size = 0x400, scoped, tag = 'input window, operand 17, single buffered']
    #allocation12 [shape = 's32[1]{0}', space=sflag, size = 0x4, scoped, tag = 'scoped memory for model_forward.1']
    #allocation13 [shape = 'u8[512]{0}', space=vmem, size = 0x400, scoped, tag = 'input window, operand 23, single buffered']
    #allocation14 [shape = 'u8[65536]{0}', space=vmem, size = 0x10000, scoped, tag = 'input window, operand 24, single buffered']
    #allocation15 [shape = 's32[1]{0}', space=sflag, size = 0x4, scoped, tag = 'scoped memory for model_forward.1']
    #allocation16 [shape = 'u8[16384]{0}', space=vmem, size = 0x4000, scoped, tag = 'output window, operand 0, single buffered']
    %31 = vsyncpa [#allocation3], 0
    %32 = vsyncpa [#allocation6], 0
    %33 = vsyncpa [#allocation9], 0
    %34 = vsyncpa [#allocation12], 0
    %35 = vsyncpa [#allocation15], 0
    %36 = vsyncpa [#allocation4], 0
    // Predicated region
    $region2: #{model_forward.1} parent=1 // pred_check
      _
    $region3: #{model_forward.1} parent=1 // pred_check_branch
      %38 = sbr.rel (0) target = $region5
    $region4: #{model_forward.1} parent=1 // pred_region
      _
    $region5: #{model_forward.1} parent=1 // pred_fallthru
      _
    // Predicated region
    $region6: #{model_forward.1} parent=1 // pred_check
      _
    $region7: #{model_forward.1} parent=1 // pred_check_branch
      %40 = sbr.rel (0) target = $region9
    $region8: #{model_forward.1} parent=1 // pred_region
      %42 = vsyncadd [#allocation3], 0
      %s44 = sshll.u32 %s1, 4
      %s45 = int_to_ptr.hbm [resolvable:$true] %s44
      %s46 = sshll.u32 [#allocation2], 4
      %s47 = int_to_ptr.vmem [resolvable:$true] %s46
      %49 = dma.hbm_to_vmem [thread:$0]  %s45, 16, %s47, [#allocation3]
    $region9: #{model_forward.1} parent=1 // pred_fallthru
      _
    // Predicated region
    $region10: #{model_forward.1} parent=1 // pred_check
      _
    $region11: #{model_forward.1} parent=1 // pred_check_branch
      %51 = sbr.rel (0) target = $region13
    $region12: #{model_forward.1} parent=1 // pred_region
      _
    $region13: #{model_forward.1} parent=1 // pred_fallthru
      _
    // Predicated region
    $region14: #{model_forward.1} parent=1 // pred_check
      _
    $region15: #{model_forward.1} parent=1 // pred_check_branch
      %53 = sbr.rel (0) target = $region17
    $region16: #{model_forward.1} parent=1 // pred_region
      _
    $region17: #{model_forward.1} parent=1 // pred_fallthru
      _
    // Predicated region
    $region18: #{model_forward.1} parent=1 // pred_check
      _
    $region19: #{model_forward.1} parent=1 // pred_check_branch
      %55 = sbr.rel (0) target = $region21
    $region20: #{model_forward.1} parent=1 // pred_region
      %57 = vsyncadd [#allocation6], 0
      %s59 = sshll.u32 %s4, 4
      %s60 = int_to_ptr.hbm [resolvable:$true] %s59
      %s61 = sshll.u32 [#allocation5], 4
      %s62 = int_to_ptr.vmem [resolvable:$true] %s61
      %64 = dma.hbm_to_vmem [thread:$0]  %s60, 64, %s62, [#allocation6]
    $region21: #{model_forward.1} parent=1 // pred_fallthru
      _
    // Predicated region
    $region22: #{model_forward.1} parent=1 // pred_check
      _
    $region23: #{model_forward.1} parent=1 // pred_check_branch
      %66 = sbr.rel (0) target = $region25
    $region24: #{model_forward.1} parent=1 // pred_region
      %68 = vsyncadd [#allocation6], 0
      %s70 = sshll.u32 %s5, 4
      %s71 = int_to_ptr.hbm [resolvable:$true] %s70
      %s72 = sshll.u32 [#allocation7], 4
      %s73 = int_to_ptr.vmem [resolvable:$true] %s72
      %75 = dma.hbm_to_vmem [thread:$0]  %s71, 16, %s73, [#allocation6]
    $region25: #{model_forward.1} parent=1 // pred_fallthru
      _
    // Predicated region
    $region26: #{model_forward.1} parent=1 // pred_check
      _
    $region27: #{model_forward.1} parent=1 // pred_check_branch
      %77 = sbr.rel (0) target = $region29
    $region28: #{model_forward.1} parent=1 // pred_region
      _
    $region29: #{model_forward.1} parent=1 // pred_fallthru
      _
    // Predicated region
    $region30: #{model_forward.1} parent=1 // pred_check
      _
    $region31: #{model_forward.1} parent=1 // pred_check_branch
      %79 = sbr.rel (0) target = $region33
    $region32: #{model_forward.1} parent=1 // pred_region
      _
    $region33: #{model_forward.1} parent=1 // pred_fallthru
      _
    // Predicated region
    $region34: #{model_forward.1} parent=1 // pred_check
      _
    $region35: #{model_forward.1} parent=1 // pred_check_branch
      %81 = sbr.rel (0) target = $region37
    $region36: #{model_forward.1} parent=1 // pred_region
      _
    $region37: #{model_forward.1} parent=1 // pred_fallthru
      _
    // Predicated region
    $region38: #{model_forward.1} parent=1 // pred_check
      _
    $region39: #{model_forward.1} parent=1 // pred_check_branch
      %83 = sbr.rel (0) target = $region41
    $region40: #{model_forward.1} parent=1 // pred_region
      _
    $region41: #{model_forward.1} parent=1 // pred_fallthru
      _
    // Predicated region
    $region42: #{model_forward.1} parent=1 // pred_check
      _
    $region43: #{model_forward.1} parent=1 // pred_check_branch
      %85 = sbr.rel (0) target = $region45
    $region44: #{model_forward.1} parent=1 // pred_region
      _
    $region45: #{model_forward.1} parent=1 // pred_fallthru
      _
    // Predicated region
    $region46: #{model_forward.1} parent=1 // pred_check
      _
    $region47: #{model_forward.1} parent=1 // pred_check_branch
      %87 = sbr.rel (0) target = $region49
    $region48: #{model_forward.1} parent=1 // pred_region
      %89 = vsyncadd [#allocation9], 0
      %s91 = sshll.u32 %s11, 4
      %s92 = int_to_ptr.hbm [resolvable:$true] %s91
      %s93 = sshll.u32 [#allocation8], 4
      %s94 = int_to_ptr.vmem [resolvable:$true] %s93
      %96 = dma.hbm_to_vmem [thread:$0]  %s92, 16, %s94, [#allocation9]
    $region49: #{model_forward.1} parent=1 // pred_fallthru
      _
    // Predicated region
    $region50: #{model_forward.1} parent=1 // pred_check
      _
    $region51: #{model_forward.1} parent=1 // pred_check_branch
      %98 = sbr.rel (0) target = $region53
    $region52: #{model_forward.1} parent=1 // pred_region
      _
    $region53: #{model_forward.1} parent=1 // pred_fallthru
      _
    // Predicated region
    $region54: #{model_forward.1} parent=1 // pred_check
      _
    $region55: #{model_forward.1} parent=1 // pred_check_branch
      %100 = sbr.rel (0) target = $region57
    $region56: #{model_forward.1} parent=1 // pred_region
      _
    $region57: #{model_forward.1} parent=1 // pred_fallthru
      _
    // Predicated region
    $region58: #{model_forward.1} parent=1 // pred_check
      _
    $region59: #{model_forward.1} parent=1 // pred_check_branch
      %102 = sbr.rel (0) target = $region61
    $region60: #{model_forward.1} parent=1 // pred_region
      _
    $region61: #{model_forward.1} parent=1 // pred_fallthru
      _
    // Predicated region
    $region62: #{model_forward.1} parent=1 // pred_check
      _
    $region63: #{model_forward.1} parent=1 // pred_check_branch
      %104 = sbr.rel (0) target = $region65
    $region64: #{model_forward.1} parent=1 // pred_region
      _
    $region65: #{model_forward.1} parent=1 // pred_fallthru
      _
    // Predicated region
    $region66: #{model_forward.1} parent=1 // pred_check
      _
    $region67: #{model_forward.1} parent=1 // pred_check_branch
      %106 = sbr.rel (0) target = $region69
    $region68: #{model_forward.1} parent=1 // pred_region
      %108 = vsyncadd [#allocation9], 0
      %s110 = sshll.u32 %s16, 4
      %s111 = int_to_ptr.hbm [resolvable:$true] %s110
      %s112 = sshll.u32 [#allocation10], 4
      %s113 = int_to_ptr.vmem [resolvable:$true] %s112
      %115 = dma.hbm_to_vmem [thread:$0]  %s111, 64, %s113, [#allocation9]
    $region69: #{model_forward.1} parent=1 // pred_fallthru
      _
    // Predicated region
    $region70: #{model_forward.1} parent=1 // pred_check
      _
    $region71: #{model_forward.1} parent=1 // pred_check_branch
      %117 = sbr.rel (0) target = $region73
    $region72: #{model_forward.1} parent=1 // pred_region
      %119 = vsyncadd [#allocation12], 0
      %s121 = sshll.u32 %s17, 4
      %s122 = int_to_ptr.hbm [resolvable:$true] %s121
      %s123 = sshll.u32 [#allocation11], 4
      %s124 = int_to_ptr.vmem [resolvable:$true] %s123
      %126 = dma.hbm_to_vmem [thread:$0]  %s122, 16, %s124, [#allocation12]
    $region73: #{model_forward.1} parent=1 // pred_fallthru
      _
    // Predicated region
    $region74: #{model_forward.1} parent=1 // pred_check
      _
    $region75: #{model_forward.1} parent=1 // pred_check_branch
      %128 = sbr.rel (0) target = $region77
    $region76: #{model_forward.1} parent=1 // pred_region
      _
    $region77: #{model_forward.1} parent=1 // pred_fallthru
      _
    // Predicated region
    $region78: #{model_forward.1} parent=1 // pred_check
      _
    $region79: #{model_forward.1} parent=1 // pred_check_branch
      %130 = sbr.rel (0) target = $region81
    $region80: #{model_forward.1} parent=1 // pred_region
      _
    $region81: #{model_forward.1} parent=1 // pred_fallthru
      _
    // Predicated region
    $region82: #{model_forward.1} parent=1 // pred_check
      _
    $region83: #{model_forward.1} parent=1 // pred_check_branch
      %132 = sbr.rel (0) target = $region85
    $region84: #{model_forward.1} parent=1 // pred_region
      _
    $region85: #{model_forward.1} parent=1 // pred_fallthru
      _
    // Predicated region
    $region86: #{model_forward.1} parent=1 // pred_check
      _
    $region87: #{model_forward.1} parent=1 // pred_check_branch
      %134 = sbr.rel (0) target = $region89
    $region88: #{model_forward.1} parent=1 // pred_region
      _
    $region89: #{model_forward.1} parent=1 // pred_fallthru
      _
    // Predicated region
    $region90: #{model_forward.1} parent=1 // pred_check
      _
    $region91: #{model_forward.1} parent=1 // pred_check_branch
      %136 = sbr.rel (0) target = $region93
    $region92: #{model_forward.1} parent=1 // pred_region
      _
    $region93: #{model_forward.1} parent=1 // pred_fallthru
      _
    // Predicated region
    $region94: #{model_forward.1} parent=1 // pred_check
      _
    $region95: #{model_forward.1} parent=1 // pred_check_branch
      %138 = sbr.rel (0) target = $region97
    $region96: #{model_forward.1} parent=1 // pred_region
      %140 = vsyncadd [#allocation12], 0
      %s142 = sshll.u32 %s23, 4
      %s143 = int_to_ptr.hbm [resolvable:$true] %s142
      %s144 = sshll.u32 [#allocation13], 4
      %s145 = int_to_ptr.vmem [resolvable:$true] %s144
      %147 = dma.hbm_to_vmem [thread:$0]  %s143, 16, %s145, [#allocation12]
    $region97: #{model_forward.1} parent=1 // pred_fallthru
      _
    // Predicated region
    $region98: #{model_forward.1} parent=1 // pred_check
      _
    $region99: #{model_forward.1} parent=1 // pred_check_branch
      %149 = sbr.rel (0) target = $region101
    $region100: #{model_forward.1} parent=1 // pred_region
      %151 = vsyncadd [#allocation15], 0
      %s152 = sshll.u32 %s24, 4
      %s153 = int_to_ptr.hbm [resolvable:$true] %s152
      %s154 = sshll.u32 [#allocation14], 4
      %s155 = int_to_ptr.vmem [resolvable:$true] %s154
      %160 = dma.hbm_to_vmem [thread:$0]  %s153, 2048, %s155, [#allocation15], 128, 128, 8
    $region101: #{model_forward.1} parent=1 // pred_fallthru
      _
    // Predicated region
    $region102: #{model_forward.1} parent=1 // pred_check
      _
    $region103: #{model_forward.1} parent=1 // pred_check_branch
      %162 = sbr.rel (0) target = $region105
    $region104: #{model_forward.1} parent=1 // pred_region
      _
    $region105: #{model_forward.1} parent=1 // pred_fallthru
      _
    // Predicated region
    $region106: #{model_forward.1} parent=1 // pred_check
      _
    $region107: #{model_forward.1} parent=1 // pred_check_branch
      %164 = sbr.rel (0) target = $region109
    $region108: #{model_forward.1} parent=1 // pred_region
      %166 = dma.done [#allocation3], 16
    $region109: #{model_forward.1} parent=1 // pred_fallthru
      _
    // Predicated region
    $region110: #{model_forward.1} parent=1 // pred_check
      _
    $region111: #{model_forward.1} parent=1 // pred_check_branch
      %168 = sbr.rel (0) target = $region113
    $region112: #{model_forward.1} parent=1 // pred_region
      %170 = dma.done [#allocation6], 64
    $region113: #{model_forward.1} parent=1 // pred_fallthru
      _
    // Predicated region
    $region114: #{model_forward.1} parent=1 // pred_check
      _
    $region115: #{model_forward.1} parent=1 // pred_check_branch
      %172 = sbr.rel (0) target = $region117
    $region116: #{model_forward.1} parent=1 // pred_region
      %174 = dma.done [#allocation6], 16
    $region117: #{model_forward.1} parent=1 // pred_fallthru
      _
    // Predicated region
    $region118: #{model_forward.1} parent=1 // pred_check
      _
    $region119: #{model_forward.1} parent=1 // pred_check_branch
      %176 = sbr.rel (0) target = $region121
    $region120: #{model_forward.1} parent=1 // pred_region
      %178 = dma.done [#allocation9], 16
    $region121: #{model_forward.1} parent=1 // pred_fallthru
      _
    // Predicated region
    $region122: #{model_forward.1} parent=1 // pred_check
      _
    $region123: #{model_forward.1} parent=1 // pred_check_branch
      %180 = sbr.rel (0) target = $region125
    $region124: #{model_forward.1} parent=1 // pred_region
      %182 = dma.done [#allocation9], 64
    $region125: #{model_forward.1} parent=1 // pred_fallthru
      _
    // Predicated region
    $region126: #{model_forward.1} parent=1 // pred_check
      _
    $region127: #{model_forward.1} parent=1 // pred_check_branch
      %184 = sbr.rel (0) target = $region129
    $region128: #{model_forward.1} parent=1 // pred_region
      %186 = dma.done [#allocation12], 16
    $region129: #{model_forward.1} parent=1 // pred_fallthru
      _
    // Predicated region
    $region130: #{model_forward.1} parent=1 // pred_check
      _
    $region131: #{model_forward.1} parent=1 // pred_check_branch
      %188 = sbr.rel (0) target = $region133
    $region132: #{model_forward.1} parent=1 // pred_region
      %190 = dma.done [#allocation12], 16
    $region133: #{model_forward.1} parent=1 // pred_fallthru
      _
    // Predicated region
    $region134: #{model_forward.1} parent=1 // pred_check
      _
    $region135: #{model_forward.1} parent=1 // pred_check_branch
      %192 = sbr.rel (0) target = $region137
    $region136: #{model_forward.1} parent=1 // pred_region
      %194 = dma.done [#allocation15], 2048
    $region137: #{model_forward.1} parent=1 // pred_fallthru
      _
    %v195 = vld [vmem:[%s0] sm:$0xff]
    %v196 = vld [vmem:[%s0 + $0x8] sm:$0xff]
    %v197 = vlaneseq
    %v198 = vshrl.u32 %v197, 7
    %v199 = vmul.f32 %v195, %v195
    %v200 = vmul.f32 %v196, %v196
    %201 = vadd.xlane.f32.xlu0 %v199
    %v202 = vpop.xlane.xlu0 %201
    %203 = vadd.xlane.f32.xlu0 %v200
    %v204 = vpop.xlane.xlu0 %203
    %v205 = vrsqrt.pop %v202
    %v206 = vmul.f32 %v205, %v202
    %v207 = vmul.f32 %v206, %v205
    %v208 = vmul.f32 0.5, %v207
    %v209 = vsub.f32 1.5, %v208
    %v210 = vmul.f32 %v205, %v209
    %v211 = vmul.f32 %v202, %v210
    %vm212 = vcmp.eq.f32.partialorder %v202, inf
    %v213 = vsel %vm212, %v202, %v211
    %vm214 = vcmp.eq.f32.partialorder %v202, 0.0
    %v215 = vand.u32 %v202, 2147483648
    %v216 = vsel %vm214, %v215, %v213
    %v217 = vrsqrt.pop %v204
    %v218 = vmul.f32 %v217, %v204
    %v219 = vmul.f32 %v218, %v217
    %v220 = vmul.f32 0.5, %v219
    %v221 = vsub.f32 1.5, %v220
    %v222 = vmul.f32 %v217, %v221
    %v223 = vmul.f32 %v204, %v222
    %vm224 = vcmp.eq.f32.partialorder %v204, inf
    %v225 = vsel %vm224, %v204, %v223
    %vm226 = vcmp.eq.f32.partialorder %v204, 0.0
    %v227 = vand.u32 %v204, 2147483648
    %v228 = vsel %vm226, %v227, %v225
    %v229 = vadd.f32 %v216, 1e-05
    %v230 = vadd.f32 %v228, 1e-05
    %v231 = vrcp.pop %v229
    %v232 = vmul.f32 %v229, %v231
    %v233 = vsub.f32 1.0, %v232
    %v234 = vmul.f32 %v231, %v233
    %v235 = vadd.f32 %v231, %v234
    %vm236 = vweird.f32 %v229
    %vm237 = vweird.f32 %v231
    %vm238 = vmor %vm236, %vm237
    %v239 = vsel %vm238, %v231, %v235
    %v240 = vand.u32 2147483647, %v229
    %vm241 = vcmp.eq.f32.partialorder %v240, 8.507059e+37
    %v242 = vand.u32 %v229, 2147483648
    %v243 = vor.u32 1.1754944e-38, %v242
    %v244 = vsel %vm241, %v243, %v239
    %v245 = vmul.f32 11.313708, %v244
    %v246 = vrcp.pop %v230
    %v247 = vmul.f32 %v230, %v246
    %v248 = vsub.f32 1.0, %v247
    %v249 = vmul.f32 %v246, %v248
    %v250 = vadd.f32 %v246, %v249
    %vm251 = vweird.f32 %v230
    %vm252 = vweird.f32 %v246
    %vm253 = vmor %vm251, %vm252
    %v254 = vsel %vm253, %v246, %v250
    %v255 = vand.u32 2147483647, %v230
    %vm256 = vcmp.eq.f32.partialorder %v255, 8.507059e+37
    %v257 = vand.u32 %v230, 2147483648
    %v258 = vor.u32 1.1754944e-38, %v257
    %v259 = vsel %vm256, %v258, %v254
    %v260 = vmul.f32 11.313708, %v259
    %v261 = vmul.f32 %v195, %v245
    %v262 = vmul.f32 %v196, %v260
    %v263 = vld [vmem:[#allocation2] sm:$0x1]
    %v265 = vperm.slane %v263, 0
    %v267 = vmul.f32 %v261, %v265
    %v268 = vmul.f32 %v262, %v265
    %v269 = vld [vmem:[%s2] sm:$0xff]
    %v270 = vld [vmem:[%s2 + $0x8] sm:$0xff]
    %v271 = vld [vmem:[%s2 + $0x10] sm:$0xff]
    %v272 = vld [vmem:[%s2 + $0x18] sm:$0xff]
    %v273 = vld [vmem:[%s2 + $0x20] sm:$0xff]
    %v274 = vld [vmem:[%s2 + $0x28] sm:$0xff]
    %v275 = vld [vmem:[%s2 + $0x30] sm:$0xff]
    %v276 = vld [vmem:[%s2 + $0x38] sm:$0xff]
    %v277 = vld [vmem:[%s2 + $0x40] sm:$0xff]
    %v278 = vld [vmem:[%s2 + $0x48] sm:$0xff]
    %v279 = vld [vmem:[%s2 + $0x50] sm:$0xff]
    %v280 = vld [vmem:[%s2 + $0x58] sm:$0xff]
    %v281 = vld [vmem:[%s2 + $0x60] sm:$0xff]
    %v282 = vld [vmem:[%s2 + $0x68] sm:$0xff]
    %v283 = vld [vmem:[%s2 + $0x70] sm:$0xff]
    %v284 = vld [vmem:[%s2 + $0x78] sm:$0xff]
    %285 = vmatpush.msra.mxu0 %v284
    %286 = vmatpush.msra.mxu0 %v283
    %287 = vmatpush.msra.mxu0 %v282
    %288 = vmatpush.msra.mxu0 %v281
    %289 = vmatpush.msra.mxu0 %v280
    %290 = vmatpush.msra.mxu0 %v279
    %291 = vmatpush.msra.mxu0 %v278
    %292 = vmatpush.msra.mxu0 %v277
    %293 = vmatpush.msra.mxu0 %v276
    %294 = vmatpush.msra.mxu0 %v275
    %295 = vmatpush.msra.mxu0 %v274
    %296 = vmatpush.msra.mxu0 %v273
    %297 = vmatpush.msra.mxu0 %v272
    %298 = vmatpush.msra.mxu0 %v271
    %299 = vmatpush.msra.mxu0 %v270
    %300 = vmatpush.msra.mxu0 %v269
    %301 = vmatmul.f32.gmra.mxu0 %v267
    %v302 = vpop.f32.mrf.mxu0
    %v303 = vadd.f32 0.0, %v302
    %304 = vmatmul.f32.gmra.mxu0 %v268
    %v305 = vpop.f32.mrf.mxu0
    %v306 = vadd.f32 0.0, %v305
    %307 = vdwg.mxu0
    %v308 = vld [vmem:[%s3] sm:$0xff]
    %v309 = vld [vmem:[%s3 + $0x8] sm:$0xff]
    %v310 = vld [vmem:[%s3 + $0x10] sm:$0xff]
    %v311 = vld [vmem:[%s3 + $0x18] sm:$0xff]
    %v312 = vld [vmem:[%s3 + $0x20] sm:$0xff]
    %v313 = vld [vmem:[%s3 + $0x28] sm:$0xff]
    %v314 = vld [vmem:[%s3 + $0x30] sm:$0xff]
    %v315 = vld [vmem:[%s3 + $0x38] sm:$0xff]
    %v316 = vld [vmem:[%s3 + $0x40] sm:$0xff]
    %v317 = vld [vmem:[%s3 + $0x48] sm:$0xff]
    %v318 = vld [vmem:[%s3 + $0x50] sm:$0xff]
    %v319 = vld [vmem:[%s3 + $0x58] sm:$0xff]
    %v320 = vld [vmem:[%s3 + $0x60] sm:$0xff]
    %v321 = vld [vmem:[%s3 + $0x68] sm:$0xff]
    %v322 = vld [vmem:[%s3 + $0x70] sm:$0xff]
    %v323 = vld [vmem:[%s3 + $0x78] sm:$0xff]
    %324 = vmatpush.msra.mxu0 %v323
    %325 = vmatpush.msra.mxu0 %v322
    %326 = vmatpush.msra.mxu0 %v321
    %327 = vmatpush.msra.mxu0 %v320
    %328 = vmatpush.msra.mxu0 %v319
    %329 = vmatpush.msra.mxu0 %v318
    %330 = vmatpush.msra.mxu0 %v317
    %331 = vmatpush.msra.mxu0 %v316
    %332 = vmatpush.msra.mxu0 %v315
    %333 = vmatpush.msra.mxu0 %v314
    %334 = vmatpush.msra.mxu0 %v313
    %335 = vmatpush.msra.mxu0 %v312
    %336 = vmatpush.msra.mxu0 %v311
    %337 = vmatpush.msra.mxu0 %v310
    %338 = vmatpush.msra.mxu0 %v309
    %339 = vmatpush.msra.mxu0 %v308
    %340 = vmatmul.f32.gmra.mxu0 %v267
    %v341 = vpop.f32.mrf.mxu0
    %v342 = vadd.f32 0.0, %v341
    %343 = vmatmul.f32.gmra.mxu0 %v268
    %v344 = vpop.f32.mrf.mxu0
    %v345 = vadd.f32 0.0, %v344
    %346 = vdwg.mxu0
    %v347 = vld [vmem:[#allocation7] sm:$0x1]
    %v348 = vld [vmem:[#allocation5 + $0x3] sm:$0x1]
    %v349 = vperm.slane %v348, 0
    %v350 = vmul.f32 %v303, %v349
    %v351 = vmul.f32 %v306, %v349
    %v353 = vperm.slane %v347, 0
    %v355 = vadd.f32 %v353, %v350
    %v356 = vadd.f32 %v353, %v351
    %v357 = vrot.slane %v303, 7
    %v358 = vrot.slane %v306, 7
    %vm359 = vcmp.lt.s32.totalorder %v198, 1
    %v360 = vsel %vm359, %v357, %v358
    %v361 = vsel %vm359, %v358, %v357
    %vm362 = vcmp.ge.s32.totalorder %v198, 1
    %v363 = vsel %vm362, %v361, 0.0
    %v364 = vsel %vm362, %v360, 0.0
    %v365 = vld [vmem:[#allocation5 + $0x2] sm:$0x1]
    %v366 = vperm.slane %v365, 0
    %v367 = vmul.f32 %v363, %v366
    %v368 = vmul.f32 %v364, %v366
    %v369 = vadd.f32 %v355, %v367
    %v370 = vadd.f32 %v356, %v368
    %v371 = vrot.slane %v303, 6
    %v372 = vrot.slane %v306, 6
    %vm373 = vcmp.lt.s32.totalorder %v198, 2
    %v374 = vsel %vm373, %v371, %v372
    %v375 = vsel %vm373, %v372, %v371
    %vm376 = vcmp.ge.s32.totalorder %v198, 2
    %v377 = vsel %vm376, %v375, 0.0
    %v378 = vsel %vm376, %v374, 0.0
    %v379 = vld [vmem:[#allocation5 + $0x1] sm:$0x1]
    %v380 = vperm.slane %v379, 0
    %v381 = vmul.f32 %v377, %v380
    %v382 = vmul.f32 %v378, %v380
    %v383 = vadd.f32 %v369, %v381
    %v384 = vadd.f32 %v370, %v382
    %v385 = vrot.slane %v303, 5
    %v386 = vrot.slane %v306, 5
    %vm387 = vcmp.lt.s32.totalorder %v198, 3
    %v388 = vsel %vm387, %v385, %v386
    %v389 = vsel %vm387, %v386, %v385
    %vm390 = vcmp.ge.s32.totalorder %v198, 3
    %v391 = vsel %vm390, %v389, 0.0
    %v392 = vsel %vm390, %v388, 0.0
    %v393 = vld [vmem:[#allocation5] sm:$0x1]
    %v394 = vperm.slane %v393, 0
    %v395 = vmul.f32 %v391, %v394
    %v396 = vmul.f32 %v392, %v394
    %v397 = vadd.f32 %v383, %v395
    %v398 = vadd.f32 %v384, %v396
    %v399 = vxor.u32 %v397, 2147483648
    %v400 = vxor.u32 %v398, 2147483648
    %v401 = vmul.f32 %v399, 1.442695
    %v402 = vpow.pop %v401
    %v403 = vmul.f32 %v400, 1.442695
    %v404 = vpow.pop %v403
    %v405 = vadd.f32 %v402, 1.0
    %v406 = vadd.f32 %v404, 1.0
    %v407 = vrcp.pop %v405
    %v408 = vmul.f32 %v405, %v407
    %v409 = vsub.f32 1.0, %v408
    %v410 = vmul.f32 %v407, %v409
    %v411 = vadd.f32 %v407, %v410
    %vm412 = vweird.f32 %v405
    %vm413 = vweird.f32 %v407
    %vm414 = vmor %vm412, %vm413
    %v415 = vsel %vm414, %v407, %v411
    %v416 = vand.u32 2147483647, %v405
    %vm417 = vcmp.eq.f32.partialorder %v416, 8.507059e+37
    %v418 = vand.u32 %v405, 2147483648
    %v419 = vor.u32 1.1754944e-38, %v418
    %v420 = vsel %vm417, %v419, %v415
    %v421 = vmul.f32 1.0, %v420
    %v422 = vrcp.pop %v406
    %v423 = vmul.f32 %v406, %v422
    %v424 = vsub.f32 1.0, %v423
    %v425 = vmul.f32 %v422, %v424
    %v426 = vadd.f32 %v422, %v425
    %vm427 = vweird.f32 %v406
    %vm428 = vweird.f32 %v422
    %vm429 = vmor %vm427, %vm428
    %v430 = vsel %vm429, %v422, %v426
    %v431 = vand.u32 2147483647, %v406
    %vm432 = vcmp.eq.f32.partialorder %v431, 8.507059e+37
    %v433 = vand.u32 %v406, 2147483648
    %v434 = vor.u32 1.1754944e-38, %v433
    %v435 = vsel %vm432, %v434, %v430
    %v436 = vmul.f32 1.0, %v435
    %v437 = vmul.f32 %v397, %v421
    %v438 = vmul.f32 %v398, %v436
    %v439 = vld [vmem:[%s6] sm:$0xff]
    %v440 = vld [vmem:[%s6 + $0x8] sm:$0xff]
    %v441 = vld [vmem:[%s6 + $0x10] sm:$0xff]
    %v442 = vld [vmem:[%s6 + $0x18] sm:$0xff]
    %v443 = vld [vmem:[%s6 + $0x20] sm:$0xff]
    %v444 = vld [vmem:[%s6 + $0x28] sm:$0xff]
    %v445 = vld [vmem:[%s6 + $0x30] sm:$0xff]
    %v446 = vld [vmem:[%s6 + $0x38] sm:$0xff]
    %v447 = vld [vmem:[%s6 + $0x40] sm:$0xff]
    %v448 = vld [vmem:[%s6 + $0x48] sm:$0xff]
    %v449 = vld [vmem:[%s6 + $0x50] sm:$0xff]
    %v450 = vld [vmem:[%s6 + $0x58] sm:$0xff]
    %v451 = vld [vmem:[%s6 + $0x60] sm:$0xff]
    %v452 = vld [vmem:[%s6 + $0x68] sm:$0xff]
    %v453 = vld [vmem:[%s6 + $0x70] sm:$0xff]
    %v454 = vld [vmem:[%s6 + $0x78] sm:$0xff]
    %455 = vmatpush.msra.mxu0 %v454
    %456 = vmatpush.msra.mxu0 %v453
    %457 = vmatpush.msra.mxu0 %v452
    %458 = vmatpush.msra.mxu0 %v451
    %459 = vmatpush.msra.mxu0 %v450
    %460 = vmatpush.msra.mxu0 %v449
    %461 = vmatpush.msra.mxu0 %v448
    %462 = vmatpush.msra.mxu0 %v447
    %463 = vmatpush.msra.mxu0 %v446
    %464 = vmatpush.msra.mxu0 %v445
    %465 = vmatpush.msra.mxu0 %v444
    %466 = vmatpush.msra.mxu0 %v443
    %467 = vmatpush.msra.mxu0 %v442
    %468 = vmatpush.msra.mxu0 %v441
    %469 = vmatpush.msra.mxu0 %v440
    %470 = vmatpush.msra.mxu0 %v439
    %471 = vmatmul.f32.gmra.mxu0 %v437
    %v472 = vpop.f32.mrf.mxu0
    %v473 = vadd.f32 0.0, %v472
    %474 = vmatmul.f32.gmra.mxu0 %v438
    %v475 = vpop.f32.mrf.mxu0
    %v476 = vadd.f32 0.0, %v475
    %477 = vdwg.mxu0
    %v478 = vld [vmem:[%s7] sm:$0xff]
    %v479 = vld [vmem:[%s7 + $0x8] sm:$0xff]
    %v480 = vld [vmem:[%s7 + $0x10] sm:$0xff]
    %v481 = vld [vmem:[%s7 + $0x18] sm:$0xff]
    %v482 = vld [vmem:[%s7 + $0x20] sm:$0xff]
    %v483 = vld [vmem:[%s7 + $0x28] sm:$0xff]
    %v484 = vld [vmem:[%s7 + $0x30] sm:$0xff]
    %v485 = vld [vmem:[%s7 + $0x38] sm:$0xff]
    %v486 = vld [vmem:[%s7 + $0x40] sm:$0xff]
    %v487 = vld [vmem:[%s7 + $0x48] sm:$0xff]
    %v488 = vld [vmem:[%s7 + $0x50] sm:$0xff]
    %v489 = vld [vmem:[%s7 + $0x58] sm:$0xff]
    %v490 = vld [vmem:[%s7 + $0x60] sm:$0xff]
    %v491 = vld [vmem:[%s7 + $0x68] sm:$0xff]
    %v492 = vld [vmem:[%s7 + $0x70] sm:$0xff]
    %v493 = vld [vmem:[%s7 + $0x78] sm:$0xff]
    %494 = vmatpush.msra.mxu0 %v493
    %495 = vmatpush.msra.mxu0 %v492
    %496 = vmatpush.msra.mxu0 %v491
    %497 = vmatpush.msra.mxu0 %v490
    %498 = vmatpush.msra.mxu0 %v489
    %499 = vmatpush.msra.mxu0 %v488
    %500 = vmatpush.msra.mxu0 %v487
    %501 = vmatpush.msra.mxu0 %v486
    %502 = vmatpush.msra.mxu0 %v485
    %503 = vmatpush.msra.mxu0 %v484
    %504 = vmatpush.msra.mxu0 %v483
    %505 = vmatpush.msra.mxu0 %v482
    %506 = vmatpush.msra.mxu0 %v481
    %507 = vmatpush.msra.mxu0 %v480
    %508 = vmatpush.msra.mxu0 %v479
    %509 = vmatpush.msra.mxu0 %v478
    %510 = vmatmul.f32.gmra.mxu0 %v437
    %v511 = vpop.f32.mrf.mxu0
    %v512 = vadd.f32 0.0, %v511
    %513 = vmatmul.f32.gmra.mxu0 %v438
    %v514 = vpop.f32.mrf.mxu0
    %v515 = vadd.f32 0.0, %v514
    %516 = vdwg.mxu0
    %v517 = vld [vmem:[%s8] sm:$0xff]
    %v518 = vld [vmem:[%s8 + $0x8] sm:$0xff]
    %v519 = vld [vmem:[%s8 + $0x10] sm:$0xff]
    %v520 = vld [vmem:[%s8 + $0x18] sm:$0xff]
    %v521 = vld [vmem:[%s8 + $0x20] sm:$0xff]
    %v522 = vld [vmem:[%s8 + $0x28] sm:$0xff]
    %v523 = vld [vmem:[%s8 + $0x30] sm:$0xff]
    %v524 = vld [vmem:[%s8 + $0x38] sm:$0xff]
    %v525 = vld [vmem:[%s8 + $0x40] sm:$0xff]
    %v526 = vld [vmem:[%s8 + $0x48] sm:$0xff]
    %v527 = vld [vmem:[%s8 + $0x50] sm:$0xff]
    %v528 = vld [vmem:[%s8 + $0x58] sm:$0xff]
    %v529 = vld [vmem:[%s8 + $0x60] sm:$0xff]
    %v530 = vld [vmem:[%s8 + $0x68] sm:$0xff]
    %v531 = vld [vmem:[%s8 + $0x70] sm:$0xff]
    %v532 = vld [vmem:[%s8 + $0x78] sm:$0xff]
    %533 = vmatpush.msra.mxu0 %v532
    %534 = vmatpush.msra.mxu0 %v531
    %535 = vmatpush.msra.mxu0 %v530
    %536 = vmatpush.msra.mxu0 %v529
    %537 = vmatpush.msra.mxu0 %v528
    %538 = vmatpush.msra.mxu0 %v527
    %539 = vmatpush.msra.mxu0 %v526
    %540 = vmatpush.msra.mxu0 %v525
    %541 = vmatpush.msra.mxu0 %v524
    %542 = vmatpush.msra.mxu0 %v523
    %543 = vmatpush.msra.mxu0 %v522
    %544 = vmatpush.msra.mxu0 %v521
    %545 = vmatpush.msra.mxu0 %v520
    %546 = vmatpush.msra.mxu0 %v519
    %547 = vmatpush.msra.mxu0 %v518
    %548 = vmatpush.msra.mxu0 %v517
    %549 = vmatmul.f32.gmra.mxu0 %v437
    %v550 = vpop.f32.mrf.mxu0
    %v551 = vadd.f32 0.0, %v550
    %552 = vmatmul.f32.gmra.mxu0 %v438
    %v553 = vpop.f32.mrf.mxu0
    %v554 = vadd.f32 0.0, %v553
    %555 = vdwg.mxu0
    %v556 = vld [vmem:[%s9] sm:$0xff]
    %vm557 = vcmask 64512
    %v559 = vsel %vm557, %v551, 0
    %v562 = vsel %vm557, %v554, 0
    %564 = vmatpush.msra.mxu0 0.0
    %565 = vmatpush.msra.mxu0 0.0
    %566 = vmatpush.msra.mxu0 0.0
    %567 = vmatpush.msra.mxu0 0.0
    %568 = vmatpush.msra.mxu0 0.0
    %569 = vmatpush.msra.mxu0 0.0
    %570 = vmatpush.msra.mxu0 0.0
    %571 = vmatpush.msra.mxu0 0.0
    %572 = vmatpush.msra.mxu0 0.0
    %573 = vmatpush.msra.mxu0 0.0
    %574 = vmatpush.msra.mxu0 0.0
    %575 = vmatpush.msra.mxu0 0.0
    %576 = vmatpush.msra.mxu0 0.0
    %577 = vmatpush.msra.mxu0 0.0
    %578 = vmatpush.msra.mxu0 0.0
    %579 = vmatpush.msra.mxu0 %v556
    %580 = vmatmul.f32.gmra.mxu0 %v559
    %v581 = vpop.f32.mrf.mxu0
    %v582 = vadd.f32 0.0, %v581
    %583 = vmatmul.f32.gmra.mxu0 %v562
    %v584 = vpop.f32.mrf.mxu0
    %v585 = vadd.f32 0.0, %v584
    %586 = vdwg.mxu0
    %v587 = vld [vmem:[#allocation8] sm:$0x1]
    %v589 = vperm.slane %v587, 0
    %v591 = vadd.f32 %v589, %v582
    %v592 = vadd.f32 %v589, %v585
    %v593 = vmax.f32 %v591, 0.0
    %v594 = vmax.f32 %v592, 0.0
    %v595 = vand.u32 2147483647, %v591
    %v596 = vand.u32 2147483647, %v592
    %v597 = vsub.f32 0.0, %v595
    %v598 = vsub.f32 0.0, %v596
    %v599 = vmul.f32 %v597, 1.442695
    %v600 = vpow.pop %v599
    %v601 = vmul.f32 %v598, 1.442695
    %v602 = vpow.pop %v601
    %v603 = vadd.f32 %v600, 1.0
    %v604 = vlog2.pop %v603
    %v605 = vmul.f32 %v604, 0.6931472
    %v606 = vmul.f32 -0.5, %v600
    %v607 = vadd.f32 %v606, 1.0
    %v608 = vmul.f32 %v607, %v600
    %v609 = vand.u32 2147483647, %v600
    %vm610 = vcmp.lt.f32.partialorder %v609, 0.0004427343
    %v611 = vsel %vm610, %v608, %v605
    %v612 = vadd.f32 %v602, 1.0
    %v613 = vlog2.pop %v612
    %v614 = vmul.f32 %v613, 0.6931472
    %v615 = vmul.f32 -0.5, %v602
    %v616 = vadd.f32 %v615, 1.0
    %v617 = vmul.f32 %v616, %v602
    %v618 = vand.u32 2147483647, %v602
    %vm619 = vcmp.lt.f32.partialorder %v618, 0.0004427343
    %v620 = vsel %vm619, %v617, %v614
    %v621 = vadd.f32 %v593, %v611
    %v622 = vadd.f32 %v594, %v620
    %v623 = vld [vmem:[%s10] sm:$0xff]
    %v624 = vld [vmem:[%s10 + $0x8] sm:$0xff]
    %v625 = vsub.f32 0.0, %v623
    %v626 = vsub.f32 0.0, %v624
    %v627 = vmul.f32 %v625, 1.442695
    %v628 = vpow.pop %v627
    %v629 = vmul.f32 %v626, 1.442695
    %v630 = vpow.pop %v629
    %v631 = vperm.slane %v621, 0
    %v632 = vperm.slane %v622, 0
    %v633 = vmul.f32 %v628, %v631
    %v634 = vmul.f32 %v630, %v631
    %v635 = vmul.f32 %v628, %v632
    %v636 = vmul.f32 %v630, %v632
    %v637 = vperm.slane %v473, 0
    %v638 = vlaneseq
    %v639 = vshrl.u32 %v638, 7
    %641 = vset.pattern.permute.xlu0 %v639
    %642 = vperm.xlu0 %641, %v637
    %v643 = vpop.permute.xlu0 %642
    %v644 = vlaneseq
    %v645 = vshrl.u32 %v644, 7
    %v646 = vadd.s32 %v645, 8
    %647 = vset.pattern.permute.xlu0 %v646
    %648 = vperm.xlu0 %647, %v637
    %v649 = vpop.permute.xlu0 %648
    %v650 = vperm.slane %v476, 0
    %v651 = vlaneseq
    %v652 = vshrl.u32 %v651, 7
    %654 = vset.pattern.permute.xlu0 %v652
    %655 = vperm.xlu0 %654, %v650
    %v656 = vpop.permute.xlu0 %655
    %v657 = vlaneseq
    %v658 = vshrl.u32 %v657, 7
    %v659 = vadd.s32 %v658, 8
    %660 = vset.pattern.permute.xlu0 %v659
    %661 = vperm.xlu0 %660, %v650
    %v662 = vpop.permute.xlu0 %661
    %v663 = vmul.f32 %v621, %v437
    %v664 = vmul.f32 %v622, %v438
    %v665 = vperm.slane %v663, 0
    %v666 = vperm.slane %v664, 0
    %v667 = vmul.f32 %v643, %v665
    %v668 = vmul.f32 %v649, %v665
    %v669 = vmul.f32 %v656, %v666
    %v670 = vmul.f32 %v662, %v666
    %v671 = vmul.f32 %v633, 0.0
    %v672 = vmul.f32 %v634, 0.0
    %v673 = vmul.f32 %v635, 0.0
    %v674 = vmul.f32 %v636, 0.0
    %v675 = vadd.f32 %v671, %v667
    %v676 = vadd.f32 %v672, %v668
    %v677 = vadd.f32 %v673, %v669
    %v678 = vadd.f32 %v674, %v670
    %v679 = vperm.slane %v512, 0
    %v680 = vlaneseq
    %v681 = vshrl.u32 %v680, 7
    %683 = vset.pattern.permute.xlu0 %v681
    %684 = vperm.xlu0 %683, %v679
    %v685 = vpop.permute.xlu0 %684
    %v686 = vlaneseq
    %v687 = vshrl.u32 %v686, 7
    %v688 = vadd.s32 %v687, 8
    %689 = vset.pattern.permute.xlu0 %v688
    %690 = vperm.xlu0 %689, %v679
    %v691 = vpop.permute.xlu0 %690
    %v692 = vperm.slane %v515, 0
    %v693 = vlaneseq
    %v694 = vshrl.u32 %v693, 7
    %696 = vset.pattern.permute.xlu0 %v694
    %697 = vperm.xlu0 %696, %v692
    %v698 = vpop.permute.xlu0 %697
    %v699 = vlaneseq
    %v700 = vshrl.u32 %v699, 7
    %v701 = vadd.s32 %v700, 8
    %702 = vset.pattern.permute.xlu0 %v701
    %703 = vperm.xlu0 %702, %v692
    %v704 = vpop.permute.xlu0 %703
    %v705 = vmul.f32 %v675, %v685
    %v706 = vmul.f32 %v676, %v691
    %v707 = vmul.f32 %v677, %v698
    %v708 = vmul.f32 %v678, %v704
    %v709 = vadd.f32 %v705, %v706
    %v710 = vrot.slane %v709, 4
    %v711 = vadd.f32 %v709, %v710
    %v712 = vrot.slane %v711, 2
    %v713 = vadd.f32 %v711, %v712
    %v714 = vrot.slane %v713, 1
    %v715 = vadd.f32 %v713, %v714
    %v716 = vadd.f32 %v707, %v708
    %v717 = vrot.slane %v716, 4
    %v718 = vadd.f32 %v716, %v717
    %v719 = vrot.slane %v718, 2
    %v720 = vadd.f32 %v718, %v719
    %v721 = vrot.slane %v720, 1
    %v722 = vadd.f32 %v720, %v721
    %vm723 = vcmp.eq.s32.totalorder %v198, 0
    %v724 = vsel %vm723, %v715, 0.0
    %v725 = vsel %vm723, %v722, 0.0
    %v726 = vadd.f32 %v724, 0.0
    %v727 = vadd.f32 %v725, 0.0
    %v728 = vperm.slane %v621, 1
    %v729 = vperm.slane %v622, 1
    %v730 = vmul.f32 %v628, %v728
    %v731 = vmul.f32 %v630, %v728
    %v732 = vmul.f32 %v628, %v729
    %v733 = vmul.f32 %v630, %v729
    %v734 = vperm.slane %v473, 1
    %v735 = vlaneseq
    %v736 = vshrl.u32 %v735, 7
    %738 = vset.pattern.permute.xlu0 %v736
    %739 = vperm.xlu0 %738, %v734
    %v740 = vpop.permute.xlu0 %739
    %v741 = vlaneseq
    %v742 = vshrl.u32 %v741, 7
    %v743 = vadd.s32 %v742, 8
    %744 = vset.pattern.permute.xlu0 %v743
    %745 = vperm.xlu0 %744, %v734
    %v746 = vpop.permute.xlu0 %745
    %v747 = vperm.slane %v476, 1
    %v748 = vlaneseq
    %v749 = vshrl.u32 %v748, 7
    %751 = vset.pattern.permute.xlu0 %v749
    %752 = vperm.xlu0 %751, %v747
    %v753 = vpop.permute.xlu0 %752
    %v754 = vlaneseq
    %v755 = vshrl.u32 %v754, 7
    %v756 = vadd.s32 %v755, 8
    %757 = vset.pattern.permute.xlu0 %v756
    %758 = vperm.xlu0 %757, %v747
    %v759 = vpop.permute.xlu0 %758
    %v760 = vperm.slane %v663, 1
    %v761 = vperm.slane %v664, 1
    %v762 = vmul.f32 %v740, %v760
    %v763 = vmul.f32 %v746, %v760
    %v764 = vmul.f32 %v753, %v761
    %v765 = vmul.f32 %v759, %v761
    %v766 = vmul.f32 %v730, %v675
    %v767 = vmul.f32 %v731, %v676
    %v768 = vmul.f32 %v732, %v677
    %v769 = vmul.f32 %v733, %v678
    %v770 = vadd.f32 %v766, %v762
    %v771 = vadd.f32 %v767, %v763
    %v772 = vadd.f32 %v768, %v764
    %v773 = vadd.f32 %v769, %v765
    %v774 = vperm.slane %v512, 1
    %v775 = vlaneseq
    %v776 = vshrl.u32 %v775, 7
    %778 = vset.pattern.permute.xlu0 %v776
    %779 = vperm.xlu0 %778, %v774
    %v780 = vpop.permute.xlu0 %779
    %v781 = vlaneseq
    %v782 = vshrl.u32 %v781, 7
    %v783 = vadd.s32 %v782, 8
    %784 = vset.pattern.permute.xlu0 %v783
    %785 = vperm.xlu0 %784, %v774
    %v786 = vpop.permute.xlu0 %785
    %v787 = vperm.slane %v515, 1
    %v788 = vlaneseq
    %v789 = vshrl.u32 %v788, 7
    %791 = vset.pattern.permute.xlu0 %v789
    %792 = vperm.xlu0 %791, %v787
    %v793 = vpop.permute.xlu0 %792
    %v794 = vlaneseq
    %v795 = vshrl.u32 %v794, 7
    %v796 = vadd.s32 %v795, 8
    %797 = vset.pattern.permute.xlu0 %v796
    %798 = vperm.xlu0 %797, %v787
    %v799 = vpop.permute.xlu0 %798
    %v800 = vmul.f32 %v770, %v780
    %v801 = vmul.f32 %v771, %v786
    %v802 = vmul.f32 %v772, %v793
    %v803 = vmul.f32 %v773, %v799
    %v804 = vadd.f32 %v800, %v801
    %v805 = vrot.slane %v804, 4
    %v806 = vadd.f32 %v804, %v805
    %v807 = vrot.slane %v806, 2
    %v808 = vadd.f32 %v806, %v807
    %v809 = vrot.slane %v808, 1
    %v810 = vadd.f32 %v808, %v809
    %v811 = vadd.f32 %v802, %v803
    %v812 = vrot.slane %v811, 4
    %v813 = vadd.f32 %v811, %v812
    %v814 = vrot.slane %v813, 2
    %v815 = vadd.f32 %v813, %v814
    %v816 = vrot.slane %v815, 1
    %v817 = vadd.f32 %v815, %v816
    %vm818 = vcmp.eq.s32.totalorder %v198, 1
    %v819 = vsel %vm818, %v810, 0.0
    %v820 = vsel %vm818, %v817, 0.0
    %v821 = vadd.f32 %v726, %v819
    %v822 = vadd.f32 %v727, %v820
    %v823 = vperm.slane %v621, 2
    %v824 = vperm.slane %v622, 2
    %v825 = vmul.f32 %v628, %v823
    %v826 = vmul.f32 %v630, %v823
    %v827 = vmul.f32 %v628, %v824
    %v828 = vmul.f32 %v630, %v824
    %v829 = vperm.slane %v473, 2
    %v830 = vlaneseq
    %v831 = vshrl.u32 %v830, 7
    %833 = vset.pattern.permute.xlu0 %v831
    %834 = vperm.xlu0 %833, %v829
    %v835 = vpop.permute.xlu0 %834
    %v836 = vlaneseq
    %v837 = vshrl.u32 %v836, 7
    %v838 = vadd.s32 %v837, 8
    %839 = vset.pattern.permute.xlu0 %v838
    %840 = vperm.xlu0 %839, %v829
    %v841 = vpop.permute.xlu0 %840
    %v842 = vperm.slane %v476, 2
    %v843 = vlaneseq
    %v844 = vshrl.u32 %v843, 7
    %846 = vset.pattern.permute.xlu0 %v844
    %847 = vperm.xlu0 %846, %v842
    %v848 = vpop.permute.xlu0 %847
    %v849 = vlaneseq
    %v850 = vshrl.u32 %v849, 7
    %v851 = vadd.s32 %v850, 8
    %852 = vset.pattern.permute.xlu0 %v851
    %853 = vperm.xlu0 %852, %v842
    %v854 = vpop.permute.xlu0 %853
    %v855 = vperm.slane %v663, 2
    %v856 = vperm.slane %v664, 2
    %v857 = vmul.f32 %v835, %v855
    %v858 = vmul.f32 %v841, %v855
    %v859 = vmul.f32 %v848, %v856
    %v860 = vmul.f32 %v854, %v856
    %v861 = vmul.f32 %v825, %v770
    %v862 = vmul.f32 %v826, %v771
    %v863 = vmul.f32 %v827, %v772
    %v864 = vmul.f32 %v828, %v773
    %v865 = vadd.f32 %v861, %v857
    %v866 = vadd.f32 %v862, %v858
    %v867 = vadd.f32 %v863, %v859
    %v868 = vadd.f32 %v864, %v860
    %v869 = vperm.slane %v512, 2
    %v870 = vlaneseq
    %v871 = vshrl.u32 %v870, 7
    %873 = vset.pattern.permute.xlu0 %v871
    %874 = vperm.xlu0 %873, %v869
    %v875 = vpop.permute.xlu0 %874
    %v876 = vlaneseq
    %v877 = vshrl.u32 %v876, 7
    %v878 = vadd.s32 %v877, 8
    %879 = vset.pattern.permute.xlu0 %v878
    %880 = vperm.xlu0 %879, %v869
    %v881 = vpop.permute.xlu0 %880
    %v882 = vperm.slane %v515, 2
    %v883 = vlaneseq
    %v884 = vshrl.u32 %v883, 7
    %886 = vset.pattern.permute.xlu0 %v884
    %887 = vperm.xlu0 %886, %v882
    %v888 = vpop.permute.xlu0 %887
    %v889 = vlaneseq
    %v890 = vshrl.u32 %v889, 7
    %v891 = vadd.s32 %v890, 8
    %892 = vset.pattern.permute.xlu0 %v891
    %893 = vperm.xlu0 %892, %v882
    %v894 = vpop.permute.xlu0 %893
    %v895 = vmul.f32 %v865, %v875
    %v896 = vmul.f32 %v866, %v881
    %v897 = vmul.f32 %v867, %v888
    %v898 = vmul.f32 %v868, %v894
    %v899 = vadd.f32 %v895, %v896
    %v900 = vrot.slane %v899, 4
    %v901 = vadd.f32 %v899, %v900
    %v902 = vrot.slane %v901, 2
    %v903 = vadd.f32 %v901, %v902
    %v904 = vrot.slane %v903, 1
    %v905 = vadd.f32 %v903, %v904
    %v906 = vadd.f32 %v897, %v898
    %v907 = vrot.slane %v906, 4
    %v908 = vadd.f32 %v906, %v907
    %v909 = vrot.slane %v908, 2
    %v910 = vadd.f32 %v908, %v909
    %v911 = vrot.slane %v910, 1
    %v912 = vadd.f32 %v910, %v911
    %vm913 = vcmp.eq.s32.totalorder %v198, 2
    %v914 = vsel %vm913, %v905, 0.0
    %v915 = vsel %vm913, %v912, 0.0
    %v916 = vadd.f32 %v821, %v914
    %v917 = vadd.f32 %v822, %v915
    %v918 = vperm.slane %v621, 3
    %v919 = vperm.slane %v622, 3
    %v920 = vmul.f32 %v628, %v918
    %v921 = vmul.f32 %v630, %v918
    %v922 = vmul.f32 %v628, %v919
    %v923 = vmul.f32 %v630, %v919
    %v924 = vperm.slane %v473, 3
    %v925 = vlaneseq
    %v926 = vshrl.u32 %v925, 7
    %928 = vset.pattern.permute.xlu0 %v926
    %929 = vperm.xlu0 %928, %v924
    %v930 = vpop.permute.xlu0 %929
    %v931 = vlaneseq
    %v932 = vshrl.u32 %v931, 7
    %v933 = vadd.s32 %v932, 8
    %934 = vset.pattern.permute.xlu0 %v933
    %935 = vperm.xlu0 %934, %v924
    %v936 = vpop.permute.xlu0 %935
    %v937 = vperm.slane %v476, 3
    %v938 = vlaneseq
    %v939 = vshrl.u32 %v938, 7
    %941 = vset.pattern.permute.xlu0 %v939
    %942 = vperm.xlu0 %941, %v937
    %v943 = vpop.permute.xlu0 %942
    %v944 = vlaneseq
    %v945 = vshrl.u32 %v944, 7
    %v946 = vadd.s32 %v945, 8
    %947 = vset.pattern.permute.xlu0 %v946
    %948 = vperm.xlu0 %947, %v937
    %v949 = vpop.permute.xlu0 %948
    %v950 = vperm.slane %v663, 3
    %v951 = vperm.slane %v664, 3
    %v952 = vmul.f32 %v930, %v950
    %v953 = vmul.f32 %v936, %v950
    %v954 = vmul.f32 %v943, %v951
    %v955 = vmul.f32 %v949, %v951
    %v956 = vmul.f32 %v920, %v865
    %v957 = vmul.f32 %v921, %v866
    %v958 = vmul.f32 %v922, %v867
    %v959 = vmul.f32 %v923, %v868
    %v960 = vadd.f32 %v956, %v952
    %v961 = vadd.f32 %v957, %v953
    %v962 = vadd.f32 %v958, %v954
    %v963 = vadd.f32 %v959, %v955
    %v964 = vperm.slane %v512, 3
    %v965 = vlaneseq
    %v966 = vshrl.u32 %v965, 7
    %968 = vset.pattern.permute.xlu0 %v966
    %969 = vperm.xlu0 %968, %v964
    %v970 = vpop.permute.xlu0 %969
    %v971 = vlaneseq
    %v972 = vshrl.u32 %v971, 7
    %v973 = vadd.s32 %v972, 8
    %974 = vset.pattern.permute.xlu0 %v973
    %975 = vperm.xlu0 %974, %v964
    %v976 = vpop.permute.xlu0 %975
    %v977 = vperm.slane %v515, 3
    %v978 = vlaneseq
    %v979 = vshrl.u32 %v978, 7
    %981 = vset.pattern.permute.xlu0 %v979
    %982 = vperm.xlu0 %981, %v977
    %v983 = vpop.permute.xlu0 %982
    %v984 = vlaneseq
    %v985 = vshrl.u32 %v984, 7
    %v986 = vadd.s32 %v985, 8
    %987 = vset.pattern.permute.xlu0 %v986
    %988 = vperm.xlu0 %987, %v977
    %v989 = vpop.permute.xlu0 %988
    %v990 = vmul.f32 %v960, %v970
    %v991 = vmul.f32 %v961, %v976
    %v992 = vmul.f32 %v962, %v983
    %v993 = vmul.f32 %v963, %v989
    %v994 = vadd.f32 %v990, %v991
    %v995 = vrot.slane %v994, 4
    %v996 = vadd.f32 %v994, %v995
    %v997 = vrot.slane %v996, 2
    %v998 = vadd.f32 %v996, %v997
    %v999 = vrot.slane %v998, 1
    %v1000 = vadd.f32 %v998, %v999
    %v1001 = vadd.f32 %v992, %v993
    %v1002 = vrot.slane %v1001, 4
    %v1003 = vadd.f32 %v1001, %v1002
    %v1004 = vrot.slane %v1003, 2
    %v1005 = vadd.f32 %v1003, %v1004
    %v1006 = vrot.slane %v1005, 1
    %v1007 = vadd.f32 %v1005, %v1006
    %vm1008 = vcmp.eq.s32.totalorder %v198, 3
    %v1009 = vsel %vm1008, %v1000, 0.0
    %v1010 = vsel %vm1008, %v1007, 0.0
    %v1011 = vadd.f32 %v916, %v1009
    %v1012 = vadd.f32 %v917, %v1010
    %v1013 = vperm.slane %v621, 4
    %v1014 = vperm.slane %v622, 4
    %v1015 = vmul.f32 %v628, %v1013
    %v1016 = vmul.f32 %v630, %v1013
    %v1017 = vmul.f32 %v628, %v1014
    %v1018 = vmul.f32 %v630, %v1014
    %v1019 = vperm.slane %v473, 4
    %v1020 = vlaneseq
    %v1021 = vshrl.u32 %v1020, 7
    %1023 = vset.pattern.permute.xlu0 %v1021
    %1024 = vperm.xlu0 %1023, %v1019
    %v1025 = vpop.permute.xlu0 %1024
    %v1026 = vlaneseq
    %v1027 = vshrl.u32 %v1026, 7
    %v1028 = vadd.s32 %v1027, 8
    %1029 = vset.pattern.permute.xlu0 %v1028
    %1030 = vperm.xlu0 %1029, %v1019
    %v1031 = vpop.permute.xlu0 %1030
    %v1032 = vperm.slane %v476, 4
    %v1033 = vlaneseq
    %v1034 = vshrl.u32 %v1033, 7
    %1036 = vset.pattern.permute.xlu0 %v1034
    %1037 = vperm.xlu0 %1036, %v1032
    %v1038 = vpop.permute.xlu0 %1037
    %v1039 = vlaneseq
    %v1040 = vshrl.u32 %v1039, 7
    %v1041 = vadd.s32 %v1040, 8
    %1042 = vset.pattern.permute.xlu0 %v1041
    %1043 = vperm.xlu0 %1042, %v1032
    %v1044 = vpop.permute.xlu0 %1043
    %v1045 = vperm.slane %v663, 4
    %v1046 = vperm.slane %v664, 4
    %v1047 = vmul.f32 %v1025, %v1045
    %v1048 = vmul.f32 %v1031, %v1045
    %v1049 = vmul.f32 %v1038, %v1046
    %v1050 = vmul.f32 %v1044, %v1046
    %v1051 = vmul.f32 %v1015, %v960
    %v1052 = vmul.f32 %v1016, %v961
    %v1053 = vmul.f32 %v1017, %v962
    %v1054 = vmul.f32 %v1018, %v963
    %v1055 = vadd.f32 %v1051, %v1047
    %v1056 = vadd.f32 %v1052, %v1048
    %v1057 = vadd.f32 %v1053, %v1049
    %v1058 = vadd.f32 %v1054, %v1050
    %v1059 = vperm.slane %v512, 4
    %v1060 = vlaneseq
    %v1061 = vshrl.u32 %v1060, 7
    %1063 = vset.pattern.permute.xlu0 %v1061
    %1064 = vperm.xlu0 %1063, %v1059
    %v1065 = vpop.permute.xlu0 %1064
    %v1066 = vlaneseq
    %v1067 = vshrl.u32 %v1066, 7
    %v1068 = vadd.s32 %v1067, 8
    %1069 = vset.pattern.permute.xlu0 %v1068
    %1070 = vperm.xlu0 %1069, %v1059
    %v1071 = vpop.permute.xlu0 %1070
    %v1072 = vperm.slane %v515, 4
    %v1073 = vlaneseq
    %v1074 = vshrl.u32 %v1073, 7
    %1076 = vset.pattern.permute.xlu0 %v1074
    %1077 = vperm.xlu0 %1076, %v1072
    %v1078 = vpop.permute.xlu0 %1077
    %v1079 = vlaneseq
    %v1080 = vshrl.u32 %v1079, 7
    %v1081 = vadd.s32 %v1080, 8
    %1082 = vset.pattern.permute.xlu0 %v1081
    %1083 = vperm.xlu0 %1082, %v1072
    %v1084 = vpop.permute.xlu0 %1083
    %v1085 = vmul.f32 %v1055, %v1065
    %v1086 = vmul.f32 %v1056, %v1071
    %v1087 = vmul.f32 %v1057, %v1078
    %v1088 = vmul.f32 %v1058, %v1084
    %v1089 = vadd.f32 %v1085, %v1086
    %v1090 = vrot.slane %v1089, 4
    %v1091 = vadd.f32 %v1089, %v1090
    %v1092 = vrot.slane %v1091, 2
    %v1093 = vadd.f32 %v1091, %v1092
    %v1094 = vrot.slane %v1093, 1
    %v1095 = vadd.f32 %v1093, %v1094
    %v1096 = vadd.f32 %v1087, %v1088
    %v1097 = vrot.slane %v1096, 4
    %v1098 = vadd.f32 %v1096, %v1097
    %v1099 = vrot.slane %v1098, 2
    %v1100 = vadd.f32 %v1098, %v1099
    %v1101 = vrot.slane %v1100, 1
    %v1102 = vadd.f32 %v1100, %v1101
    %vm1103 = vcmp.eq.s32.totalorder %v198, 4
    %v1104 = vsel %vm1103, %v1095, 0.0
    %v1105 = vsel %vm1103, %v1102, 0.0
    %v1106 = vadd.f32 %v1011, %v1104
    %v1107 = vadd.f32 %v1012, %v1105
    %v1108 = vperm.slane %v621, 5
    %v1109 = vperm.slane %v622, 5
    %v1110 = vmul.f32 %v628, %v1108
    %v1111 = vmul.f32 %v630, %v1108
    %v1112 = vmul.f32 %v628, %v1109
    %v1113 = vmul.f32 %v630, %v1109
    %v1114 = vperm.slane %v473, 5
    %v1115 = vlaneseq
    %v1116 = vshrl.u32 %v1115, 7
    %1118 = vset.pattern.permute.xlu0 %v1116
    %1119 = vperm.xlu0 %1118, %v1114
    %v1120 = vpop.permute.xlu0 %1119
    %v1121 = vlaneseq
    %v1122 = vshrl.u32 %v1121, 7
    %v1123 = vadd.s32 %v1122, 8
    %1124 = vset.pattern.permute.xlu0 %v1123
    %1125 = vperm.xlu0 %1124, %v1114
    %v1126 = vpop.permute.xlu0 %1125
    %v1127 = vperm.slane %v476, 5
    %v1128 = vlaneseq
    %v1129 = vshrl.u32 %v1128, 7
    %1131 = vset.pattern.permute.xlu0 %v1129
    %1132 = vperm.xlu0 %1131, %v1127
    %v1133 = vpop.permute.xlu0 %1132
    %v1134 = vlaneseq
    %v1135 = vshrl.u32 %v1134, 7
    %v1136 = vadd.s32 %v1135, 8
    %1137 = vset.pattern.permute.xlu0 %v1136
    %1138 = vperm.xlu0 %1137, %v1127
    %v1139 = vpop.permute.xlu0 %1138
    %v1140 = vperm.slane %v663, 5
    %v1141 = vperm.slane %v664, 5
    %v1142 = vmul.f32 %v1120, %v1140
    %v1143 = vmul.f32 %v1126, %v1140
    %v1144 = vmul.f32 %v1133, %v1141
    %v1145 = vmul.f32 %v1139, %v1141
    %v1146 = vmul.f32 %v1110, %v1055
    %v1147 = vmul.f32 %v1111, %v1056
    %v1148 = vmul.f32 %v1112, %v1057
    %v1149 = vmul.f32 %v1113, %v1058
    %v1150 = vadd.f32 %v1146, %v1142
    %v1151 = vadd.f32 %v1147, %v1143
    %v1152 = vadd.f32 %v1148, %v1144
    %v1153 = vadd.f32 %v1149, %v1145
    %v1154 = vperm.slane %v512, 5
    %v1155 = vlaneseq
    %v1156 = vshrl.u32 %v1155, 7
    %1158 = vset.pattern.permute.xlu0 %v1156
    %1159 = vperm.xlu0 %1158, %v1154
    %v1160 = vpop.permute.xlu0 %1159
    %v1161 = vlaneseq
    %v1162 = vshrl.u32 %v1161, 7
    %v1163 = vadd.s32 %v1162, 8
    %1164 = vset.pattern.permute.xlu0 %v1163
    %1165 = vperm.xlu0 %1164, %v1154
    %v1166 = vpop.permute.xlu0 %1165
    %v1167 = vperm.slane %v515, 5
    %v1168 = vlaneseq
    %v1169 = vshrl.u32 %v1168, 7
    %1171 = vset.pattern.permute.xlu0 %v1169
    %1172 = vperm.xlu0 %1171, %v1167
    %v1173 = vpop.permute.xlu0 %1172
    %v1174 = vlaneseq
    %v1175 = vshrl.u32 %v1174, 7
    %v1176 = vadd.s32 %v1175, 8
    %1177 = vset.pattern.permute.xlu0 %v1176
    %1178 = vperm.xlu0 %1177, %v1167
    %v1179 = vpop.permute.xlu0 %1178
    %v1180 = vmul.f32 %v1150, %v1160
    %v1181 = vmul.f32 %v1151, %v1166
    %v1182 = vmul.f32 %v1152, %v1173
    %v1183 = vmul.f32 %v1153, %v1179
    %v1184 = vadd.f32 %v1180, %v1181
    %v1185 = vrot.slane %v1184, 4
    %v1186 = vadd.f32 %v1184, %v1185
    %v1187 = vrot.slane %v1186, 2
    %v1188 = vadd.f32 %v1186, %v1187
    %v1189 = vrot.slane %v1188, 1
    %v1190 = vadd.f32 %v1188, %v1189
    %v1191 = vadd.f32 %v1182, %v1183
    %v1192 = vrot.slane %v1191, 4
    %v1193 = vadd.f32 %v1191, %v1192
    %v1194 = vrot.slane %v1193, 2
    %v1195 = vadd.f32 %v1193, %v1194
    %v1196 = vrot.slane %v1195, 1
    %v1197 = vadd.f32 %v1195, %v1196
    %vm1198 = vcmp.eq.s32.totalorder %v198, 5
    %v1199 = vsel %vm1198, %v1190, 0.0
    %v1200 = vsel %vm1198, %v1197, 0.0
    %v1201 = vadd.f32 %v1106, %v1199
    %v1202 = vadd.f32 %v1107, %v1200
    %v1203 = vperm.slane %v621, 6
    %v1204 = vperm.slane %v622, 6
    %v1205 = vmul.f32 %v628, %v1203
    %v1206 = vmul.f32 %v630, %v1203
    %v1207 = vmul.f32 %v628, %v1204
    %v1208 = vmul.f32 %v630, %v1204
    %v1209 = vperm.slane %v473, 6
    %v1210 = vlaneseq
    %v1211 = vshrl.u32 %v1210, 7
    %1213 = vset.pattern.permute.xlu0 %v1211
    %1214 = vperm.xlu0 %1213, %v1209
    %v1215 = vpop.permute.xlu0 %1214
    %v1216 = vlaneseq
    %v1217 = vshrl.u32 %v1216, 7
    %v1218 = vadd.s32 %v1217, 8
    %1219 = vset.pattern.permute.xlu0 %v1218
    %1220 = vperm.xlu0 %1219, %v1209
    %v1221 = vpop.permute.xlu0 %1220
    %v1222 = vperm.slane %v476, 6
    %v1223 = vlaneseq
    %v1224 = vshrl.u32 %v1223, 7
    %1226 = vset.pattern.permute.xlu0 %v1224
    %1227 = vperm.xlu0 %1226, %v1222
    %v1228 = vpop.permute.xlu0 %1227
    %v1229 = vlaneseq
    %v1230 = vshrl.u32 %v1229, 7
    %v1231 = vadd.s32 %v1230, 8
    %1232 = vset.pattern.permute.xlu0 %v1231
    %1233 = vperm.xlu0 %1232, %v1222
    %v1234 = vpop.permute.xlu0 %1233
    %v1235 = vperm.slane %v663, 6
    %v1236 = vperm.slane %v664, 6
    %v1237 = vmul.f32 %v1215, %v1235
    %v1238 = vmul.f32 %v1221, %v1235
    %v1239 = vmul.f32 %v1228, %v1236
    %v1240 = vmul.f32 %v1234, %v1236
    %v1241 = vmul.f32 %v1205, %v1150
    %v1242 = vmul.f32 %v1206, %v1151
    %v1243 = vmul.f32 %v1207, %v1152
    %v1244 = vmul.f32 %v1208, %v1153
    %v1245 = vadd.f32 %v1241, %v1237
    %v1246 = vadd.f32 %v1242, %v1238
    %v1247 = vadd.f32 %v1243, %v1239
    %v1248 = vadd.f32 %v1244, %v1240
    %v1249 = vperm.slane %v512, 6
    %v1250 = vlaneseq
    %v1251 = vshrl.u32 %v1250, 7
    %1253 = vset.pattern.permute.xlu0 %v1251
    %1254 = vperm.xlu0 %1253, %v1249
    %v1255 = vpop.permute.xlu0 %1254
    %v1256 = vlaneseq
    %v1257 = vshrl.u32 %v1256, 7
    %v1258 = vadd.s32 %v1257, 8
    %1259 = vset.pattern.permute.xlu0 %v1258
    %1260 = vperm.xlu0 %1259, %v1249
    %v1261 = vpop.permute.xlu0 %1260
    %v1262 = vperm.slane %v515, 6
    %v1263 = vlaneseq
    %v1264 = vshrl.u32 %v1263, 7
    %1266 = vset.pattern.permute.xlu0 %v1264
    %1267 = vperm.xlu0 %1266, %v1262
    %v1268 = vpop.permute.xlu0 %1267
    %v1269 = vlaneseq
    %v1270 = vshrl.u32 %v1269, 7
    %v1271 = vadd.s32 %v1270, 8
    %1272 = vset.pattern.permute.xlu0 %v1271
    %1273 = vperm.xlu0 %1272, %v1262
    %v1274 = vpop.permute.xlu0 %1273
    %v1275 = vmul.f32 %v1245, %v1255
    %v1276 = vmul.f32 %v1246, %v1261
    %v1277 = vmul.f32 %v1247, %v1268
    %v1278 = vmul.f32 %v1248, %v1274
    %v1279 = vadd.f32 %v1275, %v1276
    %v1280 = vrot.slane %v1279, 4
    %v1281 = vadd.f32 %v1279, %v1280
    %v1282 = vrot.slane %v1281, 2
    %v1283 = vadd.f32 %v1281, %v1282
    %v1284 = vrot.slane %v1283, 1
    %v1285 = vadd.f32 %v1283, %v1284
    %v1286 = vadd.f32 %v1277, %v1278
    %v1287 = vrot.slane %v1286, 4
    %v1288 = vadd.f32 %v1286, %v1287
    %v1289 = vrot.slane %v1288, 2
    %v1290 = vadd.f32 %v1288, %v1289
    %v1291 = vrot.slane %v1290, 1
    %v1292 = vadd.f32 %v1290, %v1291
    %vm1293 = vcmp.eq.s32.totalorder %v198, 6
    %v1294 = vsel %vm1293, %v1285, 0.0
    %v1295 = vsel %vm1293, %v1292, 0.0
    %v1296 = vadd.f32 %v1201, %v1294
    %v1297 = vadd.f32 %v1202, %v1295
    %v1298 = vperm.slane %v621, 7
    %v1299 = vperm.slane %v622, 7
    %v1300 = vmul.f32 %v628, %v1298
    %v1301 = vmul.f32 %v630, %v1298
    %v1302 = vmul.f32 %v628, %v1299
    %v1303 = vmul.f32 %v630, %v1299
    %v1304 = vperm.slane %v473, 7
    %v1305 = vlaneseq
    %v1306 = vshrl.u32 %v1305, 7
    %1308 = vset.pattern.permute.xlu0 %v1306
    %1309 = vperm.xlu0 %1308, %v1304
    %v1310 = vpop.permute.xlu0 %1309
    %v1311 = vlaneseq
    %v1312 = vshrl.u32 %v1311, 7
    %v1313 = vadd.s32 %v1312, 8
    %1314 = vset.pattern.permute.xlu0 %v1313
    %1315 = vperm.xlu0 %1314, %v1304
    %v1316 = vpop.permute.xlu0 %1315
    %v1317 = vperm.slane %v476, 7
    %v1318 = vlaneseq
    %v1319 = vshrl.u32 %v1318, 7
    %1321 = vset.pattern.permute.xlu0 %v1319
    %1322 = vperm.xlu0 %1321, %v1317
    %v1323 = vpop.permute.xlu0 %1322
    %v1324 = vlaneseq
    %v1325 = vshrl.u32 %v1324, 7
    %v1326 = vadd.s32 %v1325, 8
    %1327 = vset.pattern.permute.xlu0 %v1326
    %1328 = vperm.xlu0 %1327, %v1317
    %v1329 = vpop.permute.xlu0 %1328
    %v1330 = vperm.slane %v663, 7
    %v1331 = vperm.slane %v664, 7
    %v1332 = vmul.f32 %v1310, %v1330
    %v1333 = vmul.f32 %v1316, %v1330
    %v1334 = vmul.f32 %v1323, %v1331
    %v1335 = vmul.f32 %v1329, %v1331
    %v1336 = vmul.f32 %v1300, %v1245
    %v1337 = vmul.f32 %v1301, %v1246
    %v1338 = vmul.f32 %v1302, %v1247
    %v1339 = vmul.f32 %v1303, %v1248
    %v1340 = vadd.f32 %v1336, %v1332
    %v1341 = vadd.f32 %v1337, %v1333
    %v1342 = vadd.f32 %v1338, %v1334
    %v1343 = vadd.f32 %v1339, %v1335
    %v1344 = vperm.slane %v512, 7
    %v1345 = vlaneseq
    %v1346 = vshrl.u32 %v1345, 7
    %1348 = vset.pattern.permute.xlu0 %v1346
    %1349 = vperm.xlu0 %1348, %v1344
    %v1350 = vpop.permute.xlu0 %1349
    %v1351 = vlaneseq
    %v1352 = vshrl.u32 %v1351, 7
    %v1353 = vadd.s32 %v1352, 8
    %1354 = vset.pattern.permute.xlu0 %v1353
    %1355 = vperm.xlu0 %1354, %v1344
    %v1356 = vpop.permute.xlu0 %1355
    %v1357 = vperm.slane %v515, 7
    %v1358 = vlaneseq
    %v1359 = vshrl.u32 %v1358, 7
    %1361 = vset.pattern.permute.xlu0 %v1359
    %1362 = vperm.xlu0 %1361, %v1357
    %v1363 = vpop.permute.xlu0 %1362
    %v1364 = vlaneseq
    %v1365 = vshrl.u32 %v1364, 7
    %v1366 = vadd.s32 %v1365, 8
    %1367 = vset.pattern.permute.xlu0 %v1366
    %1368 = vperm.xlu0 %1367, %v1357
    %v1369 = vpop.permute.xlu0 %1368
    %v1370 = vmul.f32 %v1340, %v1350
    %v1371 = vmul.f32 %v1341, %v1356
    %v1372 = vmul.f32 %v1342, %v1363
    %v1373 = vmul.f32 %v1343, %v1369
    %v1374 = vadd.f32 %v1370, %v1371
    %v1375 = vrot.slane %v1374, 4
    %v1376 = vadd.f32 %v1374, %v1375
    %v1377 = vrot.slane %v1376, 2
    %v1378 = vadd.f32 %v1376, %v1377
    %v1379 = vrot.slane %v1378, 1
    %v1380 = vadd.f32 %v1378, %v1379
    %v1381 = vadd.f32 %v1372, %v1373
    %v1382 = vrot.slane %v1381, 4
    %v1383 = vadd.f32 %v1381, %v1382
    %v1384 = vrot.slane %v1383, 2
    %v1385 = vadd.f32 %v1383, %v1384
    %v1386 = vrot.slane %v1385, 1
    %v1387 = vadd.f32 %v1385, %v1386
    %vm1388 = vcmp.eq.s32.totalorder %v198, 7
    %v1389 = vsel %vm1388, %v1380, 0.0
    %v1390 = vsel %vm1388, %v1387, 0.0
    %v1391 = vadd.f32 %v1296, %v1389
    %v1392 = vadd.f32 %v1297, %v1390
    %v1393 = vmul.f32 %v589, %v437
    %v1394 = vmul.f32 %v589, %v438
    %v1395 = vadd.f32 %v1391, %v1393
    %v1396 = vadd.f32 %v1392, %v1394
    %v1397 = vxor.u32 %v342, 2147483648
    %v1398 = vxor.u32 %v345, 2147483648
    %v1399 = vmul.f32 %v1397, 1.442695
    %v1400 = vpow.pop %v1399
    %v1401 = vmul.f32 %v1398, 1.442695
    %v1402 = vpow.pop %v1401
    %v1403 = vadd.f32 %v1400, 1.0
    %v1404 = vadd.f32 %v1402, 1.0
    %v1405 = vrcp.pop %v1403
    %v1406 = vmul.f32 %v1403, %v1405
    %v1407 = vsub.f32 1.0, %v1406
    %v1408 = vmul.f32 %v1405, %v1407
    %v1409 = vadd.f32 %v1405, %v1408
    %vm1410 = vweird.f32 %v1403
    %vm1411 = vweird.f32 %v1405
    %vm1412 = vmor %vm1410, %vm1411
    %v1413 = vsel %vm1412, %v1405, %v1409
    %v1414 = vand.u32 2147483647, %v1403
    %vm1415 = vcmp.eq.f32.partialorder %v1414, 8.507059e+37
    %v1416 = vand.u32 %v1403, 2147483648
    %v1417 = vor.u32 1.1754944e-38, %v1416
    %v1418 = vsel %vm1415, %v1417, %v1413
    %v1419 = vmul.f32 1.0, %v1418
    %v1420 = vrcp.pop %v1404
    %v1421 = vmul.f32 %v1404, %v1420
    %v1422 = vsub.f32 1.0, %v1421
    %v1423 = vmul.f32 %v1420, %v1422
    %v1424 = vadd.f32 %v1420, %v1423
    %vm1425 = vweird.f32 %v1404
    %vm1426 = vweird.f32 %v1420
    %vm1427 = vmor %vm1425, %vm1426
    %v1428 = vsel %vm1427, %v1420, %v1424
    %v1429 = vand.u32 2147483647, %v1404
    %vm1430 = vcmp.eq.f32.partialorder %v1429, 8.507059e+37
    %v1431 = vand.u32 %v1404, 2147483648
    %v1432 = vor.u32 1.1754944e-38, %v1431
    %v1433 = vsel %vm1430, %v1432, %v1428
    %v1434 = vmul.f32 1.0, %v1433
    %v1435 = vmul.f32 %v342, %v1419
    %v1436 = vmul.f32 %v345, %v1434
    %v1437 = vmul.f32 %v1395, %v1435
    %v1438 = vmul.f32 %v1396, %v1436
    %v1439 = vld [vmem:[%s12] sm:$0xff]
    %v1440 = vld [vmem:[%s12 + $0x8] sm:$0xff]
    %v1441 = vld [vmem:[%s12 + $0x10] sm:$0xff]
    %v1442 = vld [vmem:[%s12 + $0x18] sm:$0xff]
    %v1443 = vld [vmem:[%s12 + $0x20] sm:$0xff]
    %v1444 = vld [vmem:[%s12 + $0x28] sm:$0xff]
    %v1445 = vld [vmem:[%s12 + $0x30] sm:$0xff]
    %v1446 = vld [vmem:[%s12 + $0x38] sm:$0xff]
    %v1447 = vld [vmem:[%s12 + $0x40] sm:$0xff]
    %v1448 = vld [vmem:[%s12 + $0x48] sm:$0xff]
    %v1449 = vld [vmem:[%s12 + $0x50] sm:$0xff]
    %v1450 = vld [vmem:[%s12 + $0x58] sm:$0xff]
    %v1451 = vld [vmem:[%s12 + $0x60] sm:$0xff]
    %v1452 = vld [vmem:[%s12 + $0x68] sm:$0xff]
    %v1453 = vld [vmem:[%s12 + $0x70] sm:$0xff]
    %v1454 = vld [vmem:[%s12 + $0x78] sm:$0xff]
    %1455 = vmatpush.msra.mxu0 %v1454
    %1456 = vmatpush.msra.mxu0 %v1453
    %1457 = vmatpush.msra.mxu0 %v1452
    %1458 = vmatpush.msra.mxu0 %v1451
    %1459 = vmatpush.msra.mxu0 %v1450
    %1460 = vmatpush.msra.mxu0 %v1449
    %1461 = vmatpush.msra.mxu0 %v1448
    %1462 = vmatpush.msra.mxu0 %v1447
    %1463 = vmatpush.msra.mxu0 %v1446
    %1464 = vmatpush.msra.mxu0 %v1445
    %1465 = vmatpush.msra.mxu0 %v1444
    %1466 = vmatpush.msra.mxu0 %v1443
    %1467 = vmatpush.msra.mxu0 %v1442
    %1468 = vmatpush.msra.mxu0 %v1441
    %1469 = vmatpush.msra.mxu0 %v1440
    %1470 = vmatpush.msra.mxu0 %v1439
    %1471 = vmatmul.f32.gmra.mxu0 %v1437
    %v1472 = vpop.f32.mrf.mxu0
    %v1473 = vadd.f32 %v195, %v1472
    %1474 = vmatmul.f32.gmra.mxu0 %v1438
    %v1475 = vpop.f32.mrf.mxu0
    %v1476 = vadd.f32 %v196, %v1475
    %1477 = vdwg.mxu0
    %v1478 = vmul.f32 %v1473, %v1473
    %v1479 = vmul.f32 %v1476, %v1476
    %1480 = vadd.xlane.f32.xlu0 %v1478
    %v1481 = vpop.xlane.xlu0 %1480
    %1482 = vadd.xlane.f32.xlu0 %v1479
    %v1483 = vpop.xlane.xlu0 %1482
    %v1484 = vrsqrt.pop %v1481
    %v1485 = vmul.f32 %v1484, %v1481
    %v1486 = vmul.f32 %v1485, %v1484
    %v1487 = vmul.f32 0.5, %v1486
    %v1488 = vsub.f32 1.5, %v1487
    %v1489 = vmul.f32 %v1484, %v1488
    %v1490 = vmul.f32 %v1481, %v1489
    %vm1491 = vcmp.eq.f32.partialorder %v1481, inf
    %v1492 = vsel %vm1491, %v1481, %v1490
    %vm1493 = vcmp.eq.f32.partialorder %v1481, 0.0
    %v1494 = vand.u32 %v1481, 2147483648
    %v1495 = vsel %vm1493, %v1494, %v1492
    %v1496 = vrsqrt.pop %v1483
    %v1497 = vmul.f32 %v1496, %v1483
    %v1498 = vmul.f32 %v1497, %v1496
    %v1499 = vmul.f32 0.5, %v1498
    %v1500 = vsub.f32 1.5, %v1499
    %v1501 = vmul.f32 %v1496, %v1500
    %v1502 = vmul.f32 %v1483, %v1501
    %vm1503 = vcmp.eq.f32.partialorder %v1483, inf
    %v1504 = vsel %vm1503, %v1483, %v1502
    %vm1505 = vcmp.eq.f32.partialorder %v1483, 0.0
    %v1506 = vand.u32 %v1483, 2147483648
    %v1507 = vsel %vm1505, %v1506, %v1504
    %v1508 = vadd.f32 %v1495, 1e-05
    %v1509 = vadd.f32 %v1507, 1e-05
    %v1510 = vrcp.pop %v1508
    %v1511 = vmul.f32 %v1508, %v1510
    %v1512 = vsub.f32 1.0, %v1511
    %v1513 = vmul.f32 %v1510, %v1512
    %v1514 = vadd.f32 %v1510, %v1513
    %vm1515 = vweird.f32 %v1508
    %vm1516 = vweird.f32 %v1510
    %vm1517 = vmor %vm1515, %vm1516
    %v1518 = vsel %vm1517, %v1510, %v1514
    %v1519 = vand.u32 2147483647, %v1508
    %vm1520 = vcmp.eq.f32.partialorder %v1519, 8.507059e+37
    %v1521 = vand.u32 %v1508, 2147483648
    %v1522 = vor.u32 1.1754944e-38, %v1521
    %v1523 = vsel %vm1520, %v1522, %v1518
    %v1524 = vmul.f32 11.313708, %v1523
    %v1525 = vrcp.pop %v1509
    %v1526 = vmul.f32 %v1509, %v1525
    %v1527 = vsub.f32 1.0, %v1526
    %v1528 = vmul.f32 %v1525, %v1527
    %v1529 = vadd.f32 %v1525, %v1528
    %vm1530 = vweird.f32 %v1509
    %vm1531 = vweird.f32 %v1525
    %vm1532 = vmor %vm1530, %vm1531
    %v1533 = vsel %vm1532, %v1525, %v1529
    %v1534 = vand.u32 2147483647, %v1509
    %vm1535 = vcmp.eq.f32.partialorder %v1534, 8.507059e+37
    %v1536 = vand.u32 %v1509, 2147483648
    %v1537 = vor.u32 1.1754944e-38, %v1536
    %v1538 = vsel %vm1535, %v1537, %v1533
    %v1539 = vmul.f32 11.313708, %v1538
    %v1540 = vmul.f32 %v1473, %v1524
    %v1541 = vmul.f32 %v1476, %v1539
    %v1542 = vld [vmem:[%s13] sm:$0x1]
    %v1544 = vperm.slane %v1542, 0
    %v1546 = vmul.f32 %v1540, %v1544
    %v1547 = vmul.f32 %v1541, %v1544
    %v1548 = vld [vmem:[%s14] sm:$0xff]
    %v1549 = vld [vmem:[%s14 + $0x8] sm:$0xff]
    %v1550 = vld [vmem:[%s14 + $0x10] sm:$0xff]
    %v1551 = vld [vmem:[%s14 + $0x18] sm:$0xff]
    %v1552 = vld [vmem:[%s14 + $0x20] sm:$0xff]
    %v1553 = vld [vmem:[%s14 + $0x28] sm:$0xff]
    %v1554 = vld [vmem:[%s14 + $0x30] sm:$0xff]
    %v1555 = vld [vmem:[%s14 + $0x38] sm:$0xff]
    %v1556 = vld [vmem:[%s14 + $0x40] sm:$0xff]
    %v1557 = vld [vmem:[%s14 + $0x48] sm:$0xff]
    %v1558 = vld [vmem:[%s14 + $0x50] sm:$0xff]
    %v1559 = vld [vmem:[%s14 + $0x58] sm:$0xff]
    %v1560 = vld [vmem:[%s14 + $0x60] sm:$0xff]
    %v1561 = vld [vmem:[%s14 + $0x68] sm:$0xff]
    %v1562 = vld [vmem:[%s14 + $0x70] sm:$0xff]
    %v1563 = vld [vmem:[%s14 + $0x78] sm:$0xff]
    %1564 = vmatpush.msra.mxu0 %v1563
    %1565 = vmatpush.msra.mxu0 %v1562
    %1566 = vmatpush.msra.mxu0 %v1561
    %1567 = vmatpush.msra.mxu0 %v1560
    %1568 = vmatpush.msra.mxu0 %v1559
    %1569 = vmatpush.msra.mxu0 %v1558
    %1570 = vmatpush.msra.mxu0 %v1557
    %1571 = vmatpush.msra.mxu0 %v1556
    %1572 = vmatpush.msra.mxu0 %v1555
    %1573 = vmatpush.msra.mxu0 %v1554
    %1574 = vmatpush.msra.mxu0 %v1553
    %1575 = vmatpush.msra.mxu0 %v1552
    %1576 = vmatpush.msra.mxu0 %v1551
    %1577 = vmatpush.msra.mxu0 %v1550
    %1578 = vmatpush.msra.mxu0 %v1549
    %1579 = vmatpush.msra.mxu0 %v1548
    %1580 = vmatmul.f32.gmra.mxu0 %v1546
    %v1581 = vpop.f32.mrf.mxu0
    %v1582 = vadd.f32 0.0, %v1581
    %1583 = vmatmul.f32.gmra.mxu0 %v1547
    %v1584 = vpop.f32.mrf.mxu0
    %v1585 = vadd.f32 0.0, %v1584
    %1586 = vdwg.mxu0
    %v1587 = vld [vmem:[%s15] sm:$0xff]
    %v1588 = vld [vmem:[%s15 + $0x8] sm:$0xff]
    %v1589 = vld [vmem:[%s15 + $0x10] sm:$0xff]
    %v1590 = vld [vmem:[%s15 + $0x18] sm:$0xff]
    %v1591 = vld [vmem:[%s15 + $0x20] sm:$0xff]
    %v1592 = vld [vmem:[%s15 + $0x28] sm:$0xff]
    %v1593 = vld [vmem:[%s15 + $0x30] sm:$0xff]
    %v1594 = vld [vmem:[%s15 + $0x38] sm:$0xff]
    %v1595 = vld [vmem:[%s15 + $0x40] sm:$0xff]
    %v1596 = vld [vmem:[%s15 + $0x48] sm:$0xff]
    %v1597 = vld [vmem:[%s15 + $0x50] sm:$0xff]
    %v1598 = vld [vmem:[%s15 + $0x58] sm:$0xff]
    %v1599 = vld [vmem:[%s15 + $0x60] sm:$0xff]
    %v1600 = vld [vmem:[%s15 + $0x68] sm:$0xff]
    %v1601 = vld [vmem:[%s15 + $0x70] sm:$0xff]
    %v1602 = vld [vmem:[%s15 + $0x78] sm:$0xff]
    %1603 = vmatpush.msra.mxu0 %v1602
    %1604 = vmatpush.msra.mxu0 %v1601
    %1605 = vmatpush.msra.mxu0 %v1600
    %1606 = vmatpush.msra.mxu0 %v1599
    %1607 = vmatpush.msra.mxu0 %v1598
    %1608 = vmatpush.msra.mxu0 %v1597
    %1609 = vmatpush.msra.mxu0 %v1596
    %1610 = vmatpush.msra.mxu0 %v1595
    %1611 = vmatpush.msra.mxu0 %v1594
    %1612 = vmatpush.msra.mxu0 %v1593
    %1613 = vmatpush.msra.mxu0 %v1592
    %1614 = vmatpush.msra.mxu0 %v1591
    %1615 = vmatpush.msra.mxu0 %v1590
    %1616 = vmatpush.msra.mxu0 %v1589
    %1617 = vmatpush.msra.mxu0 %v1588
    %1618 = vmatpush.msra.mxu0 %v1587
    %1619 = vmatmul.f32.gmra.mxu0 %v1546
    %v1620 = vpop.f32.mrf.mxu0
    %v1621 = vadd.f32 0.0, %v1620
    %1622 = vmatmul.f32.gmra.mxu0 %v1547
    %v1623 = vpop.f32.mrf.mxu0
    %v1624 = vadd.f32 0.0, %v1623
    %1625 = vdwg.mxu0
    %v1626 = vld [vmem:[#allocation11] sm:$0x1]
    %v1627 = vld [vmem:[#allocation10 + $0x3] sm:$0x1]
    %v1628 = vperm.slane %v1627, 0
    %v1629 = vmul.f32 %v1582, %v1628
    %v1630 = vmul.f32 %v1585, %v1628
    %v1632 = vperm.slane %v1626, 0
    %v1634 = vadd.f32 %v1632, %v1629
    %v1635 = vadd.f32 %v1632, %v1630
    %v1636 = vrot.slane %v1582, 7
    %v1637 = vrot.slane %v1585, 7
    %v1638 = vsel %vm359, %v1636, %v1637
    %v1639 = vsel %vm359, %v1637, %v1636
    %v1640 = vsel %vm362, %v1639, 0.0
    %v1641 = vsel %vm362, %v1638, 0.0
    %v1642 = vld [vmem:[#allocation10 + $0x2] sm:$0x1]
    %v1643 = vperm.slane %v1642, 0
    %v1644 = vmul.f32 %v1640, %v1643
    %v1645 = vmul.f32 %v1641, %v1643
    %v1646 = vadd.f32 %v1634, %v1644
    %v1647 = vadd.f32 %v1635, %v1645
    %v1648 = vrot.slane %v1582, 6
    %v1649 = vrot.slane %v1585, 6
    %v1650 = vsel %vm373, %v1648, %v1649
    %v1651 = vsel %vm373, %v1649, %v1648
    %v1652 = vsel %vm376, %v1651, 0.0
    %v1653 = vsel %vm376, %v1650, 0.0
    %v1654 = vld [vmem:[#allocation10 + $0x1] sm:$0x1]
    %v1655 = vperm.slane %v1654, 0
    %v1656 = vmul.f32 %v1652, %v1655
    %v1657 = vmul.f32 %v1653, %v1655
    %v1658 = vadd.f32 %v1646, %v1656
    %v1659 = vadd.f32 %v1647, %v1657
    %v1660 = vrot.slane %v1582, 5
    %v1661 = vrot.slane %v1585, 5
    %v1662 = vsel %vm387, %v1660, %v1661
    %v1663 = vsel %vm387, %v1661, %v1660
    %v1664 = vsel %vm390, %v1663, 0.0
    %v1665 = vsel %vm390, %v1662, 0.0
    %v1666 = vld [vmem:[#allocation10] sm:$0x1]
    %v1667 = vperm.slane %v1666, 0
    %v1668 = vmul.f32 %v1664, %v1667
    %v1669 = vmul.f32 %v1665, %v1667
    %v1670 = vadd.f32 %v1658, %v1668
    %v1671 = vadd.f32 %v1659, %v1669
    %v1672 = vxor.u32 %v1670, 2147483648
    %v1673 = vxor.u32 %v1671, 2147483648
    %v1674 = vmul.f32 %v1672, 1.442695
    %v1675 = vpow.pop %v1674
    %v1676 = vmul.f32 %v1673, 1.442695
    %v1677 = vpow.pop %v1676
    %v1678 = vadd.f32 %v1675, 1.0
    %v1679 = vadd.f32 %v1677, 1.0
    %v1680 = vrcp.pop %v1678
    %v1681 = vmul.f32 %v1678, %v1680
    %v1682 = vsub.f32 1.0, %v1681
    %v1683 = vmul.f32 %v1680, %v1682
    %v1684 = vadd.f32 %v1680, %v1683
    %vm1685 = vweird.f32 %v1678
    %vm1686 = vweird.f32 %v1680
    %vm1687 = vmor %vm1685, %vm1686
    %v1688 = vsel %vm1687, %v1680, %v1684
    %v1689 = vand.u32 2147483647, %v1678
    %vm1690 = vcmp.eq.f32.partialorder %v1689, 8.507059e+37
    %v1691 = vand.u32 %v1678, 2147483648
    %v1692 = vor.u32 1.1754944e-38, %v1691
    %v1693 = vsel %vm1690, %v1692, %v1688
    %v1694 = vmul.f32 1.0, %v1693
    %v1695 = vrcp.pop %v1679
    %v1696 = vmul.f32 %v1679, %v1695
    %v1697 = vsub.f32 1.0, %v1696
    %v1698 = vmul.f32 %v1695, %v1697
    %v1699 = vadd.f32 %v1695, %v1698
    %vm1700 = vweird.f32 %v1679
    %vm1701 = vweird.f32 %v1695
    %vm1702 = vmor %vm1700, %vm1701
    %v1703 = vsel %vm1702, %v1695, %v1699
    %v1704 = vand.u32 2147483647, %v1679
    %vm1705 = vcmp.eq.f32.partialorder %v1704, 8.507059e+37
    %v1706 = vand.u32 %v1679, 2147483648
    %v1707 = vor.u32 1.1754944e-38, %v1706
    %v1708 = vsel %vm1705, %v1707, %v1703
    %v1709 = vmul.f32 1.0, %v1708
    %v1710 = vmul.f32 %v1670, %v1694
    %v1711 = vmul.f32 %v1671, %v1709
    %v1712 = vld [vmem:[%s18] sm:$0xff]
    %v1713 = vld [vmem:[%s18 + $0x8] sm:$0xff]
    %v1714 = vld [vmem:[%s18 + $0x10] sm:$0xff]
    %v1715 = vld [vmem:[%s18 + $0x18] sm:$0xff]
    %v1716 = vld [vmem:[%s18 + $0x20] sm:$0xff]
    %v1717 = vld [vmem:[%s18 + $0x28] sm:$0xff]
    %v1718 = vld [vmem:[%s18 + $0x30] sm:$0xff]
    %v1719 = vld [vmem:[%s18 + $0x38] sm:$0xff]
    %v1720 = vld [vmem:[%s18 + $0x40] sm:$0xff]
    %v1721 = vld [vmem:[%s18 + $0x48] sm:$0xff]
    %v1722 = vld [vmem:[%s18 + $0x50] sm:$0xff]
    %v1723 = vld [vmem:[%s18 + $0x58] sm:$0xff]
    %v1724 = vld [vmem:[%s18 + $0x60] sm:$0xff]
    %v1725 = vld [vmem:[%s18 + $0x68] sm:$0xff]
    %v1726 = vld [vmem:[%s18 + $0x70] sm:$0xff]
    %v1727 = vld [vmem:[%s18 + $0x78] sm:$0xff]
    %1728 = vmatpush.msra.mxu0 %v1727
    %1729 = vmatpush.msra.mxu0 %v1726
    %1730 = vmatpush.msra.mxu0 %v1725
    %1731 = vmatpush.msra.mxu0 %v1724
    %1732 = vmatpush.msra.mxu0 %v1723
    %1733 = vmatpush.msra.mxu0 %v1722
    %1734 = vmatpush.msra.mxu0 %v1721
    %1735 = vmatpush.msra.mxu0 %v1720
    %1736 = vmatpush.msra.mxu0 %v1719
    %1737 = vmatpush.msra.mxu0 %v1718
    %1738 = vmatpush.msra.mxu0 %v1717
    %1739 = vmatpush.msra.mxu0 %v1716
    %1740 = vmatpush.msra.mxu0 %v1715
    %1741 = vmatpush.msra.mxu0 %v1714
    %1742 = vmatpush.msra.mxu0 %v1713
    %1743 = vmatpush.msra.mxu0 %v1712
    %1744 = vmatmul.f32.gmra.mxu0 %v1710
    %v1745 = vpop.f32.mrf.mxu0
    %v1746 = vadd.f32 0.0, %v1745
    %1747 = vmatmul.f32.gmra.mxu0 %v1711
    %v1748 = vpop.f32.mrf.mxu0
    %v1749 = vadd.f32 0.0, %v1748
    %1750 = vdwg.mxu0
    %v1751 = vld [vmem:[%s19] sm:$0xff]
    %v1752 = vld [vmem:[%s19 + $0x8] sm:$0xff]
    %v1753 = vld [vmem:[%s19 + $0x10] sm:$0xff]
    %v1754 = vld [vmem:[%s19 + $0x18] sm:$0xff]
    %v1755 = vld [vmem:[%s19 + $0x20] sm:$0xff]
    %v1756 = vld [vmem:[%s19 + $0x28] sm:$0xff]
    %v1757 = vld [vmem:[%s19 + $0x30] sm:$0xff]
    %v1758 = vld [vmem:[%s19 + $0x38] sm:$0xff]
    %v1759 = vld [vmem:[%s19 + $0x40] sm:$0xff]
    %v1760 = vld [vmem:[%s19 + $0x48] sm:$0xff]
    %v1761 = vld [vmem:[%s19 + $0x50] sm:$0xff]
    %v1762 = vld [vmem:[%s19 + $0x58] sm:$0xff]
    %v1763 = vld [vmem:[%s19 + $0x60] sm:$0xff]
    %v1764 = vld [vmem:[%s19 + $0x68] sm:$0xff]
    %v1765 = vld [vmem:[%s19 + $0x70] sm:$0xff]
    %v1766 = vld [vmem:[%s19 + $0x78] sm:$0xff]
    %1767 = vmatpush.msra.mxu0 %v1766
    %1768 = vmatpush.msra.mxu0 %v1765
    %1769 = vmatpush.msra.mxu0 %v1764
    %1770 = vmatpush.msra.mxu0 %v1763
    %1771 = vmatpush.msra.mxu0 %v1762
    %1772 = vmatpush.msra.mxu0 %v1761
    %1773 = vmatpush.msra.mxu0 %v1760
    %1774 = vmatpush.msra.mxu0 %v1759
    %1775 = vmatpush.msra.mxu0 %v1758
    %1776 = vmatpush.msra.mxu0 %v1757
    %1777 = vmatpush.msra.mxu0 %v1756
    %1778 = vmatpush.msra.mxu0 %v1755
    %1779 = vmatpush.msra.mxu0 %v1754
    %1780 = vmatpush.msra.mxu0 %v1753
    %1781 = vmatpush.msra.mxu0 %v1752
    %1782 = vmatpush.msra.mxu0 %v1751
    %1783 = vmatmul.f32.gmra.mxu0 %v1710
    %v1784 = vpop.f32.mrf.mxu0
    %v1785 = vadd.f32 0.0, %v1784
    %1786 = vmatmul.f32.gmra.mxu0 %v1711
    %v1787 = vpop.f32.mrf.mxu0
    %v1788 = vadd.f32 0.0, %v1787
    %1789 = vdwg.mxu0
    %v1790 = vld [vmem:[%s20] sm:$0xff]
    %v1791 = vld [vmem:[%s20 + $0x8] sm:$0xff]
    %v1792 = vld [vmem:[%s20 + $0x10] sm:$0xff]
    %v1793 = vld [vmem:[%s20 + $0x18] sm:$0xff]
    %v1794 = vld [vmem:[%s20 + $0x20] sm:$0xff]
    %v1795 = vld [vmem:[%s20 + $0x28] sm:$0xff]
    %v1796 = vld [vmem:[%s20 + $0x30] sm:$0xff]
    %v1797 = vld [vmem:[%s20 + $0x38] sm:$0xff]
    %v1798 = vld [vmem:[%s20 + $0x40] sm:$0xff]
    %v1799 = vld [vmem:[%s20 + $0x48] sm:$0xff]
    %v1800 = vld [vmem:[%s20 + $0x50] sm:$0xff]
    %v1801 = vld [vmem:[%s20 + $0x58] sm:$0xff]
    %v1802 = vld [vmem:[%s20 + $0x60] sm:$0xff]
    %v1803 = vld [vmem:[%s20 + $0x68] sm:$0xff]
    %v1804 = vld [vmem:[%s20 + $0x70] sm:$0xff]
    %v1805 = vld [vmem:[%s20 + $0x78] sm:$0xff]
    %1806 = vmatpush.msra.mxu0 %v1805
    %1807 = vmatpush.msra.mxu0 %v1804
    %1808 = vmatpush.msra.mxu0 %v1803
    %1809 = vmatpush.msra.mxu0 %v1802
    %1810 = vmatpush.msra.mxu0 %v1801
    %1811 = vmatpush.msra.mxu0 %v1800
    %1812 = vmatpush.msra.mxu0 %v1799
    %1813 = vmatpush.msra.mxu0 %v1798
    %1814 = vmatpush.msra.mxu0 %v1797
    %1815 = vmatpush.msra.mxu0 %v1796
    %1816 = vmatpush.msra.mxu0 %v1795
    %1817 = vmatpush.msra.mxu0 %v1794
    %1818 = vmatpush.msra.mxu0 %v1793
    %1819 = vmatpush.msra.mxu0 %v1792
    %1820 = vmatpush.msra.mxu0 %v1791
    %1821 = vmatpush.msra.mxu0 %v1790
    %1822 = vmatmul.f32.gmra.mxu0 %v1710
    %v1823 = vpop.f32.mrf.mxu0
    %v1824 = vadd.f32 0.0, %v1823
    %1825 = vmatmul.f32.gmra.mxu0 %v1711
    %v1826 = vpop.f32.mrf.mxu0
    %v1827 = vadd.f32 0.0, %v1826
    %1828 = vdwg.mxu0
    %v1829 = vld [vmem:[%s21] sm:$0xff]
    %v1831 = vsel %vm557, %v1824, 0
    %v1834 = vsel %vm557, %v1827, 0
    %1836 = vmatpush.msra.mxu0 0.0
    %1837 = vmatpush.msra.mxu0 0.0
    %1838 = vmatpush.msra.mxu0 0.0
    %1839 = vmatpush.msra.mxu0 0.0
    %1840 = vmatpush.msra.mxu0 0.0
    %1841 = vmatpush.msra.mxu0 0.0
    %1842 = vmatpush.msra.mxu0 0.0
    %1843 = vmatpush.msra.mxu0 0.0
    %1844 = vmatpush.msra.mxu0 0.0
    %1845 = vmatpush.msra.mxu0 0.0
    %1846 = vmatpush.msra.mxu0 0.0
    %1847 = vmatpush.msra.mxu0 0.0
    %1848 = vmatpush.msra.mxu0 0.0
    %1849 = vmatpush.msra.mxu0 0.0
    %1850 = vmatpush.msra.mxu0 0.0
    %1851 = vmatpush.msra.mxu0 %v1829
    %1852 = vmatmul.f32.gmra.mxu0 %v1831
    %v1853 = vpop.f32.mrf.mxu0
    %v1854 = vadd.f32 0.0, %v1853
    %1855 = vmatmul.f32.gmra.mxu0 %v1834
    %v1856 = vpop.f32.mrf.mxu0
    %v1857 = vadd.f32 0.0, %v1856
    %1858 = vdwg.mxu0
    %v1859 = vld [vmem:[#allocation13] sm:$0x1]
    %v1861 = vperm.slane %v1859, 0
    %v1863 = vadd.f32 %v1861, %v1854
    %v1864 = vadd.f32 %v1861, %v1857
    %v1865 = vmax.f32 %v1863, 0.0
    %v1866 = vmax.f32 %v1864, 0.0
    %v1867 = vand.u32 2147483647, %v1863
    %v1868 = vand.u32 2147483647, %v1864
    %v1869 = vsub.f32 0.0, %v1867
    %v1870 = vsub.f32 0.0, %v1868
    %v1871 = vmul.f32 %v1869, 1.442695
    %v1872 = vpow.pop %v1871
    %v1873 = vmul.f32 %v1870, 1.442695
    %v1874 = vpow.pop %v1873
    %v1875 = vadd.f32 %v1872, 1.0
    %v1876 = vlog2.pop %v1875
    %v1877 = vmul.f32 %v1876, 0.6931472
    %v1878 = vmul.f32 -0.5, %v1872
    %v1879 = vadd.f32 %v1878, 1.0
    %v1880 = vmul.f32 %v1879, %v1872
    %v1881 = vand.u32 2147483647, %v1872
    %vm1882 = vcmp.lt.f32.partialorder %v1881, 0.0004427343
    %v1883 = vsel %vm1882, %v1880, %v1877
    %v1884 = vadd.f32 %v1874, 1.0
    %v1885 = vlog2.pop %v1884
    %v1886 = vmul.f32 %v1885, 0.6931472
    %v1887 = vmul.f32 -0.5, %v1874
    %v1888 = vadd.f32 %v1887, 1.0
    %v1889 = vmul.f32 %v1888, %v1874
    %v1890 = vand.u32 2147483647, %v1874
    %vm1891 = vcmp.lt.f32.partialorder %v1890, 0.0004427343
    %v1892 = vsel %vm1891, %v1889, %v1886
    %v1893 = vadd.f32 %v1865, %v1883
    %v1894 = vadd.f32 %v1866, %v1892
    %v1895 = vld [vmem:[%s22] sm:$0xff]
    %v1896 = vld [vmem:[%s22 + $0x8] sm:$0xff]
    %v1897 = vsub.f32 0.0, %v1895
    %v1898 = vsub.f32 0.0, %v1896
    %v1899 = vmul.f32 %v1897, 1.442695
    %v1900 = vpow.pop %v1899
    %v1901 = vmul.f32 %v1898, 1.442695
    %v1902 = vpow.pop %v1901
    %v1903 = vperm.slane %v1893, 0
    %v1904 = vperm.slane %v1894, 0
    %v1905 = vmul.f32 %v1900, %v1903
    %v1906 = vmul.f32 %v1902, %v1903
    %v1907 = vmul.f32 %v1900, %v1904
    %v1908 = vmul.f32 %v1902, %v1904
    %v1909 = vperm.slane %v1746, 0
    %v1910 = vlaneseq
    %v1911 = vshrl.u32 %v1910, 7
    %1913 = vset.pattern.permute.xlu0 %v1911
    %1914 = vperm.xlu0 %1913, %v1909
    %v1915 = vpop.permute.xlu0 %1914
    %v1916 = vlaneseq
    %v1917 = vshrl.u32 %v1916, 7
    %v1918 = vadd.s32 %v1917, 8
    %1919 = vset.pattern.permute.xlu0 %v1918
    %1920 = vperm.xlu0 %1919, %v1909
    %v1921 = vpop.permute.xlu0 %1920
    %v1922 = vperm.slane %v1749, 0
    %v1923 = vlaneseq
    %v1924 = vshrl.u32 %v1923, 7
    %1926 = vset.pattern.permute.xlu0 %v1924
    %1927 = vperm.xlu0 %1926, %v1922
    %v1928 = vpop.permute.xlu0 %1927
    %v1929 = vlaneseq
    %v1930 = vshrl.u32 %v1929, 7
    %v1931 = vadd.s32 %v1930, 8
    %1932 = vset.pattern.permute.xlu0 %v1931
    %1933 = vperm.xlu0 %1932, %v1922
    %v1934 = vpop.permute.xlu0 %1933
    %v1935 = vmul.f32 %v1893, %v1710
    %v1936 = vmul.f32 %v1894, %v1711
    %v1937 = vperm.slane %v1935, 0
    %v1938 = vperm.slane %v1936, 0
    %v1939 = vmul.f32 %v1915, %v1937
    %v1940 = vmul.f32 %v1921, %v1937
    %v1941 = vmul.f32 %v1928, %v1938
    %v1942 = vmul.f32 %v1934, %v1938
    %v1943 = vmul.f32 %v1905, 0.0
    %v1944 = vmul.f32 %v1906, 0.0
    %v1945 = vmul.f32 %v1907, 0.0
    %v1946 = vmul.f32 %v1908, 0.0
    %v1947 = vadd.f32 %v1943, %v1939
    %v1948 = vadd.f32 %v1944, %v1940
    %v1949 = vadd.f32 %v1945, %v1941
    %v1950 = vadd.f32 %v1946, %v1942
    %v1951 = vperm.slane %v1785, 0
    %v1952 = vlaneseq
    %v1953 = vshrl.u32 %v1952, 7
    %1955 = vset.pattern.permute.xlu0 %v1953
    %1956 = vperm.xlu0 %1955, %v1951
    %v1957 = vpop.permute.xlu0 %1956
    %v1958 = vlaneseq
    %v1959 = vshrl.u32 %v1958, 7
    %v1960 = vadd.s32 %v1959, 8
    %1961 = vset.pattern.permute.xlu0 %v1960
    %1962 = vperm.xlu0 %1961, %v1951
    %v1963 = vpop.permute.xlu0 %1962
    %v1964 = vperm.slane %v1788, 0
    %v1965 = vlaneseq
    %v1966 = vshrl.u32 %v1965, 7
    %1968 = vset.pattern.permute.xlu0 %v1966
    %1969 = vperm.xlu0 %1968, %v1964
    %v1970 = vpop.permute.xlu0 %1969
    %v1971 = vlaneseq
    %v1972 = vshrl.u32 %v1971, 7
    %v1973 = vadd.s32 %v1972, 8
    %1974 = vset.pattern.permute.xlu0 %v1973
    %1975 = vperm.xlu0 %1974, %v1964
    %v1976 = vpop.permute.xlu0 %1975
    %v1977 = vmul.f32 %v1947, %v1957
    %v1978 = vmul.f32 %v1948, %v1963
    %v1979 = vmul.f32 %v1949, %v1970
    %v1980 = vmul.f32 %v1950, %v1976
    %v1981 = vadd.f32 %v1977, %v1978
    %v1982 = vrot.slane %v1981, 4
    %v1983 = vadd.f32 %v1981, %v1982
    %v1984 = vrot.slane %v1983, 2
    %v1985 = vadd.f32 %v1983, %v1984
    %v1986 = vrot.slane %v1985, 1
    %v1987 = vadd.f32 %v1985, %v1986
    %v1988 = vadd.f32 %v1979, %v1980
    %v1989 = vrot.slane %v1988, 4
    %v1990 = vadd.f32 %v1988, %v1989
    %v1991 = vrot.slane %v1990, 2
    %v1992 = vadd.f32 %v1990, %v1991
    %v1993 = vrot.slane %v1992, 1
    %v1994 = vadd.f32 %v1992, %v1993
    %v1995 = vsel %vm723, %v1987, 0.0
    %v1996 = vsel %vm723, %v1994, 0.0
    %v1997 = vadd.f32 %v1995, 0.0
    %v1998 = vadd.f32 %v1996, 0.0
    %v1999 = vperm.slane %v1893, 1
    %v2000 = vperm.slane %v1894, 1
    %v2001 = vmul.f32 %v1900, %v1999
    %v2002 = vmul.f32 %v1902, %v1999
    %v2003 = vmul.f32 %v1900, %v2000
    %v2004 = vmul.f32 %v1902, %v2000
    %v2005 = vperm.slane %v1746, 1
    %v2006 = vlaneseq
    %v2007 = vshrl.u32 %v2006, 7
    %2009 = vset.pattern.permute.xlu0 %v2007
    %2010 = vperm.xlu0 %2009, %v2005
    %v2011 = vpop.permute.xlu0 %2010
    %v2012 = vlaneseq
    %v2013 = vshrl.u32 %v2012, 7
    %v2014 = vadd.s32 %v2013, 8
    %2015 = vset.pattern.permute.xlu0 %v2014
    %2016 = vperm.xlu0 %2015, %v2005
    %v2017 = vpop.permute.xlu0 %2016
    %v2018 = vperm.slane %v1749, 1
    %v2019 = vlaneseq
    %v2020 = vshrl.u32 %v2019, 7
    %2022 = vset.pattern.permute.xlu0 %v2020
    %2023 = vperm.xlu0 %2022, %v2018
    %v2024 = vpop.permute.xlu0 %2023
    %v2025 = vlaneseq
    %v2026 = vshrl.u32 %v2025, 7
    %v2027 = vadd.s32 %v2026, 8
    %2028 = vset.pattern.permute.xlu0 %v2027
    %2029 = vperm.xlu0 %2028, %v2018
    %v2030 = vpop.permute.xlu0 %2029
    %v2031 = vperm.slane %v1935, 1
    %v2032 = vperm.slane %v1936, 1
    %v2033 = vmul.f32 %v2011, %v2031
    %v2034 = vmul.f32 %v2017, %v2031
    %v2035 = vmul.f32 %v2024, %v2032
    %v2036 = vmul.f32 %v2030, %v2032
    %v2037 = vmul.f32 %v2001, %v1947
    %v2038 = vmul.f32 %v2002, %v1948
    %v2039 = vmul.f32 %v2003, %v1949
    %v2040 = vmul.f32 %v2004, %v1950
    %v2041 = vadd.f32 %v2037, %v2033
    %v2042 = vadd.f32 %v2038, %v2034
    %v2043 = vadd.f32 %v2039, %v2035
    %v2044 = vadd.f32 %v2040, %v2036
    %v2045 = vperm.slane %v1785, 1
    %v2046 = vlaneseq
    %v2047 = vshrl.u32 %v2046, 7
    %2049 = vset.pattern.permute.xlu0 %v2047
    %2050 = vperm.xlu0 %2049, %v2045
    %v2051 = vpop.permute.xlu0 %2050
    %v2052 = vlaneseq
    %v2053 = vshrl.u32 %v2052, 7
    %v2054 = vadd.s32 %v2053, 8
    %2055 = vset.pattern.permute.xlu0 %v2054
    %2056 = vperm.xlu0 %2055, %v2045
    %v2057 = vpop.permute.xlu0 %2056
    %v2058 = vperm.slane %v1788, 1
    %v2059 = vlaneseq
    %v2060 = vshrl.u32 %v2059, 7
    %2062 = vset.pattern.permute.xlu0 %v2060
    %2063 = vperm.xlu0 %2062, %v2058
    %v2064 = vpop.permute.xlu0 %2063
    %v2065 = vlaneseq
    %v2066 = vshrl.u32 %v2065, 7
    %v2067 = vadd.s32 %v2066, 8
    %2068 = vset.pattern.permute.xlu0 %v2067
    %2069 = vperm.xlu0 %2068, %v2058
    %v2070 = vpop.permute.xlu0 %2069
    %v2071 = vmul.f32 %v2041, %v2051
    %v2072 = vmul.f32 %v2042, %v2057
    %v2073 = vmul.f32 %v2043, %v2064
    %v2074 = vmul.f32 %v2044, %v2070
    %v2075 = vadd.f32 %v2071, %v2072
    %v2076 = vrot.slane %v2075, 4
    %v2077 = vadd.f32 %v2075, %v2076
    %v2078 = vrot.slane %v2077, 2
    %v2079 = vadd.f32 %v2077, %v2078
    %v2080 = vrot.slane %v2079, 1
    %v2081 = vadd.f32 %v2079, %v2080
    %v2082 = vadd.f32 %v2073, %v2074
    %v2083 = vrot.slane %v2082, 4
    %v2084 = vadd.f32 %v2082, %v2083
    %v2085 = vrot.slane %v2084, 2
    %v2086 = vadd.f32 %v2084, %v2085
    %v2087 = vrot.slane %v2086, 1
    %v2088 = vadd.f32 %v2086, %v2087
    %v2089 = vsel %vm818, %v2081, 0.0
    %v2090 = vsel %vm818, %v2088, 0.0
    %v2091 = vadd.f32 %v1997, %v2089
    %v2092 = vadd.f32 %v1998, %v2090
    %v2093 = vperm.slane %v1893, 2
    %v2094 = vperm.slane %v1894, 2
    %v2095 = vmul.f32 %v1900, %v2093
    %v2096 = vmul.f32 %v1902, %v2093
    %v2097 = vmul.f32 %v1900, %v2094
    %v2098 = vmul.f32 %v1902, %v2094
    %v2099 = vperm.slane %v1746, 2
    %v2100 = vlaneseq
    %v2101 = vshrl.u32 %v2100, 7
    %2103 = vset.pattern.permute.xlu0 %v2101
    %2104 = vperm.xlu0 %2103, %v2099
    %v2105 = vpop.permute.xlu0 %2104
    %v2106 = vlaneseq
    %v2107 = vshrl.u32 %v2106, 7
    %v2108 = vadd.s32 %v2107, 8
    %2109 = vset.pattern.permute.xlu0 %v2108
    %2110 = vperm.xlu0 %2109, %v2099
    %v2111 = vpop.permute.xlu0 %2110
    %v2112 = vperm.slane %v1749, 2
    %v2113 = vlaneseq
    %v2114 = vshrl.u32 %v2113, 7
    %2116 = vset.pattern.permute.xlu0 %v2114
    %2117 = vperm.xlu0 %2116, %v2112
    %v2118 = vpop.permute.xlu0 %2117
    %v2119 = vlaneseq
    %v2120 = vshrl.u32 %v2119, 7
    %v2121 = vadd.s32 %v2120, 8
    %2122 = vset.pattern.permute.xlu0 %v2121
    %2123 = vperm.xlu0 %2122, %v2112
    %v2124 = vpop.permute.xlu0 %2123
    %v2125 = vperm.slane %v1935, 2
    %v2126 = vperm.slane %v1936, 2
    %v2127 = vmul.f32 %v2105, %v2125
    %v2128 = vmul.f32 %v2111, %v2125
    %v2129 = vmul.f32 %v2118, %v2126
    %v2130 = vmul.f32 %v2124, %v2126
    %v2131 = vmul.f32 %v2095, %v2041
    %v2132 = vmul.f32 %v2096, %v2042
    %v2133 = vmul.f32 %v2097, %v2043
    %v2134 = vmul.f32 %v2098, %v2044
    %v2135 = vadd.f32 %v2131, %v2127
    %v2136 = vadd.f32 %v2132, %v2128
    %v2137 = vadd.f32 %v2133, %v2129
    %v2138 = vadd.f32 %v2134, %v2130
    %v2139 = vperm.slane %v1785, 2
    %v2140 = vlaneseq
    %v2141 = vshrl.u32 %v2140, 7
    %2143 = vset.pattern.permute.xlu0 %v2141
    %2144 = vperm.xlu0 %2143, %v2139
    %v2145 = vpop.permute.xlu0 %2144
    %v2146 = vlaneseq
    %v2147 = vshrl.u32 %v2146, 7
    %v2148 = vadd.s32 %v2147, 8
    %2149 = vset.pattern.permute.xlu0 %v2148
    %2150 = vperm.xlu0 %2149, %v2139
    %v2151 = vpop.permute.xlu0 %2150
    %v2152 = vperm.slane %v1788, 2
    %v2153 = vlaneseq
    %v2154 = vshrl.u32 %v2153, 7
    %2156 = vset.pattern.permute.xlu0 %v2154
    %2157 = vperm.xlu0 %2156, %v2152
    %v2158 = vpop.permute.xlu0 %2157
    %v2159 = vlaneseq
    %v2160 = vshrl.u32 %v2159, 7
    %v2161 = vadd.s32 %v2160, 8
    %2162 = vset.pattern.permute.xlu0 %v2161
    %2163 = vperm.xlu0 %2162, %v2152
    %v2164 = vpop.permute.xlu0 %2163
    %v2165 = vmul.f32 %v2135, %v2145
    %v2166 = vmul.f32 %v2136, %v2151
    %v2167 = vmul.f32 %v2137, %v2158
    %v2168 = vmul.f32 %v2138, %v2164
    %v2169 = vadd.f32 %v2165, %v2166
    %v2170 = vrot.slane %v2169, 4
    %v2171 = vadd.f32 %v2169, %v2170
    %v2172 = vrot.slane %v2171, 2
    %v2173 = vadd.f32 %v2171, %v2172
    %v2174 = vrot.slane %v2173, 1
    %v2175 = vadd.f32 %v2173, %v2174
    %v2176 = vadd.f32 %v2167, %v2168
    %v2177 = vrot.slane %v2176, 4
    %v2178 = vadd.f32 %v2176, %v2177
    %v2179 = vrot.slane %v2178, 2
    %v2180 = vadd.f32 %v2178, %v2179
    %v2181 = vrot.slane %v2180, 1
    %v2182 = vadd.f32 %v2180, %v2181
    %v2183 = vsel %vm913, %v2175, 0.0
    %v2184 = vsel %vm913, %v2182, 0.0
    %v2185 = vadd.f32 %v2091, %v2183
    %v2186 = vadd.f32 %v2092, %v2184
    %v2187 = vperm.slane %v1893, 3
    %v2188 = vperm.slane %v1894, 3
    %v2189 = vmul.f32 %v1900, %v2187
    %v2190 = vmul.f32 %v1902, %v2187
    %v2191 = vmul.f32 %v1900, %v2188
    %v2192 = vmul.f32 %v1902, %v2188
    %v2193 = vperm.slane %v1746, 3
    %v2194 = vlaneseq
    %v2195 = vshrl.u32 %v2194, 7
    %2197 = vset.pattern.permute.xlu0 %v2195
    %2198 = vperm.xlu0 %2197, %v2193
    %v2199 = vpop.permute.xlu0 %2198
    %v2200 = vlaneseq
    %v2201 = vshrl.u32 %v2200, 7
    %v2202 = vadd.s32 %v2201, 8
    %2203 = vset.pattern.permute.xlu0 %v2202
    %2204 = vperm.xlu0 %2203, %v2193
    %v2205 = vpop.permute.xlu0 %2204
    %v2206 = vperm.slane %v1749, 3
    %v2207 = vlaneseq
    %v2208 = vshrl.u32 %v2207, 7
    %2210 = vset.pattern.permute.xlu0 %v2208
    %2211 = vperm.xlu0 %2210, %v2206
    %v2212 = vpop.permute.xlu0 %2211
    %v2213 = vlaneseq
    %v2214 = vshrl.u32 %v2213, 7
    %v2215 = vadd.s32 %v2214, 8
    %2216 = vset.pattern.permute.xlu0 %v2215
    %2217 = vperm.xlu0 %2216, %v2206
    %v2218 = vpop.permute.xlu0 %2217
    %v2219 = vperm.slane %v1935, 3
    %v2220 = vperm.slane %v1936, 3
    %v2221 = vmul.f32 %v2199, %v2219
    %v2222 = vmul.f32 %v2205, %v2219
    %v2223 = vmul.f32 %v2212, %v2220
    %v2224 = vmul.f32 %v2218, %v2220
    %v2225 = vmul.f32 %v2189, %v2135
    %v2226 = vmul.f32 %v2190, %v2136
    %v2227 = vmul.f32 %v2191, %v2137
    %v2228 = vmul.f32 %v2192, %v2138
    %v2229 = vadd.f32 %v2225, %v2221
    %v2230 = vadd.f32 %v2226, %v2222
    %v2231 = vadd.f32 %v2227, %v2223
    %v2232 = vadd.f32 %v2228, %v2224
    %v2233 = vperm.slane %v1785, 3
    %v2234 = vlaneseq
    %v2235 = vshrl.u32 %v2234, 7
    %2237 = vset.pattern.permute.xlu0 %v2235
    %2238 = vperm.xlu0 %2237, %v2233
    %v2239 = vpop.permute.xlu0 %2238
    %v2240 = vlaneseq
    %v2241 = vshrl.u32 %v2240, 7
    %v2242 = vadd.s32 %v2241, 8
    %2243 = vset.pattern.permute.xlu0 %v2242
    %2244 = vperm.xlu0 %2243, %v2233
    %v2245 = vpop.permute.xlu0 %2244
    %v2246 = vperm.slane %v1788, 3
    %v2247 = vlaneseq
    %v2248 = vshrl.u32 %v2247, 7
    %2250 = vset.pattern.permute.xlu0 %v2248
    %2251 = vperm.xlu0 %2250, %v2246
    %v2252 = vpop.permute.xlu0 %2251
    %v2253 = vlaneseq
    %v2254 = vshrl.u32 %v2253, 7
    %v2255 = vadd.s32 %v2254, 8
    %2256 = vset.pattern.permute.xlu0 %v2255
    %2257 = vperm.xlu0 %2256, %v2246
    %v2258 = vpop.permute.xlu0 %2257
    %v2259 = vmul.f32 %v2229, %v2239
    %v2260 = vmul.f32 %v2230, %v2245
    %v2261 = vmul.f32 %v2231, %v2252
    %v2262 = vmul.f32 %v2232, %v2258
    %v2263 = vadd.f32 %v2259, %v2260
    %v2264 = vrot.slane %v2263, 4
    %v2265 = vadd.f32 %v2263, %v2264
    %v2266 = vrot.slane %v2265, 2
    %v2267 = vadd.f32 %v2265, %v2266
    %v2268 = vrot.slane %v2267, 1
    %v2269 = vadd.f32 %v2267, %v2268
    %v2270 = vadd.f32 %v2261, %v2262
    %v2271 = vrot.slane %v2270, 4
    %v2272 = vadd.f32 %v2270, %v2271
    %v2273 = vrot.slane %v2272, 2
    %v2274 = vadd.f32 %v2272, %v2273
    %v2275 = vrot.slane %v2274, 1
    %v2276 = vadd.f32 %v2274, %v2275
    %v2277 = vsel %vm1008, %v2269, 0.0
    %v2278 = vsel %vm1008, %v2276, 0.0
    %v2279 = vadd.f32 %v2185, %v2277
    %v2280 = vadd.f32 %v2186, %v2278
    %v2281 = vperm.slane %v1893, 4
    %v2282 = vperm.slane %v1894, 4
    %v2283 = vmul.f32 %v1900, %v2281
    %v2284 = vmul.f32 %v1902, %v2281
    %v2285 = vmul.f32 %v1900, %v2282
    %v2286 = vmul.f32 %v1902, %v2282
    %v2287 = vperm.slane %v1746, 4
    %v2288 = vlaneseq
    %v2289 = vshrl.u32 %v2288, 7
    %2291 = vset.pattern.permute.xlu0 %v2289
    %2292 = vperm.xlu0 %2291, %v2287
    %v2293 = vpop.permute.xlu0 %2292
    %v2294 = vlaneseq
    %v2295 = vshrl.u32 %v2294, 7
    %v2296 = vadd.s32 %v2295, 8
    %2297 = vset.pattern.permute.xlu0 %v2296
    %2298 = vperm.xlu0 %2297, %v2287
    %v2299 = vpop.permute.xlu0 %2298
    %v2300 = vperm.slane %v1749, 4
    %v2301 = vlaneseq
    %v2302 = vshrl.u32 %v2301, 7
    %2304 = vset.pattern.permute.xlu0 %v2302
    %2305 = vperm.xlu0 %2304, %v2300
    %v2306 = vpop.permute.xlu0 %2305
    %v2307 = vlaneseq
    %v2308 = vshrl.u32 %v2307, 7
    %v2309 = vadd.s32 %v2308, 8
    %2310 = vset.pattern.permute.xlu0 %v2309
    %2311 = vperm.xlu0 %2310, %v2300
    %v2312 = vpop.permute.xlu0 %2311
    %v2313 = vperm.slane %v1935, 4
    %v2314 = vperm.slane %v1936, 4
    %v2315 = vmul.f32 %v2293, %v2313
    %v2316 = vmul.f32 %v2299, %v2313
    %v2317 = vmul.f32 %v2306, %v2314
    %v2318 = vmul.f32 %v2312, %v2314
    %v2319 = vmul.f32 %v2283, %v2229
    %v2320 = vmul.f32 %v2284, %v2230
    %v2321 = vmul.f32 %v2285, %v2231
    %v2322 = vmul.f32 %v2286, %v2232
    %v2323 = vadd.f32 %v2319, %v2315
    %v2324 = vadd.f32 %v2320, %v2316
    %v2325 = vadd.f32 %v2321, %v2317
    %v2326 = vadd.f32 %v2322, %v2318
    %v2327 = vperm.slane %v1785, 4
    %v2328 = vlaneseq
    %v2329 = vshrl.u32 %v2328, 7
    %2331 = vset.pattern.permute.xlu0 %v2329
    %2332 = vperm.xlu0 %2331, %v2327
    %v2333 = vpop.permute.xlu0 %2332
    %v2334 = vlaneseq
    %v2335 = vshrl.u32 %v2334, 7
    %v2336 = vadd.s32 %v2335, 8
    %2337 = vset.pattern.permute.xlu0 %v2336
    %2338 = vperm.xlu0 %2337, %v2327
    %v2339 = vpop.permute.xlu0 %2338
    %v2340 = vperm.slane %v1788, 4
    %v2341 = vlaneseq
    %v2342 = vshrl.u32 %v2341, 7
    %2344 = vset.pattern.permute.xlu0 %v2342
    %2345 = vperm.xlu0 %2344, %v2340
    %v2346 = vpop.permute.xlu0 %2345
    %v2347 = vlaneseq
    %v2348 = vshrl.u32 %v2347, 7
    %v2349 = vadd.s32 %v2348, 8
    %2350 = vset.pattern.permute.xlu0 %v2349
    %2351 = vperm.xlu0 %2350, %v2340
    %v2352 = vpop.permute.xlu0 %2351
    %v2353 = vmul.f32 %v2323, %v2333
    %v2354 = vmul.f32 %v2324, %v2339
    %v2355 = vmul.f32 %v2325, %v2346
    %v2356 = vmul.f32 %v2326, %v2352
    %v2357 = vadd.f32 %v2353, %v2354
    %v2358 = vrot.slane %v2357, 4
    %v2359 = vadd.f32 %v2357, %v2358
    %v2360 = vrot.slane %v2359, 2
    %v2361 = vadd.f32 %v2359, %v2360
    %v2362 = vrot.slane %v2361, 1
    %v2363 = vadd.f32 %v2361, %v2362
    %v2364 = vadd.f32 %v2355, %v2356
    %v2365 = vrot.slane %v2364, 4
    %v2366 = vadd.f32 %v2364, %v2365
    %v2367 = vrot.slane %v2366, 2
    %v2368 = vadd.f32 %v2366, %v2367
    %v2369 = vrot.slane %v2368, 1
    %v2370 = vadd.f32 %v2368, %v2369
    %v2371 = vsel %vm1103, %v2363, 0.0
    %v2372 = vsel %vm1103, %v2370, 0.0
    %v2373 = vadd.f32 %v2279, %v2371
    %v2374 = vadd.f32 %v2280, %v2372
    %v2375 = vperm.slane %v1893, 5
    %v2376 = vperm.slane %v1894, 5
    %v2377 = vmul.f32 %v1900, %v2375
    %v2378 = vmul.f32 %v1902, %v2375
    %v2379 = vmul.f32 %v1900, %v2376
    %v2380 = vmul.f32 %v1902, %v2376
    %v2381 = vperm.slane %v1746, 5
    %v2382 = vlaneseq
    %v2383 = vshrl.u32 %v2382, 7
    %2385 = vset.pattern.permute.xlu0 %v2383
    %2386 = vperm.xlu0 %2385, %v2381
    %v2387 = vpop.permute.xlu0 %2386
    %v2388 = vlaneseq
    %v2389 = vshrl.u32 %v2388, 7
    %v2390 = vadd.s32 %v2389, 8
    %2391 = vset.pattern.permute.xlu0 %v2390
    %2392 = vperm.xlu0 %2391, %v2381
    %v2393 = vpop.permute.xlu0 %2392
    %v2394 = vperm.slane %v1749, 5
    %v2395 = vlaneseq
    %v2396 = vshrl.u32 %v2395, 7
    %2398 = vset.pattern.permute.xlu0 %v2396
    %2399 = vperm.xlu0 %2398, %v2394
    %v2400 = vpop.permute.xlu0 %2399
    %v2401 = vlaneseq
    %v2402 = vshrl.u32 %v2401, 7
    %v2403 = vadd.s32 %v2402, 8
    %2404 = vset.pattern.permute.xlu0 %v2403
    %2405 = vperm.xlu0 %2404, %v2394
    %v2406 = vpop.permute.xlu0 %2405
    %v2407 = vperm.slane %v1935, 5
    %v2408 = vperm.slane %v1936, 5
    %v2409 = vmul.f32 %v2387, %v2407
    %v2410 = vmul.f32 %v2393, %v2407
    %v2411 = vmul.f32 %v2400, %v2408
    %v2412 = vmul.f32 %v2406, %v2408
    %v2413 = vmul.f32 %v2377, %v2323
    %v2414 = vmul.f32 %v2378, %v2324
    %v2415 = vmul.f32 %v2379, %v2325
    %v2416 = vmul.f32 %v2380, %v2326
    %v2417 = vadd.f32 %v2413, %v2409
    %v2418 = vadd.f32 %v2414, %v2410
    %v2419 = vadd.f32 %v2415, %v2411
    %v2420 = vadd.f32 %v2416, %v2412
    %v2421 = vperm.slane %v1785, 5
    %v2422 = vlaneseq
    %v2423 = vshrl.u32 %v2422, 7
    %2425 = vset.pattern.permute.xlu0 %v2423
    %2426 = vperm.xlu0 %2425, %v2421
    %v2427 = vpop.permute.xlu0 %2426
    %v2428 = vlaneseq
    %v2429 = vshrl.u32 %v2428, 7
    %v2430 = vadd.s32 %v2429, 8
    %2431 = vset.pattern.permute.xlu0 %v2430
    %2432 = vperm.xlu0 %2431, %v2421
    %v2433 = vpop.permute.xlu0 %2432
    %v2434 = vperm.slane %v1788, 5
    %v2435 = vlaneseq
    %v2436 = vshrl.u32 %v2435, 7
    %2438 = vset.pattern.permute.xlu0 %v2436
    %2439 = vperm.xlu0 %2438, %v2434
    %v2440 = vpop.permute.xlu0 %2439
    %v2441 = vlaneseq
    %v2442 = vshrl.u32 %v2441, 7
    %v2443 = vadd.s32 %v2442, 8
    %2444 = vset.pattern.permute.xlu0 %v2443
    %2445 = vperm.xlu0 %2444, %v2434
    %v2446 = vpop.permute.xlu0 %2445
    %v2447 = vmul.f32 %v2417, %v2427
    %v2448 = vmul.f32 %v2418, %v2433
    %v2449 = vmul.f32 %v2419, %v2440
    %v2450 = vmul.f32 %v2420, %v2446
    %v2451 = vadd.f32 %v2447, %v2448
    %v2452 = vrot.slane %v2451, 4
    %v2453 = vadd.f32 %v2451, %v2452
    %v2454 = vrot.slane %v2453, 2
    %v2455 = vadd.f32 %v2453, %v2454
    %v2456 = vrot.slane %v2455, 1
    %v2457 = vadd.f32 %v2455, %v2456
    %v2458 = vadd.f32 %v2449, %v2450
    %v2459 = vrot.slane %v2458, 4
    %v2460 = vadd.f32 %v2458, %v2459
    %v2461 = vrot.slane %v2460, 2
    %v2462 = vadd.f32 %v2460, %v2461
    %v2463 = vrot.slane %v2462, 1
    %v2464 = vadd.f32 %v2462, %v2463
    %v2465 = vsel %vm1198, %v2457, 0.0
    %v2466 = vsel %vm1198, %v2464, 0.0
    %v2467 = vadd.f32 %v2373, %v2465
    %v2468 = vadd.f32 %v2374, %v2466
    %v2469 = vperm.slane %v1893, 6
    %v2470 = vperm.slane %v1894, 6
    %v2471 = vmul.f32 %v1900, %v2469
    %v2472 = vmul.f32 %v1902, %v2469
    %v2473 = vmul.f32 %v1900, %v2470
    %v2474 = vmul.f32 %v1902, %v2470
    %v2475 = vperm.slane %v1746, 6
    %v2476 = vlaneseq
    %v2477 = vshrl.u32 %v2476, 7
    %2479 = vset.pattern.permute.xlu0 %v2477
    %2480 = vperm.xlu0 %2479, %v2475
    %v2481 = vpop.permute.xlu0 %2480
    %v2482 = vlaneseq
    %v2483 = vshrl.u32 %v2482, 7
    %v2484 = vadd.s32 %v2483, 8
    %2485 = vset.pattern.permute.xlu0 %v2484
    %2486 = vperm.xlu0 %2485, %v2475
    %v2487 = vpop.permute.xlu0 %2486
    %v2488 = vperm.slane %v1749, 6
    %v2489 = vlaneseq
    %v2490 = vshrl.u32 %v2489, 7
    %2492 = vset.pattern.permute.xlu0 %v2490
    %2493 = vperm.xlu0 %2492, %v2488
    %v2494 = vpop.permute.xlu0 %2493
    %v2495 = vlaneseq
    %v2496 = vshrl.u32 %v2495, 7
    %v2497 = vadd.s32 %v2496, 8
    %2498 = vset.pattern.permute.xlu0 %v2497
    %2499 = vperm.xlu0 %2498, %v2488
    %v2500 = vpop.permute.xlu0 %2499
    %v2501 = vperm.slane %v1935, 6
    %v2502 = vperm.slane %v1936, 6
    %v2503 = vmul.f32 %v2481, %v2501
    %v2504 = vmul.f32 %v2487, %v2501
    %v2505 = vmul.f32 %v2494, %v2502
    %v2506 = vmul.f32 %v2500, %v2502
    %v2507 = vmul.f32 %v2471, %v2417
    %v2508 = vmul.f32 %v2472, %v2418
    %v2509 = vmul.f32 %v2473, %v2419
    %v2510 = vmul.f32 %v2474, %v2420
    %v2511 = vadd.f32 %v2507, %v2503
    %v2512 = vadd.f32 %v2508, %v2504
    %v2513 = vadd.f32 %v2509, %v2505
    %v2514 = vadd.f32 %v2510, %v2506
    %v2515 = vperm.slane %v1785, 6
    %v2516 = vlaneseq
    %v2517 = vshrl.u32 %v2516, 7
    %2519 = vset.pattern.permute.xlu0 %v2517
    %2520 = vperm.xlu0 %2519, %v2515
    %v2521 = vpop.permute.xlu0 %2520
    %v2522 = vlaneseq
    %v2523 = vshrl.u32 %v2522, 7
    %v2524 = vadd.s32 %v2523, 8
    %2525 = vset.pattern.permute.xlu0 %v2524
    %2526 = vperm.xlu0 %2525, %v2515
    %v2527 = vpop.permute.xlu0 %2526
    %v2528 = vperm.slane %v1788, 6
    %v2529 = vlaneseq
    %v2530 = vshrl.u32 %v2529, 7
    %2532 = vset.pattern.permute.xlu0 %v2530
    %2533 = vperm.xlu0 %2532, %v2528
    %v2534 = vpop.permute.xlu0 %2533
    %v2535 = vlaneseq
    %v2536 = vshrl.u32 %v2535, 7
    %v2537 = vadd.s32 %v2536, 8
    %2538 = vset.pattern.permute.xlu0 %v2537
    %2539 = vperm.xlu0 %2538, %v2528
    %v2540 = vpop.permute.xlu0 %2539
    %v2541 = vmul.f32 %v2511, %v2521
    %v2542 = vmul.f32 %v2512, %v2527
    %v2543 = vmul.f32 %v2513, %v2534
    %v2544 = vmul.f32 %v2514, %v2540
    %v2545 = vadd.f32 %v2541, %v2542
    %v2546 = vrot.slane %v2545, 4
    %v2547 = vadd.f32 %v2545, %v2546
    %v2548 = vrot.slane %v2547, 2
    %v2549 = vadd.f32 %v2547, %v2548
    %v2550 = vrot.slane %v2549, 1
    %v2551 = vadd.f32 %v2549, %v2550
    %v2552 = vadd.f32 %v2543, %v2544
    %v2553 = vrot.slane %v2552, 4
    %v2554 = vadd.f32 %v2552, %v2553
    %v2555 = vrot.slane %v2554, 2
    %v2556 = vadd.f32 %v2554, %v2555
    %v2557 = vrot.slane %v2556, 1
    %v2558 = vadd.f32 %v2556, %v2557
    %v2559 = vsel %vm1293, %v2551, 0.0
    %v2560 = vsel %vm1293, %v2558, 0.0
    %v2561 = vadd.f32 %v2467, %v2559
    %v2562 = vadd.f32 %v2468, %v2560
    %v2563 = vperm.slane %v1893, 7
    %v2564 = vperm.slane %v1894, 7
    %v2565 = vmul.f32 %v1900, %v2563
    %v2566 = vmul.f32 %v1902, %v2563
    %v2567 = vmul.f32 %v1900, %v2564
    %v2568 = vmul.f32 %v1902, %v2564
    %v2569 = vperm.slane %v1746, 7
    %v2570 = vlaneseq
    %v2571 = vshrl.u32 %v2570, 7
    %2573 = vset.pattern.permute.xlu0 %v2571
    %2574 = vperm.xlu0 %2573, %v2569
    %v2575 = vpop.permute.xlu0 %2574
    %v2576 = vlaneseq
    %v2577 = vshrl.u32 %v2576, 7
    %v2578 = vadd.s32 %v2577, 8
    %2579 = vset.pattern.permute.xlu0 %v2578
    %2580 = vperm.xlu0 %2579, %v2569
    %v2581 = vpop.permute.xlu0 %2580
    %v2582 = vperm.slane %v1749, 7
    %v2583 = vlaneseq
    %v2584 = vshrl.u32 %v2583, 7
    %2586 = vset.pattern.permute.xlu0 %v2584
    %2587 = vperm.xlu0 %2586, %v2582
    %v2588 = vpop.permute.xlu0 %2587
    %v2589 = vlaneseq
    %v2590 = vshrl.u32 %v2589, 7
    %v2591 = vadd.s32 %v2590, 8
    %2592 = vset.pattern.permute.xlu0 %v2591
    %2593 = vperm.xlu0 %2592, %v2582
    %v2594 = vpop.permute.xlu0 %2593
    %v2595 = vperm.slane %v1935, 7
    %v2596 = vperm.slane %v1936, 7
    %v2597 = vmul.f32 %v2575, %v2595
    %v2598 = vmul.f32 %v2581, %v2595
    %v2599 = vmul.f32 %v2588, %v2596
    %v2600 = vmul.f32 %v2594, %v2596
    %v2601 = vmul.f32 %v2565, %v2511
    %v2602 = vmul.f32 %v2566, %v2512
    %v2603 = vmul.f32 %v2567, %v2513
    %v2604 = vmul.f32 %v2568, %v2514
    %v2605 = vadd.f32 %v2601, %v2597
    %v2606 = vadd.f32 %v2602, %v2598
    %v2607 = vadd.f32 %v2603, %v2599
    %v2608 = vadd.f32 %v2604, %v2600
    %v2609 = vperm.slane %v1785, 7
    %v2610 = vlaneseq
    %v2611 = vshrl.u32 %v2610, 7
    %2613 = vset.pattern.permute.xlu0 %v2611
    %2614 = vperm.xlu0 %2613, %v2609
    %v2615 = vpop.permute.xlu0 %2614
    %v2616 = vlaneseq
    %v2617 = vshrl.u32 %v2616, 7
    %v2618 = vadd.s32 %v2617, 8
    %2619 = vset.pattern.permute.xlu0 %v2618
    %2620 = vperm.xlu0 %2619, %v2609
    %v2621 = vpop.permute.xlu0 %2620
    %v2622 = vperm.slane %v1788, 7
    %v2623 = vlaneseq
    %v2624 = vshrl.u32 %v2623, 7
    %2626 = vset.pattern.permute.xlu0 %v2624
    %2627 = vperm.xlu0 %2626, %v2622
    %v2628 = vpop.permute.xlu0 %2627
    %v2629 = vlaneseq
    %v2630 = vshrl.u32 %v2629, 7
    %v2631 = vadd.s32 %v2630, 8
    %2632 = vset.pattern.permute.xlu0 %v2631
    %2633 = vperm.xlu0 %2632, %v2622
    %v2634 = vpop.permute.xlu0 %2633
    %v2635 = vmul.f32 %v2605, %v2615
    %v2636 = vmul.f32 %v2606, %v2621
    %v2637 = vmul.f32 %v2607, %v2628
    %v2638 = vmul.f32 %v2608, %v2634
    %v2639 = vadd.f32 %v2635, %v2636
    %v2640 = vrot.slane %v2639, 4
    %v2641 = vadd.f32 %v2639, %v2640
    %v2642 = vrot.slane %v2641, 2
    %v2643 = vadd.f32 %v2641, %v2642
    %v2644 = vrot.slane %v2643, 1
    %v2645 = vadd.f32 %v2643, %v2644
    %v2646 = vadd.f32 %v2637, %v2638
    %v2647 = vrot.slane %v2646, 4
    %v2648 = vadd.f32 %v2646, %v2647
    %v2649 = vrot.slane %v2648, 2
    %v2650 = vadd.f32 %v2648, %v2649
    %v2651 = vrot.slane %v2650, 1
    %v2652 = vadd.f32 %v2650, %v2651
    %v2653 = vsel %vm1388, %v2645, 0.0
    %v2654 = vsel %vm1388, %v2652, 0.0
    %v2655 = vadd.f32 %v2561, %v2653
    %v2656 = vadd.f32 %v2562, %v2654
    %v2657 = vmul.f32 %v1861, %v1710
    %v2658 = vmul.f32 %v1861, %v1711
    %v2659 = vadd.f32 %v2655, %v2657
    %v2660 = vadd.f32 %v2656, %v2658
    %v2661 = vxor.u32 %v1621, 2147483648
    %v2662 = vxor.u32 %v1624, 2147483648
    %v2663 = vmul.f32 %v2661, 1.442695
    %v2664 = vpow.pop %v2663
    %v2665 = vmul.f32 %v2662, 1.442695
    %v2666 = vpow.pop %v2665
    %v2667 = vadd.f32 %v2664, 1.0
    %v2668 = vadd.f32 %v2666, 1.0
    %v2669 = vrcp.pop %v2667
    %v2670 = vmul.f32 %v2667, %v2669
    %v2671 = vsub.f32 1.0, %v2670
    %v2672 = vmul.f32 %v2669, %v2671
    %v2673 = vadd.f32 %v2669, %v2672
    %vm2674 = vweird.f32 %v2667
    %vm2675 = vweird.f32 %v2669
    %vm2676 = vmor %vm2674, %vm2675
    %v2677 = vsel %vm2676, %v2669, %v2673
    %v2678 = vand.u32 2147483647, %v2667
    %vm2679 = vcmp.eq.f32.partialorder %v2678, 8.507059e+37
    %v2680 = vand.u32 %v2667, 2147483648
    %v2681 = vor.u32 1.1754944e-38, %v2680
    %v2682 = vsel %vm2679, %v2681, %v2677
    %v2683 = vmul.f32 1.0, %v2682
    %v2684 = vrcp.pop %v2668
    %v2685 = vmul.f32 %v2668, %v2684
    %v2686 = vsub.f32 1.0, %v2685
    %v2687 = vmul.f32 %v2684, %v2686
    %v2688 = vadd.f32 %v2684, %v2687
    %vm2689 = vweird.f32 %v2668
    %vm2690 = vweird.f32 %v2684
    %vm2691 = vmor %vm2689, %vm2690
    %v2692 = vsel %vm2691, %v2684, %v2688
    %v2693 = vand.u32 2147483647, %v2668
    %vm2694 = vcmp.eq.f32.partialorder %v2693, 8.507059e+37
    %v2695 = vand.u32 %v2668, 2147483648
    %v2696 = vor.u32 1.1754944e-38, %v2695
    %v2697 = vsel %vm2694, %v2696, %v2692
    %v2698 = vmul.f32 1.0, %v2697
    %v2699 = vmul.f32 %v1621, %v2683
    %v2700 = vmul.f32 %v1624, %v2698
    %v2701 = vmul.f32 %v2659, %v2699
    %v2702 = vmul.f32 %v2660, %v2700
    %v2703 = vld [vmem:[#allocation14] sm:$0xff]
    %v2704 = vld [vmem:[#allocation14 + $0x8] sm:$0xff]
    %v2705 = vld [vmem:[#allocation14 + $0x10] sm:$0xff]
    %v2706 = vld [vmem:[#allocation14 + $0x18] sm:$0xff]
    %v2707 = vld [vmem:[#allocation14 + $0x20] sm:$0xff]
    %v2708 = vld [vmem:[#allocation14 + $0x28] sm:$0xff]
    %v2709 = vld [vmem:[#allocation14 + $0x30] sm:$0xff]
    %v2710 = vld [vmem:[#allocation14 + $0x38] sm:$0xff]
    %v2711 = vld [vmem:[#allocation14 + $0x40] sm:$0xff]
    %v2712 = vld [vmem:[#allocation14 + $0x48] sm:$0xff]
    %v2713 = vld [vmem:[#allocation14 + $0x50] sm:$0xff]
    %v2714 = vld [vmem:[#allocation14 + $0x58] sm:$0xff]
    %v2715 = vld [vmem:[#allocation14 + $0x60] sm:$0xff]
    %v2716 = vld [vmem:[#allocation14 + $0x68] sm:$0xff]
    %v2717 = vld [vmem:[#allocation14 + $0x70] sm:$0xff]
    %v2718 = vld [vmem:[#allocation14 + $0x78] sm:$0xff]
    %2719 = vmatpush.msra.mxu0 %v2718
    %2720 = vmatpush.msra.mxu0 %v2717
    %2721 = vmatpush.msra.mxu0 %v2716
    %2722 = vmatpush.msra.mxu0 %v2715
    %2723 = vmatpush.msra.mxu0 %v2714
    %2724 = vmatpush.msra.mxu0 %v2713
    %2725 = vmatpush.msra.mxu0 %v2712
    %2726 = vmatpush.msra.mxu0 %v2711
    %2727 = vmatpush.msra.mxu0 %v2710
    %2728 = vmatpush.msra.mxu0 %v2709
    %2729 = vmatpush.msra.mxu0 %v2708
    %2730 = vmatpush.msra.mxu0 %v2707
    %2731 = vmatpush.msra.mxu0 %v2706
    %2732 = vmatpush.msra.mxu0 %v2705
    %2733 = vmatpush.msra.mxu0 %v2704
    %2734 = vmatpush.msra.mxu0 %v2703
    %2735 = vmatmul.f32.gmra.mxu0 %v2701
    %v2736 = vpop.f32.mrf.mxu0
    %v2737 = vadd.f32 %v1473, %v2736
    %2738 = vmatmul.f32.gmra.mxu0 %v2702
    %v2739 = vpop.f32.mrf.mxu0
    %v2740 = vadd.f32 %v1476, %v2739
    %2741 = vdwg.mxu0
    %v2742 = vld [vmem:[%s25] sm:$0xff]
    %v2743 = vld [vmem:[%s25 + $0x8] sm:$0xff]
    %v2744 = vld [vmem:[%s25 + $0x10] sm:$0xff]
    %v2745 = vld [vmem:[%s25 + $0x18] sm:$0xff]
    %v2746 = vld [vmem:[%s25 + $0x20] sm:$0xff]
    %v2747 = vld [vmem:[%s25 + $0x28] sm:$0xff]
    %v2748 = vld [vmem:[%s25 + $0x30] sm:$0xff]
    %v2749 = vld [vmem:[%s25 + $0x38] sm:$0xff]
    %v2750 = vld [vmem:[%s25 + $0x40] sm:$0xff]
    %v2751 = vld [vmem:[%s25 + $0x48] sm:$0xff]
    %v2752 = vld [vmem:[%s25 + $0x50] sm:$0xff]
    %v2753 = vld [vmem:[%s25 + $0x58] sm:$0xff]
    %v2754 = vld [vmem:[%s25 + $0x60] sm:$0xff]
    %v2755 = vld [vmem:[%s25 + $0x68] sm:$0xff]
    %v2756 = vld [vmem:[%s25 + $0x70] sm:$0xff]
    %v2757 = vld [vmem:[%s25 + $0x78] sm:$0xff]
    %v2758 = vld [vmem:[%s25 + $0x80] sm:$0xff]
    %v2759 = vld [vmem:[%s25 + $0x88] sm:$0xff]
    %v2760 = vld [vmem:[%s25 + $0x90] sm:$0xff]
    %v2761 = vld [vmem:[%s25 + $0x98] sm:$0xff]
    %v2762 = vld [vmem:[%s25 + $0xa0] sm:$0xff]
    %v2763 = vld [vmem:[%s25 + $0xa8] sm:$0xff]
    %v2764 = vld [vmem:[%s25 + $0xb0] sm:$0xff]
    %v2765 = vld [vmem:[%s25 + $0xb8] sm:$0xff]
    %v2766 = vld [vmem:[%s25 + $0xc0] sm:$0xff]
    %v2767 = vld [vmem:[%s25 + $0xc8] sm:$0xff]
    %v2768 = vld [vmem:[%s25 + $0xd0] sm:$0xff]
    %v2769 = vld [vmem:[%s25 + $0xd8] sm:$0xff]
    %v2770 = vld [vmem:[%s25 + $0xe0] sm:$0xff]
    %v2771 = vld [vmem:[%s25 + $0xe8] sm:$0xff]
    %v2772 = vld [vmem:[%s25 + $0xf0] sm:$0xff]
    %v2773 = vld [vmem:[%s25 + $0xf8] sm:$0xff]
    %2774 = vmatpush.msra.mxu0 %v2772
    %2775 = vmatpush.msra.mxu0 %v2770
    %2776 = vmatpush.msra.mxu0 %v2768
    %2777 = vmatpush.msra.mxu0 %v2766
    %2778 = vmatpush.msra.mxu0 %v2764
    %2779 = vmatpush.msra.mxu0 %v2762
    %2780 = vmatpush.msra.mxu0 %v2760
    %2781 = vmatpush.msra.mxu0 %v2758
    %2782 = vmatpush.msra.mxu0 %v2756
    %2783 = vmatpush.msra.mxu0 %v2754
    %2784 = vmatpush.msra.mxu0 %v2752
    %2785 = vmatpush.msra.mxu0 %v2750
    %2786 = vmatpush.msra.mxu0 %v2748
    %2787 = vmatpush.msra.mxu0 %v2746
    %2788 = vmatpush.msra.mxu0 %v2744
    %2789 = vmatpush.msra.mxu0 %v2742
    %2790 = vmatmul.f32.gmra.mxu0 %v2737
    %v2791 = vpop.f32.mrf.mxu0
    %v2792 = vadd.f32 0.0, %v2791
    %2793 = vmatmul.f32.gmra.mxu0 %v2740
    %v2794 = vpop.f32.mrf.mxu0
    %v2795 = vadd.f32 0.0, %v2794
    %2796 = vdwg.mxu0
    %2797 = vmatpush.msra.mxu0 %v2773
    %2798 = vmatpush.msra.mxu0 %v2771
    %2799 = vmatpush.msra.mxu0 %v2769
    %2800 = vmatpush.msra.mxu0 %v2767
    %2801 = vmatpush.msra.mxu0 %v2765
    %2802 = vmatpush.msra.mxu0 %v2763
    %2803 = vmatpush.msra.mxu0 %v2761
    %2804 = vmatpush.msra.mxu0 %v2759
    %2805 = vmatpush.msra.mxu0 %v2757
    %2806 = vmatpush.msra.mxu0 %v2755
    %2807 = vmatpush.msra.mxu0 %v2753
    %2808 = vmatpush.msra.mxu0 %v2751
    %2809 = vmatpush.msra.mxu0 %v2749
    %2810 = vmatpush.msra.mxu0 %v2747
    %2811 = vmatpush.msra.mxu0 %v2745
    %2812 = vmatpush.msra.mxu0 %v2743
    %2813 = vmatmul.f32.gmra.mxu0 %v2737
    %v2814 = vpop.f32.mrf.mxu0
    %v2815 = vadd.f32 0.0, %v2814
    %2816 = vmatmul.f32.gmra.mxu0 %v2740
    %v2817 = vpop.f32.mrf.mxu0
    %v2818 = vadd.f32 0.0, %v2817
    %2819 = vdwg.mxu0
    %2820 = vst [vmem:[#allocation16] sm:$0xff] %v2792
    %2821 = vst [vmem:[#allocation16 + $0x8] sm:$0xff] %v2815
    %2822 = vst [vmem:[#allocation16 + $0x10] sm:$0xff] %v2795
    %2823 = vst [vmem:[#allocation16 + $0x18] sm:$0xff] %v2818
    // Predicated region
    $region138: #{model_forward.1} parent=1 // pred_check
      _
    $region139: #{model_forward.1} parent=1 // pred_check_branch
      %2825 = sbr.rel (0) target = $region141
    $region140: #{model_forward.1} parent=1 // pred_region
      %2827 = vsyncadd [#allocation4], 0
      %s2828 = sshll.u32 [#allocation16], 4
      %s2829 = int_to_ptr.vmem [resolvable:$true] %s2828
      %s2830 = sshll.u32 %s26, 4
      %s2831 = int_to_ptr.hbm [resolvable:$true] %s2830
      %2836 = dma.vmem_to_hbm [thread:$0]  %s2829, 512, %s2831, [#allocation4], 256, 256, 16
    $region141: #{model_forward.1} parent=1 // pred_fallthru
      _
    // Predicated region
    $region142: #{model_forward.1} parent=1 // pred_check
      _
    $region143: #{model_forward.1} parent=1 // pred_check_branch
      %2838 = sbr.rel (0) target = $region145
    $region144: #{model_forward.1} parent=1 // pred_region
      %2840 = dma.done [#allocation4], 512
    $region145: #{model_forward.1} parent=1 // pred_fallthru
      _
    %2841 = vsyncpa [#allocation3], 1
    %2842 = vsyncpa [#allocation6], 1
    %2843 = vsyncpa [#allocation9], 1
    %2844 = vsyncpa [#allocation12], 1
    %2845 = vsyncpa [#allocation15], 1
    %2846 = vsyncpa [#allocation4], 1

</llo_original>
